<compile_context>
chip_gen: v6e
topology: v6e:2x2x1
jax: 0.10.0
libtpu: 0.0.40
codegen_flags: <defaults>
</compile_context>

<pallas_src>
import functools

import jax
import jax.numpy as jnp
from jax.experimental import pallas as pl
from jax.experimental.pallas import tpu as pltpu


# ---------------------------------------------------------------------------
# Kernel 1: tiled GEMM + folded-BN bias (+ residual) (+ ReLU)
# ---------------------------------------------------------------------------
def _gemm_kernel(*refs, relu, has_res):
    if has_res:
        x_ref, w_ref, b_ref, r_ref, o_ref, acc_ref = refs
    else:
        x_ref, w_ref, b_ref, o_ref, acc_ref = refs

    @pl.when(pl.program_id(2) == 0)
    def _init():
        acc_ref[...] = jnp.zeros_like(acc_ref)

    acc_ref[...] += jnp.dot(x_ref[...], w_ref[...],
                            preferred_element_type=jnp.float32)

    @pl.when(pl.program_id(2) == pl.num_programs(2) - 1)
    def _finalize():
        out = acc_ref[...] + b_ref[...]
        if has_res:
            out = out + r_ref[...].astype(jnp.float32)
        if relu:
            out = jnp.maximum(out, 0.0)
        o_ref[...] = out.astype(o_ref.dtype)


def _round_up(x, m):
    return ((x + m - 1) // m) * m


def _tile(dim, tmax):
    """Full-extent block for small dims, otherwise a 128-multiple tile + padded dim."""
    if dim <= tmax:
        return dim, dim
    return tmax, _round_up(dim, tmax)


def _pad2d(a, rows, cols):
    pr, pc = rows - a.shape[0], cols - a.shape[1]
    if pr or pc:
        a = jnp.pad(a, ((0, pr), (0, pc)))
    return a


def gemm_bn_act(x, w, bias, residual=None, relu=False, out_dtype=jnp.bfloat16,
                tm_max=512, tn_max=256, tk_max=512):
    """y = act((x @ w) + bias [+ residual]) with a tiled K-reduction Pallas GEMM.

    x: (M, K)  w: (K, N)  bias: (N,)  residual: (M, N) or None.
    BN scale must already be folded into `w`/`bias` by the caller.
    """
    M, K = x.shape
    N = w.shape[1]

    tm, Mp = _tile(M, tm_max)
    tk, Kp = _tile(K, tk_max)
    tn, Np = _tile(N, tn_max)

    xb = _pad2d(x.astype(jnp.bfloat16), Mp, Kp)
    wb = _pad2d(w.astype(jnp.bfloat16), Kp, Np)
    bb = _pad2d(bias.reshape(1, N).astype(jnp.float32), 1, Np)

    grid = (Mp // tm, Np // tn, Kp // tk)
    in_specs = [
        pl.BlockSpec((tm, tk), lambda i, j, k: (i, k)),
        pl.BlockSpec((tk, tn), lambda i, j, k: (k, j)),
        pl.BlockSpec((1, tn), lambda i, j, k: (0, j)),
    ]
    operands = [xb, wb, bb]
    has_res = residual is not None
    if has_res:
        rb = _pad2d(residual.astype(jnp.float32), Mp, Np)
        in_specs.append(pl.BlockSpec((tm, tn), lambda i, j, k: (i, j)))
        operands.append(rb)

    # VMEM budget: 2x double-buffered inputs + 2x output tile + f32 accumulator.
    out_bytes = jnp.dtype(out_dtype).itemsize
    est = 2 * (tm * tk * 2 + tk * tn * 2 + tn * 4
               + (tm * tn * 4 if has_res else 0) + tm * tn * out_bytes) + tm * tn * 4
    vmem_limit = int(min(max(2 * est + (4 << 20), 8 << 20), 32 << 20))

    kern = functools.partial(_gemm_kernel, relu=relu, has_res=has_res)
    out = pl.pallas_call(
        kern,
        out_shape=jax.ShapeDtypeStruct((Mp, Np), out_dtype),
        grid=grid,
        in_specs=in_specs,
        out_specs=pl.BlockSpec((tm, tn), lambda i, j, k: (i, j)),
        scratch_shapes=[pltpu.VMEM((tm, tn), jnp.float32)],
        compiler_params=pltpu.CompilerParams(
            dimension_semantics=("parallel", "parallel", "arbitrary"),
            vmem_limit_bytes=vmem_limit),
    )(*operands)
    return out[:M, :N]


# ---------------------------------------------------------------------------
# Kernel 2: direct 3x3 conv (pad=1) + folded-BN bias + ReLU, no im2col
# ---------------------------------------------------------------------------
def _conv3x3_kernel(x_ref, w_ref, b_ref, o_ref, *, taps, length, relu):
    # x_ref: (S*S, Hs*Ws, C)  flattened phase-split padded activation (one image)
    # w_ref: (3, 3, C, P)     BN-folded weights
    # b_ref: (1, P)           BN bias
    # o_ref: (length, P)      flattened output rows (Ho*Ws; columns >= Wo cropped later)
    cout = w_ref.shape[-1]
    acc = jnp.zeros((length, cout), jnp.float32)
    for kh, kw, pq, off in taps:                       # 9 shifted matmuls, one x read
        xw = x_ref[pq, off:off + length, :]
        acc = acc + jnp.dot(xw, w_ref[kh, kw], preferred_element_type=jnp.float32)
    out = acc + b_ref[...]
    if relu:
        out = jnp.maximum(out, 0.0)
    o_ref[...] = out.astype(o_ref.dtype)


def conv3x3_bn_relu(x_nhwc, w_hwio, bias, stride, relu=True, out_dtype=jnp.bfloat16):
    """3x3 conv (padding=1, bias=False) + folded BN + ReLU as a direct Pallas conv.

    The padded activation is read once; the 9 taps are shifted matmuls inside the
    kernel.  Stride is handled by a space-to-depth phase split done once in XLA.
    For large spatial sizes the grid would additionally tile output rows; one image
    per grid step is plenty for CIFAR-scale activations.
    """
    N, H, W, C = x_nhwc.shape
    P = w_hwio.shape[-1]
    S = stride
    Ho = (H + 2 - 3) // S + 1
    Wo = (W + 2 - 3) // S + 1
    D = (3 - 1) // S                 # max in-phase tap offset
    Hs = Ho + D + 1                  # +1 row keeps every flattened tap slice in bounds
    Ws = Wo + D
    L = Ho * Ws                      # flattened rows computed per image (crop later)

    xp = jnp.pad(x_nhwc.astype(jnp.bfloat16),
                 ((0, 0), (1, 1 + S), (1, 1 + S), (0, 0)))
    if S == 1:
        ph = xp[:, None, :Hs, :Ws, :]
    else:
        ph = jnp.stack([xp[:, p:p + S * Hs:S, q:q + S * Ws:S, :]
                        for p in range(S) for q in range(S)], axis=1)
    ph = ph.reshape(N, S * S, Hs * Ws, C)

    taps = tuple((kh, kw, (kh % S) * S + (kw % S), (kh // S) * Ws + (kw // S))
                 for kh in range(3) for kw in range(3))

    wb = w_hwio.astype(jnp.bfloat16)
    bb = bias.reshape(1, P).astype(jnp.float32)

    est = 2 * (S * S * Hs * Ws * C * 2 + 9 * C * P * 2 + P * 4 + L * P * 2) + L * P * 4
    vmem_limit = int(min(max(2 * est + (4 << 20), 8 << 20), 32 << 20))

    kern = functools.partial(_conv3x3_kernel, taps=taps, length=L, relu=relu)
    out = pl.pallas_call(
        kern,
        out_shape=jax.ShapeDtypeStruct((N, L, P), out_dtype),
        grid=(N,),
        in_specs=[
            pl.BlockSpec((None, S * S, Hs * Ws, C), lambda n: (n, 0, 0, 0)),
            pl.BlockSpec((3, 3, C, P), lambda n: (0, 0, 0, 0)),
            pl.BlockSpec((1, P), lambda n: (0, 0)),
        ],
        out_specs=pl.BlockSpec((None, L, P), lambda n: (n, 0, 0)),
        compiler_params=pltpu.CompilerParams(
            dimension_semantics=("parallel",),
            vmem_limit_bytes=vmem_limit),
    )(ph, wb, bb)
    # (N, Ho*Ws, P) -> (N, Ho, Ws, P) -> crop the Ws-Wo overhang columns.
    return out.reshape(N, Ho, Ws, P)[:, :, :Wo, :]


# ---------------------------------------------------------------------------
# Bottleneck forward (eval-mode BN, bias-free convs, expansion = 4)
# ---------------------------------------------------------------------------
def _fold_bn(bn, eps=1e-5):
    gamma, beta, mean, var = bn
    scale = gamma / jnp.sqrt(var + eps)
    bias = beta - mean * scale
    return scale, bias


@functools.partial(jax.jit, static_argnames=("stride",))
def bottleneck_forward(x_nchw, params, stride=1):
    x = jnp.transpose(x_nchw, (0, 2, 3, 1)).astype(jnp.float32)   # NCHW -> NHWC
    N, H, W, Cin = x.shape
    planes = params["conv2_w"].shape[0]
    Cout = params["conv3_w"].shape[0]                             # expansion * planes
    x_bf = x.astype(jnp.bfloat16)

    # conv1 (1x1) + bn1 + relu  --- tiled GEMM
    s1, b1 = _fold_bn(params["bn1"])
    w1 = params["conv1_w"][:, :, 0, 0].T * s1[None, :]            # (Cin, planes)
    t1 = gemm_bn_act(x_bf.reshape(N * H * W, Cin), w1, b1, relu=True,
                     out_dtype=jnp.bfloat16).reshape(N, H, W, planes)

    # conv2 (3x3, stride, pad=1) + bn2 + relu  --- direct conv kernel (no im2col)
    s2, b2 = _fold_bn(params["bn2"])
    w2 = jnp.transpose(params["conv2_w"], (2, 3, 1, 0)) * s2      # (3,3,Cin,Cout)
    t2 = conv3x3_bn_relu(t1, w2, b2, stride)                      # (N, Ho, Wo, planes)
    Ho, Wo = t2.shape[1], t2.shape[2]

    # shortcut path
    if stride != 1 or Cin != Cout:
        ss, bs = _fold_bn(params["short_bn"])
        ws = params["short_w"][:, :, 0, 0].T * ss[None, :]        # (Cin, Cout)
        xs = x_bf[:, ::stride, ::stride, :]
        shortcut = gemm_bn_act(xs.reshape(N * Ho * Wo, Cin), ws, bs, relu=False,
                               out_dtype=jnp.float32)
    else:
        shortcut = x.reshape(N * H * W, Cout)

    # conv3 (1x1) + bn3 + residual add + relu  --- fused GEMM epilogue
    s3, b3 = _fold_bn(params["bn3"])
    w3 = params["conv3_w"][:, :, 0, 0].T * s3[None, :]            # (planes, Cout)
    y = gemm_bn_act(t2.reshape(N * Ho * Wo, planes), w3, b3, residual=shortcut,
                    relu=True, out_dtype=jnp.float32)
    y = y.reshape(N, Ho, Wo, Cout)
    return jnp.transpose(y, (0, 3, 1, 2))                         # NHWC -> NCHW


# ---------------------------------------------------------------------------
# Pure-JAX f32 reference, parameter init, and smoke test
# ---------------------------------------------------------------------------
def bottleneck_reference(x_nchw, params, stride):
    def conv(x, w_oihw, s, pad):
        w = jnp.transpose(w_oihw, (2, 3, 1, 0))                   # OIHW -> HWIO
        return jax.lax.conv_general_dilated(
            x, w, (s, s), [(pad, pad), (pad, pad)],
            dimension_numbers=("NHWC", "HWIO", "NHWC"))

    def bn(y, stats, eps=1e-5):
        gamma, beta, mean, var = stats
        return (y - mean) * (gamma / jnp.sqrt(var + eps)) + beta

    x = jnp.transpose(x_nchw, (0, 2, 3, 1)).astype(jnp.float32)
    out = jax.nn.relu(bn(conv(x, params["conv1_w"], 1, 0), params["bn1"]))
    out = jax.nn.relu(bn(conv(out, params["conv2_w"], stride, 1), params["bn2"]))
    out = bn(conv(out, params["conv3_w"], 1, 0), params["bn3"])
    if "short_w" in params:
        sc = bn(conv(x, params["short_w"], stride, 0), params["short_bn"])
    else:
        sc = x
    return jnp.transpose(jax.nn.relu(out + sc), (0, 3, 1, 2))


def _init_conv(key, cout, cin, k):
    fan_in = cin * k * k
    return jax.random.normal(key, (cout, cin, k, k), jnp.float32) * fan_in ** -0.5


def _init_bn(key, c):
    k1, k2, k3, k4 = jax.random.split(key, 4)
    gamma = 1.0 + 0.1 * jax.random.normal(k1, (c,), jnp.float32)
    beta = 0.1 * jax.random.normal(k2, (c,), jnp.float32)
    mean = 0.1 * jax.random.normal(k3, (c,), jnp.float32)
    var = 1.0 + 0.1 * jnp.abs(jax.random.normal(k4, (c,), jnp.float32))
    return (gamma, beta, mean, var)


def init_bottleneck_params(key, in_planes, planes, stride, expansion=4):
    ks = iter(jax.random.split(key, 8))
    p = {
        "conv1_w": _init_conv(next(ks), planes, in_planes, 1),
        "bn1": _init_bn(next(ks), planes),
        "conv2_w": _init_conv(next(ks), planes, planes, 3),
        "bn2": _init_bn(next(ks), planes),
        "conv3_w": _init_conv(next(ks), expansion * planes, planes, 1),
        "bn3": _init_bn(next(ks), expansion * planes),
    }
    if stride != 1 or in_planes != expansion * planes:
        p["short_w"] = _init_conv(next(ks), expansion * planes, in_planes, 1)
        p["short_bn"] = _init_bn(next(ks), expansion * planes)
    return p


if __name__ == "__main__":
    key = jax.random.PRNGKey(0)
    kx, kp1, kp2 = jax.random.split(key, 3)

    # Small input consistent with the module: NCHW, batch=2, 64 channels, 16x16.
    x = jax.random.normal(kx, (2, 64, 16, 16), jnp.float32)

    # Block 1: downsampling bottleneck (projection shortcut): in=64, planes=32, stride=2.
    p1 = init_bottleneck_params(kp1, in_planes=64, planes=32, stride=2)
    y1 = jax.block_until_ready(bottleneck_forward(x, p1, stride=2))
    assert y1.shape == (2, 128, 8, 8), y1.shape

    # Block 2: identity-shortcut bottleneck: in=128, planes=32, stride=1.
    p2 = init_bottleneck_params(kp2, in_planes=128, planes=32, stride=1)
    y2 = jax.block_until_ready(bottleneck_forward(y1, p2, stride=1))
    assert y2.shape == (2, 128, 8, 8), y2.shape

    # Sanity check against a pure-JAX f32 reference (bf16 MXU inputs -> loose tol).
    for y, xin, p, s in ((y1, x, p1, 2), (y2, y1, p2, 1)):
        ref = bottleneck_reference(xin, p, s)
        err = float(jnp.max(jnp.abs(y - ref)))
        scale = float(jnp.max(jnp.abs(ref))) + 1e-6
        assert bool(jnp.all(jnp.isfinite(y))), "non-finite output"
        assert err <= 0.05 * scale + 0.05, (err, scale)

    print("KERNEL_OK")
</pallas_src>

<mosaic_0001>
module attributes {stable_mosaic.version = 11 : i64} {
  func.func @_gemm_kernel(%arg0: i32, %arg1: i32, %arg2: i32, %arg3: memref<512x64xbf16, #tpu.memory_space<vmem>>, %arg4: memref<64x32xbf16, #tpu.memory_space<vmem>>, %arg5: memref<1x32xf32, #tpu.memory_space<vmem>>, %arg6: memref<512x32xbf16, #tpu.memory_space<vmem>>, %arg7: memref<512x32xf32, #tpu.memory_space<vmem>>) attributes {dimension_semantics = [#tpu.dimension_semantics<parallel>, #tpu.dimension_semantics<parallel>, #tpu.dimension_semantics<arbitrary>], iteration_bounds = array<i64: 1, 1, 1>, scalar_prefetch = 0 : i64, scratch_operands = 1 : i64, tpu.core_type = #tpu.core_type<tc>, window_params = [{transform_indices = @transform_0, window_bounds = array<i64: 512, 64>}, {transform_indices = @transform_1, window_bounds = array<i64: 64, 32>}, {transform_indices = @transform_2, window_bounds = array<i64: 1, 32>}, {transform_indices = @transform_3, window_bounds = array<i64: 512, 32>}]} {
    %c0_i32 = arith.constant 0 : i32
    %0 = arith.cmpi eq, %arg2, %c0_i32 : i32
    %1 = arith.extui %0 : i1 to i32
    %c0_i32_0 = arith.constant 0 : i32
    %2 = arith.cmpi ne, %1, %c0_i32_0 : i32
    scf.if %2 {
      %cst_10 = arith.constant 0.000000e+00 : f32
      %12 = vector.broadcast %cst_10 : f32 to vector<512x32xf32>
      %c0_11 = arith.constant 0 : index
      %c0_12 = arith.constant 0 : index
      %13 = vector.load %arg7[%c0_11, %c0_12] : memref<512x32xf32, #tpu.memory_space<vmem>>, vector<512x32xf32>
      tpu.vector_store %arg7[%c0_11, %c0_12], %12 {strides = array<i32>} : memref<512x32xf32, #tpu.memory_space<vmem>>, vector<512x32xf32>,
    } else {
    }
    %c0 = arith.constant 0 : index
    %c0_1 = arith.constant 0 : index
    %3 = vector.load %arg7[%c0, %c0_1] : memref<512x32xf32, #tpu.memory_space<vmem>>, vector<512x32xf32>
    %c0_2 = arith.constant 0 : index
    %c0_3 = arith.constant 0 : index
    %4 = vector.load %arg3[%c0_2, %c0_3] : memref<512x64xbf16, #tpu.memory_space<vmem>>, vector<512x64xbf16>
    %c0_4 = arith.constant 0 : index
    %c0_5 = arith.constant 0 : index
    %5 = vector.load %arg4[%c0_4, %c0_5] : memref<64x32xbf16, #tpu.memory_space<vmem>>, vector<64x32xbf16>
    %cst = arith.constant dense<0.000000e+00> : vector<512x32xf32>
    %6 = tpu.matmul %4, %5, %cst {dimension_numbers = #tpu.dot_dimension_numbers<[1], [0], [0], [1], [0, 0, 1, 1], [], []>} : vector<512x64xbf16>, vector<64x32xbf16>, vector<512x32xf32> -> vector<512x32xf32>
    %7 = arith.addf %3, %6 : vector<512x32xf32>
    %c0_6 = arith.constant 0 : index
    %c0_7 = arith.constant 0 : index
    %8 = vector.load %arg7[%c0_6, %c0_7] : memref<512x32xf32, #tpu.memory_space<vmem>>, vector<512x32xf32>
    tpu.vector_store %arg7[%c0_6, %c0_7], %7 {strides = array<i32>} : memref<512x32xf32, #tpu.memory_space<vmem>>, vector<512x32xf32>,
    %c0_i32_8 = arith.constant 0 : i32
    %9 = arith.cmpi eq, %arg2, %c0_i32_8 : i32
    %10 = arith.extui %9 : i1 to i32
    %c0_i32_9 = arith.constant 0 : i32
    %11 = arith.cmpi ne, %10, %c0_i32_9 : i32
    scf.if %11 {
      %c0_10 = arith.constant 0 : index
      %c0_11 = arith.constant 0 : index
      %12 = vector.load %arg7[%c0_10, %c0_11] : memref<512x32xf32, #tpu.memory_space<vmem>>, vector<512x32xf32>
      %c0_12 = arith.constant 0 : index
      %c0_13 = arith.constant 0 : index
      %13 = vector.load %arg5[%c0_12, %c0_13] : memref<1x32xf32, #tpu.memory_space<vmem>>, vector<1x32xf32>
      %14 = vector.broadcast %13 : vector<1x32xf32> to vector<512x32xf32>
      %15 = arith.addf %12, %14 : vector<512x32xf32>
      %cst_14 = arith.constant 0.000000e+00 : f32
      %16 = vector.broadcast %cst_14 : f32 to vector<512x32xf32>
      %17 = arith.maximumf %15, %16 : vector<512x32xf32>
      %18 = arith.truncf %17 : vector<512x32xf32> to vector<512x32xbf16>
      %c0_15 = arith.constant 0 : index
      %c0_16 = arith.constant 0 : index
      %19 = vector.load %arg6[%c0_15, %c0_16] : memref<512x32xbf16, #tpu.memory_space<vmem>>, vector<512x32xbf16>
      tpu.vector_store %arg6[%c0_15, %c0_16], %18 {strides = array<i32>} : memref<512x32xbf16, #tpu.memory_space<vmem>>, vector<512x32xbf16>,
    } else {
    }
    return
  }
  func.func @transform_0(%arg0: i32, %arg1: i32, %arg2: i32) -> (i32, i32) {
    %c0_i32 = arith.constant 0 : i32
    return %arg0, %arg2 : i32, i32
  }
  func.func @transform_1(%arg0: i32, %arg1: i32, %arg2: i32) -> (i32, i32) {
    %c0_i32 = arith.constant 0 : i32
    return %arg2, %arg1 : i32, i32
  }
  func.func @transform_2(%arg0: i32, %arg1: i32, %arg2: i32) -> (i32, i32) {
    %c0_i32 = arith.constant 0 : i32
    %c0_i32_0 = arith.constant 0 : i32
    return %c0_i32, %arg1 : i32, i32
  }
  func.func @transform_3(%arg0: i32, %arg1: i32, %arg2: i32) -> (i32, i32) {
    %c0_i32 = arith.constant 0 : i32
    return %arg0, %arg1 : i32, i32
  }
}

module attributes {stable_mosaic.version = 11 : i64} {
  func.func @_conv3x3_kernel(%arg0: i32, %arg1: memref<1x4x90x32xbf16, #tpu.memory_space<vmem>>, %arg2: memref<3x3x32x32xbf16, #tpu.memory_space<vmem>>, %arg3: memref<1x32xf32, #tpu.memory_space<vmem>>, %arg4: memref<1x72x32xbf16, #tpu.memory_space<vmem>>) attributes {dimension_semantics = [#tpu.dimension_semantics<parallel>], iteration_bounds = array<i64: 2>, scalar_prefetch = 0 : i64, scratch_operands = 0 : i64, tpu.core_type = #tpu.core_type<tc>, window_params = [{transform_indices = @transform_0, window_bounds = array<i64: 1, 4, 90, 32>}, {pipeline_mode = #tpu.pipeline_mode<synchronous>, transform_indices = @transform_1, window_bounds = array<i64: 3, 3, 32, 32>}, {pipeline_mode = #tpu.pipeline_mode<synchronous>, transform_indices = @transform_2, window_bounds = array<i64: 1, 32>}, {transform_indices = @transform_3, window_bounds = array<i64: 1, 72, 32>}]} {
    %cst = arith.constant 0.000000e+00 : f32
    %0 = vector.broadcast %cst : f32 to vector<72x32xf32>
    %c0 = arith.constant 0 : index
    %c0_0 = arith.constant 0 : index
    %c0_1 = arith.constant 0 : index
    %c0_2 = arith.constant 0 : index
    %1 = vector.load %arg1[%c0, %c0_0, %c0_1, %c0_2] : memref<1x4x90x32xbf16, #tpu.memory_space<vmem>>, vector<1x1x72x32xbf16>
    %2 = vector.shape_cast %1 : vector<1x1x72x32xbf16> to vector<72x32xbf16>
    %c0_3 = arith.constant 0 : index
    %c0_4 = arith.constant 0 : index
    %c0_5 = arith.constant 0 : index
    %c0_6 = arith.constant 0 : index
    %3 = vector.load %arg2[%c0_3, %c0_4, %c0_5, %c0_6] : memref<3x3x32x32xbf16, #tpu.memory_space<vmem>>, vector<1x1x32x32xbf16>
    %4 = vector.shape_cast %3 : vector<1x1x32x32xbf16> to vector<32x32xbf16>
    %cst_7 = arith.constant dense<0.000000e+00> : vector<72x32xf32>
    %5 = tpu.matmul %2, %4, %cst_7 {dimension_numbers = #tpu.dot_dimension_numbers<[1], [0], [0], [1], [0, 0, 1, 1], [], []>} : vector<72x32xbf16>, vector<32x32xbf16>, vector<72x32xf32> -> vector<72x32xf32>
    %6 = arith.addf %0, %5 : vector<72x32xf32>
    %c0_8 = arith.constant 0 : index
    %c1 = arith.constant 1 : index
    %c0_9 = arith.constant 0 : index
    %c0_10 = arith.constant 0 : index
    %7 = vector.load %arg1[%c0_8, %c1, %c0_9, %c0_10] : memref<1x4x90x32xbf16, #tpu.memory_space<vmem>>, vector<1x1x72x32xbf16>
    %8 = vector.shape_cast %7 : vector<1x1x72x32xbf16> to vector<72x32xbf16>
    %c0_11 = arith.constant 0 : index
    %c1_12 = arith.constant 1 : index
    %c0_13 = arith.constant 0 : index
    %c0_14 = arith.constant 0 : index
    %9 = vector.load %arg2[%c0_11, %c1_12, %c0_13, %c0_14] : memref<3x3x32x32xbf16, #tpu.memory_space<vmem>>, vector<1x1x32x32xbf16>
    %10 = vector.shape_cast %9 : vector<1x1x32x32xbf16> to vector<32x32xbf16>
    %cst_15 = arith.constant dense<0.000000e+00> : vector<72x32xf32>
    %11 = tpu.matmul %8, %10, %cst_15 {dimension_numbers = #tpu.dot_dimension_numbers<[1], [0], [0], [1], [0, 0, 1, 1], [], []>} : vector<72x32xbf16>, vector<32x32xbf16>, vector<72x32xf32> -> vector<72x32xf32>
    %12 = arith.addf %6, %11 : vector<72x32xf32>
    %c0_16 = arith.constant 0 : index
    %c0_17 = arith.constant 0 : index
    %c1_18 = arith.constant 1 : index
    %c0_19 = arith.constant 0 : index
    %13 = vector.load %arg1[%c0_16, %c0_17, %c1_18, %c0_19] : memref<1x4x90x32xbf16, #tpu.memory_space<vmem>>, vector<1x1x72x32xbf16>
    %14 = vector.shape_cast %13 : vector<1x1x72x32xbf16> to vector<72x32xbf16>
    %c0_20 = arith.constant 0 : index
    %c2 = arith.constant 2 : index
    %c0_21 = arith.constant 0 : index
    %c0_22 = arith.constant 0 : index
    %15 = vector.load %arg2[%c0_20, %c2, %c0_21, %c0_22] : memref<3x3x32x32xbf16, #tpu.memory_space<vmem>>, vector<1x1x32x32xbf16>
    %16 = vector.shape_cast %15 : vector<1x1x32x32xbf16> to vector<32x32xbf16>
    %cst_23 = arith.constant dense<0.000000e+00> : vector<72x32xf32>
    %17 = tpu.matmul %14, %16, %cst_23 {dimension_numbers = #tpu.dot_dimension_numbers<[1], [0], [0], [1], [0, 0, 1, 1], [], []>} : vector<72x32xbf16>, vector<32x32xbf16>, vector<72x32xf32> -> vector<72x32xf32>
    %18 = arith.addf %12, %17 : vector<72x32xf32>
    %c0_24 = arith.constant 0 : index
    %c2_25 = arith.constant 2 : index
    %c0_26 = arith.constant 0 : index
    %c0_27 = arith.constant 0 : index
    %19 = vector.load %arg1[%c0_24, %c2_25, %c0_26, %c0_27] : memref<1x4x90x32xbf16, #tpu.memory_space<vmem>>, vector<1x1x72x32xbf16>
    %20 = vector.shape_cast %19 : vector<1x1x72x32xbf16> to vector<72x32xbf16>
    %c1_28 = arith.constant 1 : index
    %c0_29 = arith.constant 0 : index
    %c0_30 = arith.constant 0 : index
    %c0_31 = arith.constant 0 : index
    %21 = vector.load %arg2[%c1_28, %c0_29, %c0_30, %c0_31] : memref<3x3x32x32xbf16, #tpu.memory_space<vmem>>, vector<1x1x32x32xbf16>
    %22 = vector.shape_cast %21 : vector<1x1x32x32xbf16> to vector<32x32xbf16>
    %cst_32 = arith.constant dense<0.000000e+00> : vector<72x32xf32>
    %23 = tpu.matmul %20, %22, %cst_32 {dimension_numbers = #tpu.dot_dimension_numbers<[1], [0], [0], [1], [0, 0, 1, 1], [], []>} : vector<72x32xbf16>, vector<32x32xbf16>, vector<72x32xf32> -> vector<72x32xf32>
    %24 = arith.addf %18, %23 : vector<72x32xf32>
    %c0_33 = arith.constant 0 : index
    %c3 = arith.constant 3 : index
    %c0_34 = arith.constant 0 : index
    %c0_35 = arith.constant 0 : index
    %25 = vector.load %arg1[%c0_33, %c3, %c0_34, %c0_35] : memref<1x4x90x32xbf16, #tpu.memory_space<vmem>>, vector<1x1x72x32xbf16>
    %26 = vector.shape_cast %25 : vector<1x1x72x32xbf16> to vector<72x32xbf16>
    %c1_36 = arith.constant 1 : index
    %c1_37 = arith.constant 1 : index
    %c0_38 = arith.constant 0 : index
    %c0_39 = arith.constant 0 : index
    %27 = vector.load %arg2[%c1_36, %c1_37, %c0_38, %c0_39] : memref<3x3x32x32xbf16, #tpu.memory_space<vmem>>, vector<1x1x32x32xbf16>
    %28 = vector.shape_cast %27 : vector<1x1x32x32xbf16> to vector<32x32xbf16>
    %cst_40 = arith.constant dense<0.000000e+00> : vector<72x32xf32>
    %29 = tpu.matmul %26, %28, %cst_40 {dimension_numbers = #tpu.dot_dimension_numbers<[1], [0], [0], [1], [0, 0, 1, 1], [], []>} : vector<72x32xbf16>, vector<32x32xbf16>, vector<72x32xf32> -> vector<72x32xf32>
    %30 = arith.addf %24, %29 : vector<72x32xf32>
    %c0_41 = arith.constant 0 : index
    %c2_42 = arith.constant 2 : index
    %c1_43 = arith.constant 1 : index
    %c0_44 = arith.constant 0 : index
    %31 = vector.load %arg1[%c0_41, %c2_42, %c1_43, %c0_44] : memref<1x4x90x32xbf16, #tpu.memory_space<vmem>>, vector<1x1x72x32xbf16>
    %32 = vector.shape_cast %31 : vector<1x1x72x32xbf16> to vector<72x32xbf16>
    %c1_45 = arith.constant 1 : index
    %c2_46 = arith.constant 2 : index
    %c0_47 = arith.constant 0 : index
    %c0_48 = arith.constant 0 : index
    %33 = vector.load %arg2[%c1_45, %c2_46, %c0_47, %c0_48] : memref<3x3x32x32xbf16, #tpu.memory_space<vmem>>, vector<1x1x32x32xbf16>
    %34 = vector.shape_cast %33 : vector<1x1x32x32xbf16> to vector<32x32xbf16>
    %cst_49 = arith.constant dense<0.000000e+00> : vector<72x32xf32>
    %35 = tpu.matmul %32, %34, %cst_49 {dimension_numbers = #tpu.dot_dimension_numbers<[1], [0], [0], [1], [0, 0, 1, 1], [], []>} : vector<72x32xbf16>, vector<32x32xbf16>, vector<72x32xf32> -> vector<72x32xf32>
    %36 = arith.addf %30, %35 : vector<72x32xf32>
    %c0_50 = arith.constant 0 : index
    %c0_51 = arith.constant 0 : index
    %c9 = arith.constant 9 : index
    %c0_52 = arith.constant 0 : index
    %37 = vector.load %arg1[%c0_50, %c0_51, %c9, %c0_52] : memref<1x4x90x32xbf16, #tpu.memory_space<vmem>>, vector<1x1x72x32xbf16>
    %38 = vector.shape_cast %37 : vector<1x1x72x32xbf16> to vector<72x32xbf16>
    %c2_53 = arith.constant 2 : index
    %c0_54 = arith.constant 0 : index
    %c0_55 = arith.constant 0 : index
    %c0_56 = arith.constant 0 : index
    %39 = vector.load %arg2[%c2_53, %c0_54, %c0_55, %c0_56] : memref<3x3x32x32xbf16, #tpu.memory_space<vmem>>, vector<1x1x32x32xbf16>
    %40 = vector.shape_cast %39 : vector<1x1x32x32xbf16> to vector<32x32xbf16>
    %cst_57 = arith.constant dense<0.000000e+00> : vector<72x32xf32>
    %41 = tpu.matmul %38, %40, %cst_57 {dimension_numbers = #tpu.dot_dimension_numbers<[1], [0], [0], [1], [0, 0, 1, 1], [], []>} : vector<72x32xbf16>, vector<32x32xbf16>, vector<72x32xf32> -> vector<72x32xf32>
    %42 = arith.addf %36, %41 : vector<72x32xf32>
    %c0_58 = arith.constant 0 : index
    %c1_59 = arith.constant 1 : index
    %c9_60 = arith.constant 9 : index
    %c0_61 = arith.constant 0 : index
    %43 = vector.load %arg1[%c0_58, %c1_59, %c9_60, %c0_61] : memref<1x4x90x32xbf16, #tpu.memory_space<vmem>>, vector<1x1x72x32xbf16>
    %44 = vector.shape_cast %43 : vector<1x1x72x32xbf16> to vector<72x32xbf16>
    %c2_62 = arith.constant 2 : index
    %c1_63 = arith.constant 1 : index
    %c0_64 = arith.constant 0 : index
    %c0_65 = arith.constant 0 : index
    %45 = vector.load %arg2[%c2_62, %c1_63, %c0_64, %c0_65] : memref<3x3x32x32xbf16, #tpu.memory_space<vmem>>, vector<1x1x32x32xbf16>
    %46 = vector.shape_cast %45 : vector<1x1x32x32xbf16> to vector<32x32xbf16>
    %cst_66 = arith.constant dense<0.000000e+00> : vector<72x32xf32>
    %47 = tpu.matmul %44, %46, %cst_66 {dimension_numbers = #tpu.dot_dimension_numbers<[1], [0], [0], [1], [0, 0, 1, 1], [], []>} : vector<72x32xbf16>, vector<32x32xbf16>, vector<72x32xf32> -> vector<72x32xf32>
    %48 = arith.addf %42, %47 : vector<72x32xf32>
    %c0_67 = arith.constant 0 : index
    %c0_68 = arith.constant 0 : index
    %c10 = arith.constant 10 : index
    %c0_69 = arith.constant 0 : index
    %49 = vector.load %arg1[%c0_67, %c0_68, %c10, %c0_69] : memref<1x4x90x32xbf16, #tpu.memory_space<vmem>>, vector<1x1x72x32xbf16>
    %50 = vector.shape_cast %49 : vector<1x1x72x32xbf16> to vector<72x32xbf16>
    %c2_70 = arith.constant 2 : index
    %c2_71 = arith.constant 2 : index
    %c0_72 = arith.constant 0 : index
    %c0_73 = arith.constant 0 : index
    %51 = vector.load %arg2[%c2_70, %c2_71, %c0_72, %c0_73] : memref<3x3x32x32xbf16, #tpu.memory_space<vmem>>, vector<1x1x32x32xbf16>
    %52 = vector.shape_cast %51 : vector<1x1x32x32xbf16> to vector<32x32xbf16>
    %cst_74 = arith.constant dense<0.000000e+00> : vector<72x32xf32>
    %53 = tpu.matmul %50, %52, %cst_74 {dimension_numbers = #tpu.dot_dimension_numbers<[1], [0], [0], [1], [0, 0, 1, 1], [], []>} : vector<72x32xbf16>, vector<32x32xbf16>, vector<72x32xf32> -> vector<72x32xf32>
    %54 = arith.addf %48, %53 : vector<72x32xf32>
    %c0_75 = arith.constant 0 : index
    %c0_76 = arith.constant 0 : index
    %55 = vector.load %arg3[%c0_75, %c0_76] : memref<1x32xf32, #tpu.memory_space<vmem>>, vector<1x32xf32>
    %56 = vector.broadcast %55 : vector<1x32xf32> to vector<72x32xf32>
    %57 = arith.addf %54, %56 : vector<72x32xf32>
    %cst_77 = arith.constant 0.000000e+00 : f32
    %58 = vector.broadcast %cst_77 : f32 to vector<72x32xf32>
    %59 = arith.maximumf %57, %58 : vector<72x32xf32>
    %60 = arith.truncf %59 : vector<72x32xf32> to vector<72x32xbf16>
    %c0_78 = arith.constant 0 : index
    %c0_79 = arith.constant 0 : index
    %c0_80 = arith.constant 0 : index
    %61 = vector.load %arg4[%c0_78, %c0_79, %c0_80] : memref<1x72x32xbf16, #tpu.memory_space<vmem>>, vector<1x72x32xbf16>
    %62 = vector.shape_cast %61 : vector<1x72x32xbf16> to vector<72x32xbf16>
    %63 = vector.shape_cast %60 : vector<72x32xbf16> to vector<1x72x32xbf16>
    tpu.vector_store %arg4[%c0_78, %c0_79, %c0_80], %63 {strides = array<i32>} : memref<1x72x32xbf16, #tpu.memory_space<vmem>>, vector<1x72x32xbf16>,
    return
  }
  func.func @transform_0(%arg0: i32) -> (i32, i32, i32, i32) {
    %c0_i32 = arith.constant 0 : i32
    %c0_i32_0 = arith.constant 0 : i32
    %c0_i32_1 = arith.constant 0 : i32
    %c0_i32_2 = arith.constant 0 : i32
    return %arg0, %c0_i32, %c0_i32_0, %c0_i32_1 : i32, i32, i32, i32
  }
  func.func @transform_1(%arg0: i32) -> (i32, i32, i32, i32) {
    %c0_i32 = arith.constant 0 : i32
    %c0_i32_0 = arith.constant 0 : i32
    %c0_i32_1 = arith.constant 0 : i32
    %c0_i32_2 = arith.constant 0 : i32
    %c0_i32_3 = arith.constant 0 : i32
    return %c0_i32, %c0_i32_0, %c0_i32_1, %c0_i32_2 : i32, i32, i32, i32
  }
  func.func @transform_2(%arg0: i32) -> (i32, i32) {
    %c0_i32 = arith.constant 0 : i32
    %c0_i32_0 = arith.constant 0 : i32
    %c0_i32_1 = arith.constant 0 : i32
    return %c0_i32, %c0_i32_0 : i32, i32
  }
  func.func @transform_3(%arg0: i32) -> (i32, i32, i32) {
    %c0_i32 = arith.constant 0 : i32
    %c0_i32_0 = arith.constant 0 : i32
    %c0_i32_1 = arith.constant 0 : i32
    return %arg0, %c0_i32, %c0_i32_0 : i32, i32, i32
  }
}

module attributes {stable_mosaic.version = 11 : i64} {
  func.func @_gemm_kernel(%arg0: i32, %arg1: i32, %arg2: i32, %arg3: memref<128x64xbf16, #tpu.memory_space<vmem>>, %arg4: memref<64x128xbf16, #tpu.memory_space<vmem>>, %arg5: memref<1x128xf32, #tpu.memory_space<vmem>>, %arg6: memref<128x128xf32, #tpu.memory_space<vmem>>, %arg7: memref<128x128xf32, #tpu.memory_space<vmem>>) attributes {dimension_semantics = [#tpu.dimension_semantics<parallel>, #tpu.dimension_semantics<parallel>, #tpu.dimension_semantics<arbitrary>], iteration_bounds = array<i64: 1, 1, 1>, scalar_prefetch = 0 : i64, scratch_operands = 1 : i64, tpu.core_type = #tpu.core_type<tc>, window_params = [{transform_indices = @transform_0, window_bounds = array<i64: 128, 64>}, {transform_indices = @transform_1, window_bounds = array<i64: 64, 128>}, {transform_indices = @transform_2, window_bounds = array<i64: 1, 128>}, {transform_indices = @transform_3, window_bounds = array<i64: 128, 128>}]} {
    %c0_i32 = arith.constant 0 : i32
    %0 = arith.cmpi eq, %arg2, %c0_i32 : i32
    %1 = arith.extui %0 : i1 to i32
    %c0_i32_0 = arith.constant 0 : i32
    %2 = arith.cmpi ne, %1, %c0_i32_0 : i32
    scf.if %2 {
      %cst_10 = arith.constant 0.000000e+00 : f32
      %12 = vector.broadcast %cst_10 : f32 to vector<128x128xf32>
      %c0_11 = arith.constant 0 : index
      %c0_12 = arith.constant 0 : index
      %13 = vector.load %arg7[%c0_11, %c0_12] : memref<128x128xf32, #tpu.memory_space<vmem>>, vector<128x128xf32>
      tpu.vector_store %arg7[%c0_11, %c0_12], %12 {strides = array<i32>} : memref<128x128xf32, #tpu.memory_space<vmem>>, vector<128x128xf32>,
    } else {
    }
    %c0 = arith.constant 0 : index
    %c0_1 = arith.constant 0 : index
    %3 = vector.load %arg7[%c0, %c0_1] : memref<128x128xf32, #tpu.memory_space<vmem>>, vector<128x128xf32>
    %c0_2 = arith.constant 0 : index
    %c0_3 = arith.constant 0 : index
    %4 = vector.load %arg3[%c0_2, %c0_3] : memref<128x64xbf16, #tpu.memory_space<vmem>>, vector<128x64xbf16>
    %c0_4 = arith.constant 0 : index
    %c0_5 = arith.constant 0 : index
    %5 = vector.load %arg4[%c0_4, %c0_5] : memref<64x128xbf16, #tpu.memory_space<vmem>>, vector<64x128xbf16>
    %cst = arith.constant dense<0.000000e+00> : vector<128x128xf32>
    %6 = tpu.matmul %4, %5, %cst {dimension_numbers = #tpu.dot_dimension_numbers<[1], [0], [0], [1], [0, 0, 1, 1], [], []>} : vector<128x64xbf16>, vector<64x128xbf16>, vector<128x128xf32> -> vector<128x128xf32>
    %7 = arith.addf %3, %6 : vector<128x128xf32>
    %c0_6 = arith.constant 0 : index
    %c0_7 = arith.constant 0 : index
    %8 = vector.load %arg7[%c0_6, %c0_7] : memref<128x128xf32, #tpu.memory_space<vmem>>, vector<128x128xf32>
    tpu.vector_store %arg7[%c0_6, %c0_7], %7 {strides = array<i32>} : memref<128x128xf32, #tpu.memory_space<vmem>>, vector<128x128xf32>,
    %c0_i32_8 = arith.constant 0 : i32
    %9 = arith.cmpi eq, %arg2, %c0_i32_8 : i32
    %10 = arith.extui %9 : i1 to i32
    %c0_i32_9 = arith.constant 0 : i32
    %11 = arith.cmpi ne, %10, %c0_i32_9 : i32
    scf.if %11 {
      %c0_10 = arith.constant 0 : index
      %c0_11 = arith.constant 0 : index
      %12 = vector.load %arg7[%c0_10, %c0_11] : memref<128x128xf32, #tpu.memory_space<vmem>>, vector<128x128xf32>
      %c0_12 = arith.constant 0 : index
      %c0_13 = arith.constant 0 : index
      %13 = vector.load %arg5[%c0_12, %c0_13] : memref<1x128xf32, #tpu.memory_space<vmem>>, vector<1x128xf32>
      %14 = vector.broadcast %13 : vector<1x128xf32> to vector<128x128xf32>
      %15 = arith.addf %12, %14 : vector<128x128xf32>
      %c0_14 = arith.constant 0 : index
      %c0_15 = arith.constant 0 : index
      %16 = vector.load %arg6[%c0_14, %c0_15] : memref<128x128xf32, #tpu.memory_space<vmem>>, vector<128x128xf32>
      tpu.vector_store %arg6[%c0_14, %c0_15], %15 {strides = array<i32>} : memref<128x128xf32, #tpu.memory_space<vmem>>, vector<128x128xf32>,
    } else {
    }
    return
  }
  func.func @transform_0(%arg0: i32, %arg1: i32, %arg2: i32) -> (i32, i32) {
    %c0_i32 = arith.constant 0 : i32
    return %arg0, %arg2 : i32, i32
  }
  func.func @transform_1(%arg0: i32, %arg1: i32, %arg2: i32) -> (i32, i32) {
    %c0_i32 = arith.constant 0 : i32
    return %arg2, %arg1 : i32, i32
  }
  func.func @transform_2(%arg0: i32, %arg1: i32, %arg2: i32) -> (i32, i32) {
    %c0_i32 = arith.constant 0 : i32
    %c0_i32_0 = arith.constant 0 : i32
    return %c0_i32, %arg1 : i32, i32
  }
  func.func @transform_3(%arg0: i32, %arg1: i32, %arg2: i32) -> (i32, i32) {
    %c0_i32 = arith.constant 0 : i32
    return %arg0, %arg1 : i32, i32
  }
}

module attributes {stable_mosaic.version = 11 : i64} {
  func.func @_gemm_kernel(%arg0: i32, %arg1: i32, %arg2: i32, %arg3: memref<128x32xbf16, #tpu.memory_space<vmem>>, %arg4: memref<32x128xbf16, #tpu.memory_space<vmem>>, %arg5: memref<1x128xf32, #tpu.memory_space<vmem>>, %arg6: memref<128x128xf32, #tpu.memory_space<vmem>>, %arg7: memref<128x128xf32, #tpu.memory_space<vmem>>, %arg8: memref<128x128xf32, #tpu.memory_space<vmem>>) attributes {dimension_semantics = [#tpu.dimension_semantics<parallel>, #tpu.dimension_semantics<parallel>, #tpu.dimension_semantics<arbitrary>], iteration_bounds = array<i64: 1, 1, 1>, scalar_prefetch = 0 : i64, scratch_operands = 1 : i64, tpu.core_type = #tpu.core_type<tc>, window_params = [{transform_indices = @transform_0, window_bounds = array<i64: 128, 32>}, {transform_indices = @transform_1, window_bounds = array<i64: 32, 128>}, {transform_indices = @transform_2, window_bounds = array<i64: 1, 128>}, {transform_indices = @transform_3, window_bounds = array<i64: 128, 128>}, {transform_indices = @transform_4, window_bounds = array<i64: 128, 128>}]} {
    %c0_i32 = arith.constant 0 : i32
    %0 = arith.cmpi eq, %arg2, %c0_i32 : i32
    %1 = arith.extui %0 : i1 to i32
    %c0_i32_0 = arith.constant 0 : i32
    %2 = arith.cmpi ne, %1, %c0_i32_0 : i32
    scf.if %2 {
      %cst_10 = arith.constant 0.000000e+00 : f32
      %12 = vector.broadcast %cst_10 : f32 to vector<128x128xf32>
      %c0_11 = arith.constant 0 : index
      %c0_12 = arith.constant 0 : index
      %13 = vector.load %arg8[%c0_11, %c0_12] : memref<128x128xf32, #tpu.memory_space<vmem>>, vector<128x128xf32>
      tpu.vector_store %arg8[%c0_11, %c0_12], %12 {strides = array<i32>} : memref<128x128xf32, #tpu.memory_space<vmem>>, vector<128x128xf32>,
    } else {
    }
    %c0 = arith.constant 0 : index
    %c0_1 = arith.constant 0 : index
    %3 = vector.load %arg8[%c0, %c0_1] : memref<128x128xf32, #tpu.memory_space<vmem>>, vector<128x128xf32>
    %c0_2 = arith.constant 0 : index
    %c0_3 = arith.constant 0 : index
    %4 = vector.load %arg3[%c0_2, %c0_3] : memref<128x32xbf16, #tpu.memory_space<vmem>>, vector<128x32xbf16>
    %c0_4 = arith.constant 0 : index
    %c0_5 = arith.constant 0 : index
    %5 = vector.load %arg4[%c0_4, %c0_5] : memref<32x128xbf16, #tpu.memory_space<vmem>>, vector<32x128xbf16>
    %cst = arith.constant dense<0.000000e+00> : vector<128x128xf32>
    %6 = tpu.matmul %4, %5, %cst {dimension_numbers = #tpu.dot_dimension_numbers<[1], [0], [0], [1], [0, 0, 1, 1], [], []>} : vector<128x32xbf16>, vector<32x128xbf16>, vector<128x128xf32> -> vector<128x128xf32>
    %7 = arith.addf %3, %6 : vector<128x128xf32>
    %c0_6 = arith.constant 0 : index
    %c0_7 = arith.constant 0 : index
    %8 = vector.load %arg8[%c0_6, %c0_7] : memref<128x128xf32, #tpu.memory_space<vmem>>, vector<128x128xf32>
    tpu.vector_store %arg8[%c0_6, %c0_7], %7 {strides = array<i32>} : memref<128x128xf32, #tpu.memory_space<vmem>>, vector<128x128xf32>,
    %c0_i32_8 = arith.constant 0 : i32
    %9 = arith.cmpi eq, %arg2, %c0_i32_8 : i32
    %10 = arith.extui %9 : i1 to i32
    %c0_i32_9 = arith.constant 0 : i32
    %11 = arith.cmpi ne, %10, %c0_i32_9 : i32
    scf.if %11 {
      %c0_10 = arith.constant 0 : index
      %c0_11 = arith.constant 0 : index
      %12 = vector.load %arg8[%c0_10, %c0_11] : memref<128x128xf32, #tpu.memory_space<vmem>>, vector<128x128xf32>
      %c0_12 = arith.constant 0 : index
      %c0_13 = arith.constant 0 : index
      %13 = vector.load %arg5[%c0_12, %c0_13] : memref<1x128xf32, #tpu.memory_space<vmem>>, vector<1x128xf32>
      %14 = vector.broadcast %13 : vector<1x128xf32> to vector<128x128xf32>
      %15 = arith.addf %12, %14 : vector<128x128xf32>
      %c0_14 = arith.constant 0 : index
      %c0_15 = arith.constant 0 : index
      %16 = vector.load %arg6[%c0_14, %c0_15] : memref<128x128xf32, #tpu.memory_space<vmem>>, vector<128x128xf32>
      %17 = arith.addf %15, %16 : vector<128x128xf32>
      %cst_16 = arith.constant 0.000000e+00 : f32
      %18 = vector.broadcast %cst_16 : f32 to vector<128x128xf32>
      %19 = arith.maximumf %17, %18 : vector<128x128xf32>
      %c0_17 = arith.constant 0 : index
      %c0_18 = arith.constant 0 : index
      %20 = vector.load %arg7[%c0_17, %c0_18] : memref<128x128xf32, #tpu.memory_space<vmem>>, vector<128x128xf32>
      tpu.vector_store %arg7[%c0_17, %c0_18], %19 {strides = array<i32>} : memref<128x128xf32, #tpu.memory_space<vmem>>, vector<128x128xf32>,
    } else {
    }
    return
  }
  func.func @transform_0(%arg0: i32, %arg1: i32, %arg2: i32) -> (i32, i32) {
    %c0_i32 = arith.constant 0 : i32
    return %arg0, %arg2 : i32, i32
  }
  func.func @transform_1(%arg0: i32, %arg1: i32, %arg2: i32) -> (i32, i32) {
    %c0_i32 = arith.constant 0 : i32
    return %arg2, %arg1 : i32, i32
  }
  func.func @transform_2(%arg0: i32, %arg1: i32, %arg2: i32) -> (i32, i32) {
    %c0_i32 = arith.constant 0 : i32
    %c0_i32_0 = arith.constant 0 : i32
    return %c0_i32, %arg1 : i32, i32
  }
  func.func @transform_3(%arg0: i32, %arg1: i32, %arg2: i32) -> (i32, i32) {
    %c0_i32 = arith.constant 0 : i32
    return %arg0, %arg1 : i32, i32
  }
  func.func @transform_4(%arg0: i32, %arg1: i32, %arg2: i32) -> (i32, i32) {
    %c0_i32 = arith.constant 0 : i32
    return %arg0, %arg1 : i32, i32
  }
}

</mosaic_0001>

<llo_original>
// kernel: bottleneck_forward.4
$region0: #{bottleneck_forward.4}
  #allocation0 [shape = 'u32[]', space=smem, size = 0x4, offset = 0x4, fixed_abs, tag = 'smem constant byte address 0x4 - core index']
  #allocation1 [shape = 'u32[144,128]{1,0:T(1,128)}', space=vmem, size = 0x12000, scoped, tag = 'internal scratch']
  #allocation2 [shape = 'f32[512,32]{1,0:T(8,128)}', space=vmem, size = 0x40000, scoped, tag = 'scratch operand']
  %s0 = inlined_call_operand.vmem [shape: bf16[512,64], index: 0, kind: input, shape index: {}]
  %s1 = inlined_call_operand.vmem [shape: bf16[64,32], index: 1, kind: input, shape index: {}]
  %s2 = inlined_call_operand.vmem [shape: f32[1,32], index: 2, kind: input, shape index: {}]
  %s3 = inlined_call_operand.vmem [shape: bf16[512,32], index: 3, kind: output, shape index: {}]
  %s4 = sld [smem:[#allocation0]]
  $region30: #{bottleneck_forward.4} parent=0
    _
  %s6 = ssub.s32 1, %s4
  %s7 = scalar_select 0, %s6, %s4
  // Predicated region
  $region2: #{bottleneck_forward.4} parent=0 // pred_check
    _
  $region3: #{bottleneck_forward.4} parent=0 // pred_check_branch
    %9 = sbr.rel (0) target = $region5
  $region4: #{bottleneck_forward.4} parent=0 // pred_region
    _
  $region5: #{bottleneck_forward.4} parent=0 // pred_fallthru
    _
  // Predicated region
  $region6: #{bottleneck_forward.4} parent=0 // pred_check
    _
  $region7: #{bottleneck_forward.4} parent=0 // pred_check_branch
    %11 = sbr.rel (0) target = $region9
  $region8: #{bottleneck_forward.4} parent=0 // pred_region
    _
  $region9: #{bottleneck_forward.4} parent=0 // pred_fallthru
    _
  // Predicated region
  $region10: #{bottleneck_forward.4} parent=0 // pred_check
    _
  $region11: #{bottleneck_forward.4} parent=0 // pred_check_branch
    %13 = sbr.rel (0) target = $region13
  $region12: #{bottleneck_forward.4} parent=0 // pred_region
    _
  $region13: #{bottleneck_forward.4} parent=0 // pred_fallthru
    _
  %p15 = scmp.eq.s32.totalorder 0, 0
  // Predicated region
  $region14: #{bottleneck_forward.4} parent=0 // pred_check
    %p16 = pneg %p15
  $region15: #{bottleneck_forward.4} parent=0 // pred_check_branch
    %18 = sbr.rel (%p16) target = $region17
  $region16: #{bottleneck_forward.4} parent=0 // pred_region
    %vm19 = vcmask 261120
    %20 = vst.msk [vmem:[#allocation2] sm:$0xff] %vm19, 0.0
    %21 = vst.msk [vmem:[#allocation2 + $0x8] sm:$0xff] %vm19, 0.0
    %22 = vst.msk [vmem:[#allocation2 + $0x10] sm:$0xff] %vm19, 0.0
    %23 = vst.msk [vmem:[#allocation2 + $0x18] sm:$0xff] %vm19, 0.0
    %24 = vst.msk [vmem:[#allocation2 + $0x20] sm:$0xff] %vm19, 0.0
    %25 = vst.msk [vmem:[#allocation2 + $0x28] sm:$0xff] %vm19, 0.0
    %26 = vst.msk [vmem:[#allocation2 + $0x30] sm:$0xff] %vm19, 0.0
    %27 = vst.msk [vmem:[#allocation2 + $0x38] sm:$0xff] %vm19, 0.0
    %28 = vst.msk [vmem:[#allocation2 + $0x40] sm:$0xff] %vm19, 0.0
    %29 = vst.msk [vmem:[#allocation2 + $0x48] sm:$0xff] %vm19, 0.0
    %30 = vst.msk [vmem:[#allocation2 + $0x50] sm:$0xff] %vm19, 0.0
    %31 = vst.msk [vmem:[#allocation2 + $0x58] sm:$0xff] %vm19, 0.0
    %32 = vst.msk [vmem:[#allocation2 + $0x60] sm:$0xff] %vm19, 0.0
    %33 = vst.msk [vmem:[#allocation2 + $0x68] sm:$0xff] %vm19, 0.0
    %34 = vst.msk [vmem:[#allocation2 + $0x70] sm:$0xff] %vm19, 0.0
    %35 = vst.msk [vmem:[#allocation2 + $0x78] sm:$0xff] %vm19, 0.0
    %36 = vst.msk [vmem:[#allocation2 + $0x80] sm:$0xff] %vm19, 0.0
    %37 = vst.msk [vmem:[#allocation2 + $0x88] sm:$0xff] %vm19, 0.0
    %38 = vst.msk [vmem:[#allocation2 + $0x90] sm:$0xff] %vm19, 0.0
    %39 = vst.msk [vmem:[#allocation2 + $0x98] sm:$0xff] %vm19, 0.0
    %40 = vst.msk [vmem:[#allocation2 + $0xa0] sm:$0xff] %vm19, 0.0
    %41 = vst.msk [vmem:[#allocation2 + $0xa8] sm:$0xff] %vm19, 0.0
    %42 = vst.msk [vmem:[#allocation2 + $0xb0] sm:$0xff] %vm19, 0.0
    %43 = vst.msk [vmem:[#allocation2 + $0xb8] sm:$0xff] %vm19, 0.0
    %44 = vst.msk [vmem:[#allocation2 + $0xc0] sm:$0xff] %vm19, 0.0
    %45 = vst.msk [vmem:[#allocation2 + $0xc8] sm:$0xff] %vm19, 0.0
    %46 = vst.msk [vmem:[#allocation2 + $0xd0] sm:$0xff] %vm19, 0.0
    %47 = vst.msk [vmem:[#allocation2 + $0xd8] sm:$0xff] %vm19, 0.0
    %48 = vst.msk [vmem:[#allocation2 + $0xe0] sm:$0xff] %vm19, 0.0
    %49 = vst.msk [vmem:[#allocation2 + $0xe8] sm:$0xff] %vm19, 0.0
    %50 = vst.msk [vmem:[#allocation2 + $0xf0] sm:$0xff] %vm19, 0.0
    %51 = vst.msk [vmem:[#allocation2 + $0xf8] sm:$0xff] %vm19, 0.0
    %52 = vst.msk [vmem:[#allocation2 + $0x100] sm:$0xff] %vm19, 0.0
    %53 = vst.msk [vmem:[#allocation2 + $0x108] sm:$0xff] %vm19, 0.0
    %54 = vst.msk [vmem:[#allocation2 + $0x110] sm:$0xff] %vm19, 0.0
    %55 = vst.msk [vmem:[#allocation2 + $0x118] sm:$0xff] %vm19, 0.0
    %56 = vst.msk [vmem:[#allocation2 + $0x120] sm:$0xff] %vm19, 0.0
    %57 = vst.msk [vmem:[#allocation2 + $0x128] sm:$0xff] %vm19, 0.0
    %58 = vst.msk [vmem:[#allocation2 + $0x130] sm:$0xff] %vm19, 0.0
    %59 = vst.msk [vmem:[#allocation2 + $0x138] sm:$0xff] %vm19, 0.0
    %60 = vst.msk [vmem:[#allocation2 + $0x140] sm:$0xff] %vm19, 0.0
    %61 = vst.msk [vmem:[#allocation2 + $0x148] sm:$0xff] %vm19, 0.0
    %62 = vst.msk [vmem:[#allocation2 + $0x150] sm:$0xff] %vm19, 0.0
    %63 = vst.msk [vmem:[#allocation2 + $0x158] sm:$0xff] %vm19, 0.0
    %64 = vst.msk [vmem:[#allocation2 + $0x160] sm:$0xff] %vm19, 0.0
    %65 = vst.msk [vmem:[#allocation2 + $0x168] sm:$0xff] %vm19, 0.0
    %66 = vst.msk [vmem:[#allocation2 + $0x170] sm:$0xff] %vm19, 0.0
    %67 = vst.msk [vmem:[#allocation2 + $0x178] sm:$0xff] %vm19, 0.0
    %68 = vst.msk [vmem:[#allocation2 + $0x180] sm:$0xff] %vm19, 0.0
    %69 = vst.msk [vmem:[#allocation2 + $0x188] sm:$0xff] %vm19, 0.0
    %70 = vst.msk [vmem:[#allocation2 + $0x190] sm:$0xff] %vm19, 0.0
    %71 = vst.msk [vmem:[#allocation2 + $0x198] sm:$0xff] %vm19, 0.0
    %72 = vst.msk [vmem:[#allocation2 + $0x1a0] sm:$0xff] %vm19, 0.0
    %73 = vst.msk [vmem:[#allocation2 + $0x1a8] sm:$0xff] %vm19, 0.0
    %74 = vst.msk [vmem:[#allocation2 + $0x1b0] sm:$0xff] %vm19, 0.0
    %75 = vst.msk [vmem:[#allocation2 + $0x1b8] sm:$0xff] %vm19, 0.0
    %76 = vst.msk [vmem:[#allocation2 + $0x1c0] sm:$0xff] %vm19, 0.0
    %77 = vst.msk [vmem:[#allocation2 + $0x1c8] sm:$0xff] %vm19, 0.0
    %78 = vst.msk [vmem:[#allocation2 + $0x1d0] sm:$0xff] %vm19, 0.0
    %79 = vst.msk [vmem:[#allocation2 + $0x1d8] sm:$0xff] %vm19, 0.0
    %80 = vst.msk [vmem:[#allocation2 + $0x1e0] sm:$0xff] %vm19, 0.0
    %81 = vst.msk [vmem:[#allocation2 + $0x1e8] sm:$0xff] %vm19, 0.0
    %82 = vst.msk [vmem:[#allocation2 + $0x1f0] sm:$0xff] %vm19, 0.0
    %83 = vst.msk [vmem:[#allocation2 + $0x1f8] sm:$0xff] %vm19, 0.0
  $region17: #{bottleneck_forward.4} parent=0 // pred_fallthru
    _
  %v84 = vld [vmem:[#allocation2] sm:$0xff]
  %v85 = vld [vmem:[#allocation2 + $0x8] sm:$0xff]
  %v86 = vld [vmem:[#allocation2 + $0x10] sm:$0xff]
  %v87 = vld [vmem:[#allocation2 + $0x18] sm:$0xff]
  %v88 = vld [vmem:[#allocation2 + $0x20] sm:$0xff]
  %v89 = vld [vmem:[#allocation2 + $0x28] sm:$0xff]
  %v90 = vld [vmem:[#allocation2 + $0x30] sm:$0xff]
  %v91 = vld [vmem:[#allocation2 + $0x38] sm:$0xff]
  %v92 = vld [vmem:[#allocation2 + $0x40] sm:$0xff]
  %v93 = vld [vmem:[#allocation2 + $0x48] sm:$0xff]
  %v94 = vld [vmem:[#allocation2 + $0x50] sm:$0xff]
  %v95 = vld [vmem:[#allocation2 + $0x58] sm:$0xff]
  %v96 = vld [vmem:[#allocation2 + $0x60] sm:$0xff]
  %v97 = vld [vmem:[#allocation2 + $0x68] sm:$0xff]
  %v98 = vld [vmem:[#allocation2 + $0x70] sm:$0xff]
  %v99 = vld [vmem:[#allocation2 + $0x78] sm:$0xff]
  %v100 = vld [vmem:[#allocation2 + $0x80] sm:$0xff]
  %v101 = vld [vmem:[#allocation2 + $0x88] sm:$0xff]
  %v102 = vld [vmem:[#allocation2 + $0x90] sm:$0xff]
  %v103 = vld [vmem:[#allocation2 + $0x98] sm:$0xff]
  %v104 = vld [vmem:[#allocation2 + $0xa0] sm:$0xff]
  %v105 = vld [vmem:[#allocation2 + $0xa8] sm:$0xff]
  %v106 = vld [vmem:[#allocation2 + $0xb0] sm:$0xff]
  %v107 = vld [vmem:[#allocation2 + $0xb8] sm:$0xff]
  %v108 = vld [vmem:[#allocation2 + $0xc0] sm:$0xff]
  %v109 = vld [vmem:[#allocation2 + $0xc8] sm:$0xff]
  %v110 = vld [vmem:[#allocation2 + $0xd0] sm:$0xff]
  %v111 = vld [vmem:[#allocation2 + $0xd8] sm:$0xff]
  %v112 = vld [vmem:[#allocation2 + $0xe0] sm:$0xff]
  %v113 = vld [vmem:[#allocation2 + $0xe8] sm:$0xff]
  %v114 = vld [vmem:[#allocation2 + $0xf0] sm:$0xff]
  %v115 = vld [vmem:[#allocation2 + $0xf8] sm:$0xff]
  %v116 = vld [vmem:[#allocation2 + $0x100] sm:$0xff]
  %v117 = vld [vmem:[#allocation2 + $0x108] sm:$0xff]
  %v118 = vld [vmem:[#allocation2 + $0x110] sm:$0xff]
  %v119 = vld [vmem:[#allocation2 + $0x118] sm:$0xff]
  %v120 = vld [vmem:[#allocation2 + $0x120] sm:$0xff]
  %v121 = vld [vmem:[#allocation2 + $0x128] sm:$0xff]
  %v122 = vld [vmem:[#allocation2 + $0x130] sm:$0xff]
  %v123 = vld [vmem:[#allocation2 + $0x138] sm:$0xff]
  %v124 = vld [vmem:[#allocation2 + $0x140] sm:$0xff]
  %v125 = vld [vmem:[#allocation2 + $0x148] sm:$0xff]
  %v126 = vld [vmem:[#allocation2 + $0x150] sm:$0xff]
  %v127 = vld [vmem:[#allocation2 + $0x158] sm:$0xff]
  %v128 = vld [vmem:[#allocation2 + $0x160] sm:$0xff]
  %v129 = vld [vmem:[#allocation2 + $0x168] sm:$0xff]
  %v130 = vld [vmem:[#allocation2 + $0x170] sm:$0xff]
  %v131 = vld [vmem:[#allocation2 + $0x178] sm:$0xff]
  %v132 = vld [vmem:[#allocation2 + $0x180] sm:$0xff]
  %v133 = vld [vmem:[#allocation2 + $0x188] sm:$0xff]
  %v134 = vld [vmem:[#allocation2 + $0x190] sm:$0xff]
  %v135 = vld [vmem:[#allocation2 + $0x198] sm:$0xff]
  %v136 = vld [vmem:[#allocation2 + $0x1a0] sm:$0xff]
  %v137 = vld [vmem:[#allocation2 + $0x1a8] sm:$0xff]
  %v138 = vld [vmem:[#allocation2 + $0x1b0] sm:$0xff]
  %v139 = vld [vmem:[#allocation2 + $0x1b8] sm:$0xff]
  %v140 = vld [vmem:[#allocation2 + $0x1c0] sm:$0xff]
  %v141 = vld [vmem:[#allocation2 + $0x1c8] sm:$0xff]
  %v142 = vld [vmem:[#allocation2 + $0x1d0] sm:$0xff]
  %v143 = vld [vmem:[#allocation2 + $0x1d8] sm:$0xff]
  %v144 = vld [vmem:[#allocation2 + $0x1e0] sm:$0xff]
  %v145 = vld [vmem:[#allocation2 + $0x1e8] sm:$0xff]
  %v146 = vld [vmem:[#allocation2 + $0x1f0] sm:$0xff]
  %v147 = vld [vmem:[#allocation2 + $0x1f8] sm:$0xff]
  %v148 = vld [vmem:[%s0] sm:$0xf]
  %v149 = vld [vmem:[%s0 + $0x4] sm:$0xf]
  %v150 = vld [vmem:[%s0 + $0x8] sm:$0xf]
  %v151 = vld [vmem:[%s0 + $0xc] sm:$0xf]
  %v152 = vld [vmem:[%s0 + $0x10] sm:$0xf]
  %v153 = vld [vmem:[%s0 + $0x14] sm:$0xf]
  %v154 = vld [vmem:[%s0 + $0x18] sm:$0xf]
  %v155 = vld [vmem:[%s0 + $0x1c] sm:$0xf]
  %v156 = vld [vmem:[%s0 + $0x20] sm:$0xf]
  %v157 = vld [vmem:[%s0 + $0x24] sm:$0xf]
  %v158 = vld [vmem:[%s0 + $0x28] sm:$0xf]
  %v159 = vld [vmem:[%s0 + $0x2c] sm:$0xf]
  %v160 = vld [vmem:[%s0 + $0x30] sm:$0xf]
  %v161 = vld [vmem:[%s0 + $0x34] sm:$0xf]
  %v162 = vld [vmem:[%s0 + $0x38] sm:$0xf]
  %v163 = vld [vmem:[%s0 + $0x3c] sm:$0xf]
  %v164 = vld [vmem:[%s0 + $0x40] sm:$0xf]
  %v165 = vld [vmem:[%s0 + $0x44] sm:$0xf]
  %v166 = vld [vmem:[%s0 + $0x48] sm:$0xf]
  %v167 = vld [vmem:[%s0 + $0x4c] sm:$0xf]
  %v168 = vld [vmem:[%s0 + $0x50] sm:$0xf]
  %v169 = vld [vmem:[%s0 + $0x54] sm:$0xf]
  %v170 = vld [vmem:[%s0 + $0x58] sm:$0xf]
  %v171 = vld [vmem:[%s0 + $0x5c] sm:$0xf]
  %v172 = vld [vmem:[%s0 + $0x60] sm:$0xf]
  %v173 = vld [vmem:[%s0 + $0x64] sm:$0xf]
  %v174 = vld [vmem:[%s0 + $0x68] sm:$0xf]
  %v175 = vld [vmem:[%s0 + $0x6c] sm:$0xf]
  %v176 = vld [vmem:[%s0 + $0x70] sm:$0xf]
  %v177 = vld [vmem:[%s0 + $0x74] sm:$0xf]
  %v178 = vld [vmem:[%s0 + $0x78] sm:$0xf]
  %v179 = vld [vmem:[%s0 + $0x7c] sm:$0xf]
  %v180 = vld [vmem:[%s0 + $0x80] sm:$0xf]
  %v181 = vld [vmem:[%s0 + $0x84] sm:$0xf]
  %v182 = vld [vmem:[%s0 + $0x88] sm:$0xf]
  %v183 = vld [vmem:[%s0 + $0x8c] sm:$0xf]
  %v184 = vld [vmem:[%s0 + $0x90] sm:$0xf]
  %v185 = vld [vmem:[%s0 + $0x94] sm:$0xf]
  %v186 = vld [vmem:[%s0 + $0x98] sm:$0xf]
  %v187 = vld [vmem:[%s0 + $0x9c] sm:$0xf]
  %v188 = vld [vmem:[%s0 + $0xa0] sm:$0xf]
  %v189 = vld [vmem:[%s0 + $0xa4] sm:$0xf]
  %v190 = vld [vmem:[%s0 + $0xa8] sm:$0xf]
  %v191 = vld [vmem:[%s0 + $0xac] sm:$0xf]
  %v192 = vld [vmem:[%s0 + $0xb0] sm:$0xf]
  %v193 = vld [vmem:[%s0 + $0xb4] sm:$0xf]
  %v194 = vld [vmem:[%s0 + $0xb8] sm:$0xf]
  %v195 = vld [vmem:[%s0 + $0xbc] sm:$0xf]
  %v196 = vld [vmem:[%s0 + $0xc0] sm:$0xf]
  %v197 = vld [vmem:[%s0 + $0xc4] sm:$0xf]
  %v198 = vld [vmem:[%s0 + $0xc8] sm:$0xf]
  %v199 = vld [vmem:[%s0 + $0xcc] sm:$0xf]
  %v200 = vld [vmem:[%s0 + $0xd0] sm:$0xf]
  %v201 = vld [vmem:[%s0 + $0xd4] sm:$0xf]
  %v202 = vld [vmem:[%s0 + $0xd8] sm:$0xf]
  %v203 = vld [vmem:[%s0 + $0xdc] sm:$0xf]
  %v204 = vld [vmem:[%s0 + $0xe0] sm:$0xf]
  %v205 = vld [vmem:[%s0 + $0xe4] sm:$0xf]
  %v206 = vld [vmem:[%s0 + $0xe8] sm:$0xf]
  %v207 = vld [vmem:[%s0 + $0xec] sm:$0xf]
  %v208 = vld [vmem:[%s0 + $0xf0] sm:$0xf]
  %v209 = vld [vmem:[%s0 + $0xf4] sm:$0xf]
  %v210 = vld [vmem:[%s0 + $0xf8] sm:$0xf]
  %v211 = vld [vmem:[%s0 + $0xfc] sm:$0xf]
  %v212 = vld [vmem:[%s1] sm:$0xf]
  %v213 = vld [vmem:[%s1 + $0x4] sm:$0xf]
  %v214 = vld [vmem:[%s1 + $0x8] sm:$0xf]
  %v215 = vld [vmem:[%s1 + $0xc] sm:$0xf]
  %v216 = vld [vmem:[%s1 + $0x10] sm:$0xf]
  %v217 = vld [vmem:[%s1 + $0x14] sm:$0xf]
  %v218 = vld [vmem:[%s1 + $0x18] sm:$0xf]
  %v219 = vld [vmem:[%s1 + $0x1c] sm:$0xf]
  %v284 = vunpack.c.l.b16 %v148
  %v285 = vunpack.c.l.b16 %v149
  %v286 = vunpack.c.l.b16 %v150
  %v287 = vunpack.c.l.b16 %v151
  %v288 = vunpack.c.l.b16 %v152
  %v289 = vunpack.c.l.b16 %v153
  %v290 = vunpack.c.l.b16 %v154
  %v291 = vunpack.c.l.b16 %v155
  %v292 = vunpack.c.l.b16 %v156
  %v293 = vunpack.c.l.b16 %v157
  %v294 = vunpack.c.l.b16 %v158
  %v295 = vunpack.c.l.b16 %v159
  %v296 = vunpack.c.l.b16 %v160
  %v297 = vunpack.c.l.b16 %v161
  %v298 = vunpack.c.l.b16 %v162
  %v299 = vunpack.c.l.b16 %v163
  %v300 = vunpack.c.l.b16 %v164
  %v301 = vunpack.c.l.b16 %v165
  %v302 = vunpack.c.l.b16 %v166
  %v303 = vunpack.c.l.b16 %v167
  %v304 = vunpack.c.l.b16 %v168
  %v305 = vunpack.c.l.b16 %v169
  %v306 = vunpack.c.l.b16 %v170
  %v307 = vunpack.c.l.b16 %v171
  %v308 = vunpack.c.l.b16 %v172
  %v309 = vunpack.c.l.b16 %v173
  %v310 = vunpack.c.l.b16 %v174
  %v311 = vunpack.c.l.b16 %v175
  %v312 = vunpack.c.l.b16 %v176
  %v313 = vunpack.c.l.b16 %v177
  %v314 = vunpack.c.l.b16 %v178
  %v315 = vunpack.c.l.b16 %v179
  %v316 = vunpack.c.l.b16 %v180
  %v317 = vunpack.c.l.b16 %v181
  %v318 = vunpack.c.l.b16 %v182
  %v319 = vunpack.c.l.b16 %v183
  %v320 = vunpack.c.l.b16 %v184
  %v321 = vunpack.c.l.b16 %v185
  %v322 = vunpack.c.l.b16 %v186
  %v323 = vunpack.c.l.b16 %v187
  %v324 = vunpack.c.l.b16 %v188
  %v325 = vunpack.c.l.b16 %v189
  %v326 = vunpack.c.l.b16 %v190
  %v327 = vunpack.c.l.b16 %v191
  %v328 = vunpack.c.l.b16 %v192
  %v329 = vunpack.c.l.b16 %v193
  %v330 = vunpack.c.l.b16 %v194
  %v331 = vunpack.c.l.b16 %v195
  %v332 = vunpack.c.l.b16 %v196
  %v333 = vunpack.c.l.b16 %v197
  %v334 = vunpack.c.l.b16 %v198
  %v335 = vunpack.c.l.b16 %v199
  %v336 = vunpack.c.l.b16 %v200
  %v337 = vunpack.c.l.b16 %v201
  %v338 = vunpack.c.l.b16 %v202
  %v339 = vunpack.c.l.b16 %v203
  %v340 = vunpack.c.l.b16 %v204
  %v341 = vunpack.c.l.b16 %v205
  %v342 = vunpack.c.l.b16 %v206
  %v343 = vunpack.c.l.b16 %v207
  %v344 = vunpack.c.l.b16 %v208
  %v345 = vunpack.c.l.b16 %v209
  %v346 = vunpack.c.l.b16 %v210
  %v347 = vunpack.c.l.b16 %v211
  %v348 = vpack.c.b16 %v285, %v284
  %v349 = vpack.c.b16 %v287, %v286
  %v350 = vpack.c.b16 %v289, %v288
  %v351 = vpack.c.b16 %v291, %v290
  %v352 = vpack.c.b16 %v293, %v292
  %v353 = vpack.c.b16 %v295, %v294
  %v354 = vpack.c.b16 %v297, %v296
  %v355 = vpack.c.b16 %v299, %v298
  %v356 = vpack.c.b16 %v301, %v300
  %v357 = vpack.c.b16 %v303, %v302
  %v358 = vpack.c.b16 %v305, %v304
  %v359 = vpack.c.b16 %v307, %v306
  %v360 = vpack.c.b16 %v309, %v308
  %v361 = vpack.c.b16 %v311, %v310
  %v362 = vpack.c.b16 %v313, %v312
  %v363 = vpack.c.b16 %v315, %v314
  %v364 = vpack.c.b16 %v317, %v316
  %v365 = vpack.c.b16 %v319, %v318
  %v366 = vpack.c.b16 %v321, %v320
  %v367 = vpack.c.b16 %v323, %v322
  %v368 = vpack.c.b16 %v325, %v324
  %v369 = vpack.c.b16 %v327, %v326
  %v370 = vpack.c.b16 %v329, %v328
  %v371 = vpack.c.b16 %v331, %v330
  %v372 = vpack.c.b16 %v333, %v332
  %v373 = vpack.c.b16 %v335, %v334
  %v374 = vpack.c.b16 %v337, %v336
  %v375 = vpack.c.b16 %v339, %v338
  %v376 = vpack.c.b16 %v341, %v340
  %v377 = vpack.c.b16 %v343, %v342
  %v378 = vpack.c.b16 %v345, %v344
  %v379 = vpack.c.b16 %v347, %v346
  %v388 = vunpack.c.l.b16 %v212
  %v389 = vunpack.c.l.b16 %v213
  %v390 = vunpack.c.l.b16 %v214
  %v391 = vunpack.c.l.b16 %v215
  %v392 = vunpack.c.l.b16 %v216
  %v393 = vunpack.c.l.b16 %v217
  %v394 = vunpack.c.l.b16 %v218
  %v395 = vunpack.c.l.b16 %v219
  %v396 = vpack.c.b16 %v389, %v388
  %v397 = vpack.c.b16 %v391, %v390
  %v398 = vpack.c.b16 %v393, %v392
  %v399 = vpack.c.b16 %v395, %v394
  %vm404 = vcmask 523264
  %v406 = vsel %vm404, %v348, 0
  %v409 = vsel %vm404, %v349, 0
  %v412 = vsel %vm404, %v350, 0
  %v415 = vsel %vm404, %v351, 0
  %v418 = vsel %vm404, %v352, 0
  %v421 = vsel %vm404, %v353, 0
  %v424 = vsel %vm404, %v354, 0
  %v427 = vsel %vm404, %v355, 0
  %v430 = vsel %vm404, %v356, 0
  %v433 = vsel %vm404, %v357, 0
  %v436 = vsel %vm404, %v358, 0
  %v439 = vsel %vm404, %v359, 0
  %v442 = vsel %vm404, %v360, 0
  %v445 = vsel %vm404, %v361, 0
  %v448 = vsel %vm404, %v362, 0
  %v451 = vsel %vm404, %v363, 0
  %v454 = vsel %vm404, %v364, 0
  %v457 = vsel %vm404, %v365, 0
  %v460 = vsel %vm404, %v366, 0
  %v463 = vsel %vm404, %v367, 0
  %v466 = vsel %vm404, %v368, 0
  %v469 = vsel %vm404, %v369, 0
  %v472 = vsel %vm404, %v370, 0
  %v475 = vsel %vm404, %v371, 0
  %v478 = vsel %vm404, %v372, 0
  %v481 = vsel %vm404, %v373, 0
  %v484 = vsel %vm404, %v374, 0
  %v487 = vsel %vm404, %v375, 0
  %v490 = vsel %vm404, %v376, 0
  %v493 = vsel %vm404, %v377, 0
  %v496 = vsel %vm404, %v378, 0
  %v499 = vsel %vm404, %v379, 0
  %501 = vmatprep.subr.bf16.mxu0 0
  %502 = vmatpush1.bf16.msra.mxu0 0
  %503 = vmatprep.subr.bf16.mxu0 0
  %504 = vmatpush1.bf16.msra.mxu0 0
  %505 = vmatprep.subr.bf16.mxu0 0
  %506 = vmatpush1.bf16.msra.mxu0 0
  %507 = vmatprep.subr.bf16.mxu0 0
  %508 = vmatpush1.bf16.msra.mxu0 0
  %509 = vmatprep.subr.bf16.mxu0 0
  %510 = vmatpush1.bf16.msra.mxu0 %v399
  %511 = vmatprep.subr.bf16.mxu0 0
  %512 = vmatpush1.bf16.msra.mxu0 %v398
  %513 = vmatprep.subr.bf16.mxu0 0
  %514 = vmatpush1.bf16.msra.mxu0 %v397
  %515 = vmatprep.subr.bf16.mxu0 0
  %516 = vmatpush1.bf16.msra.mxu0 %v396
  %517 = vmatprep.subr.bf16.mxu0 0
  %518 = vmatpush2.bf16.msra.mxu0 0
  %519 = vmatprep.subr.bf16.mxu0 0
  %520 = vmatpush2.bf16.msra.mxu0 0
  %521 = vmatprep.subr.bf16.mxu0 0
  %522 = vmatpush2.bf16.msra.mxu0 0
  %523 = vmatprep.subr.bf16.mxu0 0
  %524 = vmatpush2.bf16.msra.mxu0 0
  %525 = vmatprep.subr.bf16.mxu0 0
  %526 = vmatpush2.bf16.msra.mxu0 0
  %527 = vmatprep.subr.bf16.mxu0 0
  %528 = vmatpush2.bf16.msra.mxu0 0
  %529 = vmatprep.subr.bf16.mxu0 0
  %530 = vmatpush2.bf16.msra.mxu0 0
  %531 = vmatprep.subr.bf16.mxu0 0
  %532 = vmatpush2.bf16.msra.mxu0 0
  %533 = vmatprep.mubr.bf16.mxu0 0
  %534 = vmatmul.mubr.bf16.gmra.mxu0 %v406
  %v535 = vpop.f32.mrf.mxu0
  %v536 = vadd.f32 0.0, %v535
  %v537 = vpop.f32.mrf.mxu0
  %v538 = vpop.f32.mrf.mxu0
  %v539 = vadd.f32 0.0, %v538
  %v540 = vpop.f32.mrf.mxu0
  %541 = vmatprep.mubr.bf16.mxu0 0
  %542 = vmatmul.mubr.bf16.gmra.mxu0 %v409
  %v543 = vpop.f32.mrf.mxu0
  %v544 = vadd.f32 0.0, %v543
  %v545 = vpop.f32.mrf.mxu0
  %v546 = vpop.f32.mrf.mxu0
  %v547 = vadd.f32 0.0, %v546
  %v548 = vpop.f32.mrf.mxu0
  %549 = vmatprep.mubr.bf16.mxu0 0
  %550 = vmatmul.mubr.bf16.gmra.mxu0 %v412
  %v551 = vpop.f32.mrf.mxu0
  %v552 = vadd.f32 0.0, %v551
  %v553 = vpop.f32.mrf.mxu0
  %v554 = vpop.f32.mrf.mxu0
  %v555 = vadd.f32 0.0, %v554
  %v556 = vpop.f32.mrf.mxu0
  %557 = vmatprep.mubr.bf16.mxu0 0
  %558 = vmatmul.mubr.bf16.gmra.mxu0 %v415
  %v559 = vpop.f32.mrf.mxu0
  %v560 = vadd.f32 0.0, %v559
  %v561 = vpop.f32.mrf.mxu0
  %v562 = vpop.f32.mrf.mxu0
  %v563 = vadd.f32 0.0, %v562
  %v564 = vpop.f32.mrf.mxu0
  %565 = vmatprep.mubr.bf16.mxu0 0
  %566 = vmatmul.mubr.bf16.gmra.mxu0 %v418
  %v567 = vpop.f32.mrf.mxu0
  %v568 = vadd.f32 0.0, %v567
  %v569 = vpop.f32.mrf.mxu0
  %v570 = vpop.f32.mrf.mxu0
  %v571 = vadd.f32 0.0, %v570
  %v572 = vpop.f32.mrf.mxu0
  %573 = vmatprep.mubr.bf16.mxu0 0
  %574 = vmatmul.mubr.bf16.gmra.mxu0 %v421
  %v575 = vpop.f32.mrf.mxu0
  %v576 = vadd.f32 0.0, %v575
  %v577 = vpop.f32.mrf.mxu0
  %v578 = vpop.f32.mrf.mxu0
  %v579 = vadd.f32 0.0, %v578
  %v580 = vpop.f32.mrf.mxu0
  %581 = vmatprep.mubr.bf16.mxu0 0
  %582 = vmatmul.mubr.bf16.gmra.mxu0 %v424
  %v583 = vpop.f32.mrf.mxu0
  %v584 = vadd.f32 0.0, %v583
  %v585 = vpop.f32.mrf.mxu0
  %v586 = vpop.f32.mrf.mxu0
  %v587 = vadd.f32 0.0, %v586
  %v588 = vpop.f32.mrf.mxu0
  %589 = vmatprep.mubr.bf16.mxu0 0
  %590 = vmatmul.mubr.bf16.gmra.mxu0 %v427
  %v591 = vpop.f32.mrf.mxu0
  %v592 = vadd.f32 0.0, %v591
  %v593 = vpop.f32.mrf.mxu0
  %v594 = vpop.f32.mrf.mxu0
  %v595 = vadd.f32 0.0, %v594
  %v596 = vpop.f32.mrf.mxu0
  %597 = vmatprep.mubr.bf16.mxu0 0
  %598 = vmatmul.mubr.bf16.gmra.mxu0 %v430
  %v599 = vpop.f32.mrf.mxu0
  %v600 = vadd.f32 0.0, %v599
  %v601 = vpop.f32.mrf.mxu0
  %v602 = vpop.f32.mrf.mxu0
  %v603 = vadd.f32 0.0, %v602
  %v604 = vpop.f32.mrf.mxu0
  %605 = vmatprep.mubr.bf16.mxu0 0
  %606 = vmatmul.mubr.bf16.gmra.mxu0 %v433
  %v607 = vpop.f32.mrf.mxu0
  %v608 = vadd.f32 0.0, %v607
  %v609 = vpop.f32.mrf.mxu0
  %v610 = vpop.f32.mrf.mxu0
  %v611 = vadd.f32 0.0, %v610
  %v612 = vpop.f32.mrf.mxu0
  %613 = vmatprep.mubr.bf16.mxu0 0
  %614 = vmatmul.mubr.bf16.gmra.mxu0 %v436
  %v615 = vpop.f32.mrf.mxu0
  %v616 = vadd.f32 0.0, %v615
  %v617 = vpop.f32.mrf.mxu0
  %v618 = vpop.f32.mrf.mxu0
  %v619 = vadd.f32 0.0, %v618
  %v620 = vpop.f32.mrf.mxu0
  %621 = vmatprep.mubr.bf16.mxu0 0
  %622 = vmatmul.mubr.bf16.gmra.mxu0 %v439
  %v623 = vpop.f32.mrf.mxu0
  %v624 = vadd.f32 0.0, %v623
  %v625 = vpop.f32.mrf.mxu0
  %v626 = vpop.f32.mrf.mxu0
  %v627 = vadd.f32 0.0, %v626
  %v628 = vpop.f32.mrf.mxu0
  %629 = vmatprep.mubr.bf16.mxu0 0
  %630 = vmatmul.mubr.bf16.gmra.mxu0 %v442
  %v631 = vpop.f32.mrf.mxu0
  %v632 = vadd.f32 0.0, %v631
  %v633 = vpop.f32.mrf.mxu0
  %v634 = vpop.f32.mrf.mxu0
  %v635 = vadd.f32 0.0, %v634
  %v636 = vpop.f32.mrf.mxu0
  %637 = vmatprep.mubr.bf16.mxu0 0
  %638 = vmatmul.mubr.bf16.gmra.mxu0 %v445
  %v639 = vpop.f32.mrf.mxu0
  %v640 = vadd.f32 0.0, %v639
  %v641 = vpop.f32.mrf.mxu0
  %v642 = vpop.f32.mrf.mxu0
  %v643 = vadd.f32 0.0, %v642
  %v644 = vpop.f32.mrf.mxu0
  %645 = vmatprep.mubr.bf16.mxu0 0
  %646 = vmatmul.mubr.bf16.gmra.mxu0 %v448
  %v647 = vpop.f32.mrf.mxu0
  %v648 = vadd.f32 0.0, %v647
  %v649 = vpop.f32.mrf.mxu0
  %v650 = vpop.f32.mrf.mxu0
  %v651 = vadd.f32 0.0, %v650
  %v652 = vpop.f32.mrf.mxu0
  %653 = vmatprep.mubr.bf16.mxu0 0
  %654 = vmatmul.mubr.bf16.gmra.mxu0 %v451
  %v655 = vpop.f32.mrf.mxu0
  %v656 = vadd.f32 0.0, %v655
  %v657 = vpop.f32.mrf.mxu0
  %v658 = vpop.f32.mrf.mxu0
  %v659 = vadd.f32 0.0, %v658
  %v660 = vpop.f32.mrf.mxu0
  %661 = vmatprep.mubr.bf16.mxu0 0
  %662 = vmatmul.mubr.bf16.gmra.mxu0 %v454
  %v663 = vpop.f32.mrf.mxu0
  %v664 = vadd.f32 0.0, %v663
  %v665 = vpop.f32.mrf.mxu0
  %v666 = vpop.f32.mrf.mxu0
  %v667 = vadd.f32 0.0, %v666
  %v668 = vpop.f32.mrf.mxu0
  %669 = vmatprep.mubr.bf16.mxu0 0
  %670 = vmatmul.mubr.bf16.gmra.mxu0 %v457
  %v671 = vpop.f32.mrf.mxu0
  %v672 = vadd.f32 0.0, %v671
  %v673 = vpop.f32.mrf.mxu0
  %v674 = vpop.f32.mrf.mxu0
  %v675 = vadd.f32 0.0, %v674
  %v676 = vpop.f32.mrf.mxu0
  %677 = vmatprep.mubr.bf16.mxu0 0
  %678 = vmatmul.mubr.bf16.gmra.mxu0 %v460
  %v679 = vpop.f32.mrf.mxu0
  %v680 = vadd.f32 0.0, %v679
  %v681 = vpop.f32.mrf.mxu0
  %v682 = vpop.f32.mrf.mxu0
  %v683 = vadd.f32 0.0, %v682
  %v684 = vpop.f32.mrf.mxu0
  %685 = vmatprep.mubr.bf16.mxu0 0
  %686 = vmatmul.mubr.bf16.gmra.mxu0 %v463
  %v687 = vpop.f32.mrf.mxu0
  %v688 = vadd.f32 0.0, %v687
  %v689 = vpop.f32.mrf.mxu0
  %v690 = vpop.f32.mrf.mxu0
  %v691 = vadd.f32 0.0, %v690
  %v692 = vpop.f32.mrf.mxu0
  %693 = vmatprep.mubr.bf16.mxu0 0
  %694 = vmatmul.mubr.bf16.gmra.mxu0 %v466
  %v695 = vpop.f32.mrf.mxu0
  %v696 = vadd.f32 0.0, %v695
  %v697 = vpop.f32.mrf.mxu0
  %v698 = vpop.f32.mrf.mxu0
  %v699 = vadd.f32 0.0, %v698
  %v700 = vpop.f32.mrf.mxu0
  %701 = vmatprep.mubr.bf16.mxu0 0
  %702 = vmatmul.mubr.bf16.gmra.mxu0 %v469
  %v703 = vpop.f32.mrf.mxu0
  %v704 = vadd.f32 0.0, %v703
  %v705 = vpop.f32.mrf.mxu0
  %v706 = vpop.f32.mrf.mxu0
  %v707 = vadd.f32 0.0, %v706
  %v708 = vpop.f32.mrf.mxu0
  %709 = vmatprep.mubr.bf16.mxu0 0
  %710 = vmatmul.mubr.bf16.gmra.mxu0 %v472
  %v711 = vpop.f32.mrf.mxu0
  %v712 = vadd.f32 0.0, %v711
  %v713 = vpop.f32.mrf.mxu0
  %v714 = vpop.f32.mrf.mxu0
  %v715 = vadd.f32 0.0, %v714
  %v716 = vpop.f32.mrf.mxu0
  %717 = vmatprep.mubr.bf16.mxu0 0
  %718 = vmatmul.mubr.bf16.gmra.mxu0 %v475
  %v719 = vpop.f32.mrf.mxu0
  %v720 = vadd.f32 0.0, %v719
  %v721 = vpop.f32.mrf.mxu0
  %v722 = vpop.f32.mrf.mxu0
  %v723 = vadd.f32 0.0, %v722
  %v724 = vpop.f32.mrf.mxu0
  %725 = vmatprep.mubr.bf16.mxu0 0
  %726 = vmatmul.mubr.bf16.gmra.mxu0 %v478
  %v727 = vpop.f32.mrf.mxu0
  %v728 = vadd.f32 0.0, %v727
  %v729 = vpop.f32.mrf.mxu0
  %v730 = vpop.f32.mrf.mxu0
  %v731 = vadd.f32 0.0, %v730
  %v732 = vpop.f32.mrf.mxu0
  %733 = vmatprep.mubr.bf16.mxu0 0
  %734 = vmatmul.mubr.bf16.gmra.mxu0 %v481
  %v735 = vpop.f32.mrf.mxu0
  %v736 = vadd.f32 0.0, %v735
  %v737 = vpop.f32.mrf.mxu0
  %v738 = vpop.f32.mrf.mxu0
  %v739 = vadd.f32 0.0, %v738
  %v740 = vpop.f32.mrf.mxu0
  %741 = vmatprep.mubr.bf16.mxu0 0
  %742 = vmatmul.mubr.bf16.gmra.mxu0 %v484
  %v743 = vpop.f32.mrf.mxu0
  %v744 = vadd.f32 0.0, %v743
  %v745 = vpop.f32.mrf.mxu0
  %v746 = vpop.f32.mrf.mxu0
  %v747 = vadd.f32 0.0, %v746
  %v748 = vpop.f32.mrf.mxu0
  %749 = vmatprep.mubr.bf16.mxu0 0
  %750 = vmatmul.mubr.bf16.gmra.mxu0 %v487
  %v751 = vpop.f32.mrf.mxu0
  %v752 = vadd.f32 0.0, %v751
  %v753 = vpop.f32.mrf.mxu0
  %v754 = vpop.f32.mrf.mxu0
  %v755 = vadd.f32 0.0, %v754
  %v756 = vpop.f32.mrf.mxu0
  %757 = vmatprep.mubr.bf16.mxu0 0
  %758 = vmatmul.mubr.bf16.gmra.mxu0 %v490
  %v759 = vpop.f32.mrf.mxu0
  %v760 = vadd.f32 0.0, %v759
  %v761 = vpop.f32.mrf.mxu0
  %v762 = vpop.f32.mrf.mxu0
  %v763 = vadd.f32 0.0, %v762
  %v764 = vpop.f32.mrf.mxu0
  %765 = vmatprep.mubr.bf16.mxu0 0
  %766 = vmatmul.mubr.bf16.gmra.mxu0 %v493
  %v767 = vpop.f32.mrf.mxu0
  %v768 = vadd.f32 0.0, %v767
  %v769 = vpop.f32.mrf.mxu0
  %v770 = vpop.f32.mrf.mxu0
  %v771 = vadd.f32 0.0, %v770
  %v772 = vpop.f32.mrf.mxu0
  %773 = vmatprep.mubr.bf16.mxu0 0
  %774 = vmatmul.mubr.bf16.gmra.mxu0 %v496
  %v775 = vpop.f32.mrf.mxu0
  %v776 = vadd.f32 0.0, %v775
  %v777 = vpop.f32.mrf.mxu0
  %v778 = vpop.f32.mrf.mxu0
  %v779 = vadd.f32 0.0, %v778
  %v780 = vpop.f32.mrf.mxu0
  %781 = vmatprep.mubr.bf16.mxu0 0
  %782 = vmatmul.mubr.bf16.gmra.mxu0 %v499
  %v783 = vpop.f32.mrf.mxu0
  %v784 = vadd.f32 0.0, %v783
  %v785 = vpop.f32.mrf.mxu0
  %v786 = vpop.f32.mrf.mxu0
  %v787 = vadd.f32 0.0, %v786
  %v788 = vpop.f32.mrf.mxu0
  %789 = vdwg.mxu0
  %v790 = vadd.f32 %v84, %v536
  %v791 = vadd.f32 %v85, %v539
  %v792 = vadd.f32 %v86, %v544
  %v793 = vadd.f32 %v87, %v547
  %v794 = vadd.f32 %v88, %v552
  %v795 = vadd.f32 %v89, %v555
  %v796 = vadd.f32 %v90, %v560
  %v797 = vadd.f32 %v91, %v563
  %v798 = vadd.f32 %v92, %v568
  %v799 = vadd.f32 %v93, %v571
  %v800 = vadd.f32 %v94, %v576
  %v801 = vadd.f32 %v95, %v579
  %v802 = vadd.f32 %v96, %v584
  %v803 = vadd.f32 %v97, %v587
  %v804 = vadd.f32 %v98, %v592
  %v805 = vadd.f32 %v99, %v595
  %v806 = vadd.f32 %v100, %v600
  %v807 = vadd.f32 %v101, %v603
  %v808 = vadd.f32 %v102, %v608
  %v809 = vadd.f32 %v103, %v611
  %v810 = vadd.f32 %v104, %v616
  %v811 = vadd.f32 %v105, %v619
  %v812 = vadd.f32 %v106, %v624
  %v813 = vadd.f32 %v107, %v627
  %v814 = vadd.f32 %v108, %v632
  %v815 = vadd.f32 %v109, %v635
  %v816 = vadd.f32 %v110, %v640
  %v817 = vadd.f32 %v111, %v643
  %v818 = vadd.f32 %v112, %v648
  %v819 = vadd.f32 %v113, %v651
  %v820 = vadd.f32 %v114, %v656
  %v821 = vadd.f32 %v115, %v659
  %v822 = vadd.f32 %v116, %v664
  %v823 = vadd.f32 %v117, %v667
  %v824 = vadd.f32 %v118, %v672
  %v825 = vadd.f32 %v119, %v675
  %v826 = vadd.f32 %v120, %v680
  %v827 = vadd.f32 %v121, %v683
  %v828 = vadd.f32 %v122, %v688
  %v829 = vadd.f32 %v123, %v691
  %v830 = vadd.f32 %v124, %v696
  %v831 = vadd.f32 %v125, %v699
  %v832 = vadd.f32 %v126, %v704
  %v833 = vadd.f32 %v127, %v707
  %v834 = vadd.f32 %v128, %v712
  %v835 = vadd.f32 %v129, %v715
  %v836 = vadd.f32 %v130, %v720
  %v837 = vadd.f32 %v131, %v723
  %v838 = vadd.f32 %v132, %v728
  %v839 = vadd.f32 %v133, %v731
  %v840 = vadd.f32 %v134, %v736
  %v841 = vadd.f32 %v135, %v739
  %v842 = vadd.f32 %v136, %v744
  %v843 = vadd.f32 %v137, %v747
  %v844 = vadd.f32 %v138, %v752
  %v845 = vadd.f32 %v139, %v755
  %v846 = vadd.f32 %v140, %v760
  %v847 = vadd.f32 %v141, %v763
  %v848 = vadd.f32 %v142, %v768
  %v849 = vadd.f32 %v143, %v771
  %v850 = vadd.f32 %v144, %v776
  %v851 = vadd.f32 %v145, %v779
  %v852 = vadd.f32 %v146, %v784
  %v853 = vadd.f32 %v147, %v787
  %vm854 = vcmask 261120
  %855 = vst.msk [vmem:[#allocation2] sm:$0xff] %vm854, %v790
  %856 = vst.msk [vmem:[#allocation2 + $0x8] sm:$0xff] %vm854, %v791
  %857 = vst.msk [vmem:[#allocation2 + $0x10] sm:$0xff] %vm854, %v792
  %858 = vst.msk [vmem:[#allocation2 + $0x18] sm:$0xff] %vm854, %v793
  %859 = vst.msk [vmem:[#allocation2 + $0x20] sm:$0xff] %vm854, %v794
  %860 = vst.msk [vmem:[#allocation2 + $0x28] sm:$0xff] %vm854, %v795
  %861 = vst.msk [vmem:[#allocation2 + $0x30] sm:$0xff] %vm854, %v796
  %862 = vst.msk [vmem:[#allocation2 + $0x38] sm:$0xff] %vm854, %v797
  %863 = vst.msk [vmem:[#allocation2 + $0x40] sm:$0xff] %vm854, %v798
  %864 = vst.msk [vmem:[#allocation2 + $0x48] sm:$0xff] %vm854, %v799
  %865 = vst.msk [vmem:[#allocation2 + $0x50] sm:$0xff] %vm854, %v800
  %866 = vst.msk [vmem:[#allocation2 + $0x58] sm:$0xff] %vm854, %v801
  %867 = vst.msk [vmem:[#allocation2 + $0x60] sm:$0xff] %vm854, %v802
  %868 = vst.msk [vmem:[#allocation2 + $0x68] sm:$0xff] %vm854, %v803
  %869 = vst.msk [vmem:[#allocation2 + $0x70] sm:$0xff] %vm854, %v804
  %870 = vst.msk [vmem:[#allocation2 + $0x78] sm:$0xff] %vm854, %v805
  %871 = vst.msk [vmem:[#allocation2 + $0x80] sm:$0xff] %vm854, %v806
  %872 = vst.msk [vmem:[#allocation2 + $0x88] sm:$0xff] %vm854, %v807
  %873 = vst.msk [vmem:[#allocation2 + $0x90] sm:$0xff] %vm854, %v808
  %874 = vst.msk [vmem:[#allocation2 + $0x98] sm:$0xff] %vm854, %v809
  %875 = vst.msk [vmem:[#allocation2 + $0xa0] sm:$0xff] %vm854, %v810
  %876 = vst.msk [vmem:[#allocation2 + $0xa8] sm:$0xff] %vm854, %v811
  %877 = vst.msk [vmem:[#allocation2 + $0xb0] sm:$0xff] %vm854, %v812
  %878 = vst.msk [vmem:[#allocation2 + $0xb8] sm:$0xff] %vm854, %v813
  %879 = vst.msk [vmem:[#allocation2 + $0xc0] sm:$0xff] %vm854, %v814
  %880 = vst.msk [vmem:[#allocation2 + $0xc8] sm:$0xff] %vm854, %v815
  %881 = vst.msk [vmem:[#allocation2 + $0xd0] sm:$0xff] %vm854, %v816
  %882 = vst.msk [vmem:[#allocation2 + $0xd8] sm:$0xff] %vm854, %v817
  %883 = vst.msk [vmem:[#allocation2 + $0xe0] sm:$0xff] %vm854, %v818
  %884 = vst.msk [vmem:[#allocation2 + $0xe8] sm:$0xff] %vm854, %v819
  %885 = vst.msk [vmem:[#allocation2 + $0xf0] sm:$0xff] %vm854, %v820
  %886 = vst.msk [vmem:[#allocation2 + $0xf8] sm:$0xff] %vm854, %v821
  %887 = vst.msk [vmem:[#allocation2 + $0x100] sm:$0xff] %vm854, %v822
  %888 = vst.msk [vmem:[#allocation2 + $0x108] sm:$0xff] %vm854, %v823
  %889 = vst.msk [vmem:[#allocation2 + $0x110] sm:$0xff] %vm854, %v824
  %890 = vst.msk [vmem:[#allocation2 + $0x118] sm:$0xff] %vm854, %v825
  %891 = vst.msk [vmem:[#allocation2 + $0x120] sm:$0xff] %vm854, %v826
  %892 = vst.msk [vmem:[#allocation2 + $0x128] sm:$0xff] %vm854, %v827
  %893 = vst.msk [vmem:[#allocation2 + $0x130] sm:$0xff] %vm854, %v828
  %894 = vst.msk [vmem:[#allocation2 + $0x138] sm:$0xff] %vm854, %v829
  %895 = vst.msk [vmem:[#allocation2 + $0x140] sm:$0xff] %vm854, %v830
  %896 = vst.msk [vmem:[#allocation2 + $0x148] sm:$0xff] %vm854, %v831
  %897 = vst.msk [vmem:[#allocation2 + $0x150] sm:$0xff] %vm854, %v832
  %898 = vst.msk [vmem:[#allocation2 + $0x158] sm:$0xff] %vm854, %v833
  %899 = vst.msk [vmem:[#allocation2 + $0x160] sm:$0xff] %vm854, %v834
  %900 = vst.msk [vmem:[#allocation2 + $0x168] sm:$0xff] %vm854, %v835
  %901 = vst.msk [vmem:[#allocation2 + $0x170] sm:$0xff] %vm854, %v836
  %902 = vst.msk [vmem:[#allocation2 + $0x178] sm:$0xff] %vm854, %v837
  %903 = vst.msk [vmem:[#allocation2 + $0x180] sm:$0xff] %vm854, %v838
  %904 = vst.msk [vmem:[#allocation2 + $0x188] sm:$0xff] %vm854, %v839
  %905 = vst.msk [vmem:[#allocation2 + $0x190] sm:$0xff] %vm854, %v840
  %906 = vst.msk [vmem:[#allocation2 + $0x198] sm:$0xff] %vm854, %v841
  %907 = vst.msk [vmem:[#allocation2 + $0x1a0] sm:$0xff] %vm854, %v842
  %908 = vst.msk [vmem:[#allocation2 + $0x1a8] sm:$0xff] %vm854, %v843
  %909 = vst.msk [vmem:[#allocation2 + $0x1b0] sm:$0xff] %vm854, %v844
  %910 = vst.msk [vmem:[#allocation2 + $0x1b8] sm:$0xff] %vm854, %v845
  %911 = vst.msk [vmem:[#allocation2 + $0x1c0] sm:$0xff] %vm854, %v846
  %912 = vst.msk [vmem:[#allocation2 + $0x1c8] sm:$0xff] %vm854, %v847
  %913 = vst.msk [vmem:[#allocation2 + $0x1d0] sm:$0xff] %vm854, %v848
  %914 = vst.msk [vmem:[#allocation2 + $0x1d8] sm:$0xff] %vm854, %v849
  %915 = vst.msk [vmem:[#allocation2 + $0x1e0] sm:$0xff] %vm854, %v850
  %916 = vst.msk [vmem:[#allocation2 + $0x1e8] sm:$0xff] %vm854, %v851
  %917 = vst.msk [vmem:[#allocation2 + $0x1f0] sm:$0xff] %vm854, %v852
  %918 = vst.msk [vmem:[#allocation2 + $0x1f8] sm:$0xff] %vm854, %v853
  // Predicated region
  $region18: #{bottleneck_forward.4} parent=0 // pred_check
    %p919 = pneg %p15
  $region19: #{bottleneck_forward.4} parent=0 // pred_check_branch
    %921 = sbr.rel (%p919) target = $region21
  $region20: #{bottleneck_forward.4} parent=0 // pred_region
    %v922 = vld [vmem:[#allocation2] sm:$0xff]
    %v923 = vld [vmem:[#allocation2 + $0x8] sm:$0xff]
    %v924 = vld [vmem:[#allocation2 + $0x10] sm:$0xff]
    %v925 = vld [vmem:[#allocation2 + $0x18] sm:$0xff]
    %v926 = vld [vmem:[#allocation2 + $0x20] sm:$0xff]
    %v927 = vld [vmem:[#allocation2 + $0x28] sm:$0xff]
    %v928 = vld [vmem:[#allocation2 + $0x30] sm:$0xff]
    %v929 = vld [vmem:[#allocation2 + $0x38] sm:$0xff]
    %v930 = vld [vmem:[#allocation2 + $0x40] sm:$0xff]
    %v931 = vld [vmem:[#allocation2 + $0x48] sm:$0xff]
    %v932 = vld [vmem:[#allocation2 + $0x50] sm:$0xff]
    %v933 = vld [vmem:[#allocation2 + $0x58] sm:$0xff]
    %v934 = vld [vmem:[#allocation2 + $0x60] sm:$0xff]
    %v935 = vld [vmem:[#allocation2 + $0x68] sm:$0xff]
    %v936 = vld [vmem:[#allocation2 + $0x70] sm:$0xff]
    %v937 = vld [vmem:[#allocation2 + $0x78] sm:$0xff]
    %v938 = vld [vmem:[#allocation2 + $0x80] sm:$0xff]
    %v939 = vld [vmem:[#allocation2 + $0x88] sm:$0xff]
    %v940 = vld [vmem:[#allocation2 + $0x90] sm:$0xff]
    %v941 = vld [vmem:[#allocation2 + $0x98] sm:$0xff]
    %v942 = vld [vmem:[#allocation2 + $0xa0] sm:$0xff]
    %v943 = vld [vmem:[#allocation2 + $0xa8] sm:$0xff]
    %v944 = vld [vmem:[#allocation2 + $0xb0] sm:$0xff]
    %v945 = vld [vmem:[#allocation2 + $0xb8] sm:$0xff]
    %v946 = vld [vmem:[#allocation2 + $0xc0] sm:$0xff]
    %v947 = vld [vmem:[#allocation2 + $0xc8] sm:$0xff]
    %v948 = vld [vmem:[#allocation2 + $0xd0] sm:$0xff]
    %v949 = vld [vmem:[#allocation2 + $0xd8] sm:$0xff]
    %v950 = vld [vmem:[#allocation2 + $0xe0] sm:$0xff]
    %v951 = vld [vmem:[#allocation2 + $0xe8] sm:$0xff]
    %v952 = vld [vmem:[#allocation2 + $0xf0] sm:$0xff]
    %v953 = vld [vmem:[#allocation2 + $0xf8] sm:$0xff]
    %v954 = vld [vmem:[#allocation2 + $0x100] sm:$0xff]
    %v955 = vld [vmem:[#allocation2 + $0x108] sm:$0xff]
    %v956 = vld [vmem:[#allocation2 + $0x110] sm:$0xff]
    %v957 = vld [vmem:[#allocation2 + $0x118] sm:$0xff]
    %v958 = vld [vmem:[#allocation2 + $0x120] sm:$0xff]
    %v959 = vld [vmem:[#allocation2 + $0x128] sm:$0xff]
    %v960 = vld [vmem:[#allocation2 + $0x130] sm:$0xff]
    %v961 = vld [vmem:[#allocation2 + $0x138] sm:$0xff]
    %v962 = vld [vmem:[#allocation2 + $0x140] sm:$0xff]
    %v963 = vld [vmem:[#allocation2 + $0x148] sm:$0xff]
    %v964 = vld [vmem:[#allocation2 + $0x150] sm:$0xff]
    %v965 = vld [vmem:[#allocation2 + $0x158] sm:$0xff]
    %v966 = vld [vmem:[#allocation2 + $0x160] sm:$0xff]
    %v967 = vld [vmem:[#allocation2 + $0x168] sm:$0xff]
    %v968 = vld [vmem:[#allocation2 + $0x170] sm:$0xff]
    %v969 = vld [vmem:[#allocation2 + $0x178] sm:$0xff]
    %v970 = vld [vmem:[#allocation2 + $0x180] sm:$0xff]
    %v971 = vld [vmem:[#allocation2 + $0x188] sm:$0xff]
    %v972 = vld [vmem:[#allocation2 + $0x190] sm:$0xff]
    %v973 = vld [vmem:[#allocation2 + $0x198] sm:$0xff]
    %v974 = vld [vmem:[#allocation2 + $0x1a0] sm:$0xff]
    %v975 = vld [vmem:[#allocation2 + $0x1a8] sm:$0xff]
    %v976 = vld [vmem:[#allocation2 + $0x1b0] sm:$0xff]
    %v977 = vld [vmem:[#allocation2 + $0x1b8] sm:$0xff]
    %v978 = vld [vmem:[#allocation2 + $0x1c0] sm:$0xff]
    %v979 = vld [vmem:[#allocation2 + $0x1c8] sm:$0xff]
    %v980 = vld [vmem:[#allocation2 + $0x1d0] sm:$0xff]
    %v981 = vld [vmem:[#allocation2 + $0x1d8] sm:$0xff]
    %v982 = vld [vmem:[#allocation2 + $0x1e0] sm:$0xff]
    %v983 = vld [vmem:[#allocation2 + $0x1e8] sm:$0xff]
    %v984 = vld [vmem:[#allocation2 + $0x1f0] sm:$0xff]
    %v985 = vld [vmem:[#allocation2 + $0x1f8] sm:$0xff]
    %v986 = vld [vmem:[%s2] sm:$0x1]
    %v988 = vlaneseq
    %v989 = vshrl.u32 %v988, 7
    %v990 = vsub.s32 0, %v989
    %v991 = vrot.slane %v986, %v990
    %v993 = vadd.f32 %v922, %v991
    %v994 = vadd.f32 %v923, %v991
    %v995 = vadd.f32 %v924, %v991
    %v996 = vadd.f32 %v925, %v991
    %v997 = vadd.f32 %v926, %v991
    %v998 = vadd.f32 %v927, %v991
    %v999 = vadd.f32 %v928, %v991
    %v1000 = vadd.f32 %v929, %v991
    %v1001 = vadd.f32 %v930, %v991
    %v1002 = vadd.f32 %v931, %v991
    %v1003 = vadd.f32 %v932, %v991
    %v1004 = vadd.f32 %v933, %v991
    %v1005 = vadd.f32 %v934, %v991
    %v1006 = vadd.f32 %v935, %v991
    %v1007 = vadd.f32 %v936, %v991
    %v1008 = vadd.f32 %v937, %v991
    %v1009 = vadd.f32 %v938, %v991
    %v1010 = vadd.f32 %v939, %v991
    %v1011 = vadd.f32 %v940, %v991
    %v1012 = vadd.f32 %v941, %v991
    %v1013 = vadd.f32 %v942, %v991
    %v1014 = vadd.f32 %v943, %v991
    %v1015 = vadd.f32 %v944, %v991
    %v1016 = vadd.f32 %v945, %v991
    %v1017 = vadd.f32 %v946, %v991
    %v1018 = vadd.f32 %v947, %v991
    %v1019 = vadd.f32 %v948, %v991
    %v1020 = vadd.f32 %v949, %v991
    %v1021 = vadd.f32 %v950, %v991
    %v1022 = vadd.f32 %v951, %v991
    %v1023 = vadd.f32 %v952, %v991
    %v1024 = vadd.f32 %v953, %v991
    %v1025 = vadd.f32 %v954, %v991
    %v1026 = vadd.f32 %v955, %v991
    %v1027 = vadd.f32 %v956, %v991
    %v1028 = vadd.f32 %v957, %v991
    %v1029 = vadd.f32 %v958, %v991
    %v1030 = vadd.f32 %v959, %v991
    %v1031 = vadd.f32 %v960, %v991
    %v1032 = vadd.f32 %v961, %v991
    %v1033 = vadd.f32 %v962, %v991
    %v1034 = vadd.f32 %v963, %v991
    %v1035 = vadd.f32 %v964, %v991
    %v1036 = vadd.f32 %v965, %v991
    %v1037 = vadd.f32 %v966, %v991
    %v1038 = vadd.f32 %v967, %v991
    %v1039 = vadd.f32 %v968, %v991
    %v1040 = vadd.f32 %v969, %v991
    %v1041 = vadd.f32 %v970, %v991
    %v1042 = vadd.f32 %v971, %v991
    %v1043 = vadd.f32 %v972, %v991
    %v1044 = vadd.f32 %v973, %v991
    %v1045 = vadd.f32 %v974, %v991
    %v1046 = vadd.f32 %v975, %v991
    %v1047 = vadd.f32 %v976, %v991
    %v1048 = vadd.f32 %v977, %v991
    %v1049 = vadd.f32 %v978, %v991
    %v1050 = vadd.f32 %v979, %v991
    %v1051 = vadd.f32 %v980, %v991
    %v1052 = vadd.f32 %v981, %v991
    %v1053 = vadd.f32 %v982, %v991
    %v1054 = vadd.f32 %v983, %v991
    %v1055 = vadd.f32 %v984, %v991
    %v1056 = vadd.f32 %v985, %v991
    %v1057 = vmax.f32 %v993, 0.0
    %v1058 = vmax.f32 %v994, 0.0
    %v1059 = vmax.f32 %v995, 0.0
    %v1060 = vmax.f32 %v996, 0.0
    %v1061 = vmax.f32 %v997, 0.0
    %v1062 = vmax.f32 %v998, 0.0
    %v1063 = vmax.f32 %v999, 0.0
    %v1064 = vmax.f32 %v1000, 0.0
    %v1065 = vmax.f32 %v1001, 0.0
    %v1066 = vmax.f32 %v1002, 0.0
    %v1067 = vmax.f32 %v1003, 0.0
    %v1068 = vmax.f32 %v1004, 0.0
    %v1069 = vmax.f32 %v1005, 0.0
    %v1070 = vmax.f32 %v1006, 0.0
    %v1071 = vmax.f32 %v1007, 0.0
    %v1072 = vmax.f32 %v1008, 0.0
    %v1073 = vmax.f32 %v1009, 0.0
    %v1074 = vmax.f32 %v1010, 0.0
    %v1075 = vmax.f32 %v1011, 0.0
    %v1076 = vmax.f32 %v1012, 0.0
    %v1077 = vmax.f32 %v1013, 0.0
    %v1078 = vmax.f32 %v1014, 0.0
    %v1079 = vmax.f32 %v1015, 0.0
    %v1080 = vmax.f32 %v1016, 0.0
    %v1081 = vmax.f32 %v1017, 0.0
    %v1082 = vmax.f32 %v1018, 0.0
    %v1083 = vmax.f32 %v1019, 0.0
    %v1084 = vmax.f32 %v1020, 0.0
    %v1085 = vmax.f32 %v1021, 0.0
    %v1086 = vmax.f32 %v1022, 0.0
    %v1087 = vmax.f32 %v1023, 0.0
    %v1088 = vmax.f32 %v1024, 0.0
    %v1089 = vmax.f32 %v1025, 0.0
    %v1090 = vmax.f32 %v1026, 0.0
    %v1091 = vmax.f32 %v1027, 0.0
    %v1092 = vmax.f32 %v1028, 0.0
    %v1093 = vmax.f32 %v1029, 0.0
    %v1094 = vmax.f32 %v1030, 0.0
    %v1095 = vmax.f32 %v1031, 0.0
    %v1096 = vmax.f32 %v1032, 0.0
    %v1097 = vmax.f32 %v1033, 0.0
    %v1098 = vmax.f32 %v1034, 0.0
    %v1099 = vmax.f32 %v1035, 0.0
    %v1100 = vmax.f32 %v1036, 0.0
    %v1101 = vmax.f32 %v1037, 0.0
    %v1102 = vmax.f32 %v1038, 0.0
    %v1103 = vmax.f32 %v1039, 0.0
    %v1104 = vmax.f32 %v1040, 0.0
    %v1105 = vmax.f32 %v1041, 0.0
    %v1106 = vmax.f32 %v1042, 0.0
    %v1107 = vmax.f32 %v1043, 0.0
    %v1108 = vmax.f32 %v1044, 0.0
    %v1109 = vmax.f32 %v1045, 0.0
    %v1110 = vmax.f32 %v1046, 0.0
    %v1111 = vmax.f32 %v1047, 0.0
    %v1112 = vmax.f32 %v1048, 0.0
    %v1113 = vmax.f32 %v1049, 0.0
    %v1114 = vmax.f32 %v1050, 0.0
    %v1115 = vmax.f32 %v1051, 0.0
    %v1116 = vmax.f32 %v1052, 0.0
    %v1117 = vmax.f32 %v1053, 0.0
    %v1118 = vmax.f32 %v1054, 0.0
    %v1119 = vmax.f32 %v1055, 0.0
    %v1120 = vmax.f32 %v1056, 0.0
    %v1121 = vpack.c.bf16 %v1058, %v1057
    %v1122 = vpack.c.bf16 %v1060, %v1059
    %v1123 = vpack.c.bf16 %v1062, %v1061
    %v1124 = vpack.c.bf16 %v1064, %v1063
    %v1125 = vpack.c.bf16 %v1066, %v1065
    %v1126 = vpack.c.bf16 %v1068, %v1067
    %v1127 = vpack.c.bf16 %v1070, %v1069
    %v1128 = vpack.c.bf16 %v1072, %v1071
    %v1129 = vpack.c.bf16 %v1074, %v1073
    %v1130 = vpack.c.bf16 %v1076, %v1075
    %v1131 = vpack.c.bf16 %v1078, %v1077
    %v1132 = vpack.c.bf16 %v1080, %v1079
    %v1133 = vpack.c.bf16 %v1082, %v1081
    %v1134 = vpack.c.bf16 %v1084, %v1083
    %v1135 = vpack.c.bf16 %v1086, %v1085
    %v1136 = vpack.c.bf16 %v1088, %v1087
    %v1137 = vpack.c.bf16 %v1090, %v1089
    %v1138 = vpack.c.bf16 %v1092, %v1091
    %v1139 = vpack.c.bf16 %v1094, %v1093
    %v1140 = vpack.c.bf16 %v1096, %v1095
    %v1141 = vpack.c.bf16 %v1098, %v1097
    %v1142 = vpack.c.bf16 %v1100, %v1099
    %v1143 = vpack.c.bf16 %v1102, %v1101
    %v1144 = vpack.c.bf16 %v1104, %v1103
    %v1145 = vpack.c.bf16 %v1106, %v1105
    %v1146 = vpack.c.bf16 %v1108, %v1107
    %v1147 = vpack.c.bf16 %v1110, %v1109
    %v1148 = vpack.c.bf16 %v1112, %v1111
    %v1149 = vpack.c.bf16 %v1114, %v1113
    %v1150 = vpack.c.bf16 %v1116, %v1115
    %v1151 = vpack.c.bf16 %v1118, %v1117
    %v1152 = vpack.c.bf16 %v1120, %v1119
    %v1185 = vunpack.c.l.b16 %v1121
    %v1186 = vunpack.c.h.b16 %v1121
    %v1187 = vunpack.c.l.b16 %v1122
    %v1188 = vunpack.c.h.b16 %v1122
    %v1189 = vunpack.c.l.b16 %v1123
    %v1190 = vunpack.c.h.b16 %v1123
    %v1191 = vunpack.c.l.b16 %v1124
    %v1192 = vunpack.c.h.b16 %v1124
    %v1193 = vunpack.c.l.b16 %v1125
    %v1194 = vunpack.c.h.b16 %v1125
    %v1195 = vunpack.c.l.b16 %v1126
    %v1196 = vunpack.c.h.b16 %v1126
    %v1197 = vunpack.c.l.b16 %v1127
    %v1198 = vunpack.c.h.b16 %v1127
    %v1199 = vunpack.c.l.b16 %v1128
    %v1200 = vunpack.c.h.b16 %v1128
    %v1201 = vunpack.c.l.b16 %v1129
    %v1202 = vunpack.c.h.b16 %v1129
    %v1203 = vunpack.c.l.b16 %v1130
    %v1204 = vunpack.c.h.b16 %v1130
    %v1205 = vunpack.c.l.b16 %v1131
    %v1206 = vunpack.c.h.b16 %v1131
    %v1207 = vunpack.c.l.b16 %v1132
    %v1208 = vunpack.c.h.b16 %v1132
    %v1209 = vunpack.c.l.b16 %v1133
    %v1210 = vunpack.c.h.b16 %v1133
    %v1211 = vunpack.c.l.b16 %v1134
    %v1212 = vunpack.c.h.b16 %v1134
    %v1213 = vunpack.c.l.b16 %v1135
    %v1214 = vunpack.c.h.b16 %v1135
    %v1215 = vunpack.c.l.b16 %v1136
    %v1216 = vunpack.c.h.b16 %v1136
    %v1217 = vunpack.c.l.b16 %v1137
    %v1218 = vunpack.c.h.b16 %v1137
    %v1219 = vunpack.c.l.b16 %v1138
    %v1220 = vunpack.c.h.b16 %v1138
    %v1221 = vunpack.c.l.b16 %v1139
    %v1222 = vunpack.c.h.b16 %v1139
    %v1223 = vunpack.c.l.b16 %v1140
    %v1224 = vunpack.c.h.b16 %v1140
    %v1225 = vunpack.c.l.b16 %v1141
    %v1226 = vunpack.c.h.b16 %v1141
    %v1227 = vunpack.c.l.b16 %v1142
    %v1228 = vunpack.c.h.b16 %v1142
    %v1229 = vunpack.c.l.b16 %v1143
    %v1230 = vunpack.c.h.b16 %v1143
    %v1231 = vunpack.c.l.b16 %v1144
    %v1232 = vunpack.c.h.b16 %v1144
    %v1233 = vunpack.c.l.b16 %v1145
    %v1234 = vunpack.c.h.b16 %v1145
    %v1235 = vunpack.c.l.b16 %v1146
    %v1236 = vunpack.c.h.b16 %v1146
    %v1237 = vunpack.c.l.b16 %v1147
    %v1238 = vunpack.c.h.b16 %v1147
    %v1239 = vunpack.c.l.b16 %v1148
    %v1240 = vunpack.c.h.b16 %v1148
    %v1241 = vunpack.c.l.b16 %v1149
    %v1242 = vunpack.c.h.b16 %v1149
    %v1243 = vunpack.c.l.b16 %v1150
    %v1244 = vunpack.c.h.b16 %v1150
    %v1245 = vunpack.c.l.b16 %v1151
    %v1246 = vunpack.c.h.b16 %v1151
    %v1247 = vunpack.c.l.b16 %v1152
    %v1248 = vunpack.c.h.b16 %v1152
    %v1249 = vpack.c.b16 %v1185, %v1185
    %v1250 = vpack.c.b16 %v1186, %v1186
    %v1251 = vpack.c.b16 %v1187, %v1187
    %v1252 = vpack.c.b16 %v1188, %v1188
    %v1253 = vpack.c.b16 %v1189, %v1189
    %v1254 = vpack.c.b16 %v1190, %v1190
    %v1255 = vpack.c.b16 %v1191, %v1191
    %v1256 = vpack.c.b16 %v1192, %v1192
    %v1257 = vpack.c.b16 %v1193, %v1193
    %v1258 = vpack.c.b16 %v1194, %v1194
    %v1259 = vpack.c.b16 %v1195, %v1195
    %v1260 = vpack.c.b16 %v1196, %v1196
    %v1261 = vpack.c.b16 %v1197, %v1197
    %v1262 = vpack.c.b16 %v1198, %v1198
    %v1263 = vpack.c.b16 %v1199, %v1199
    %v1264 = vpack.c.b16 %v1200, %v1200
    %v1265 = vpack.c.b16 %v1201, %v1201
    %v1266 = vpack.c.b16 %v1202, %v1202
    %v1267 = vpack.c.b16 %v1203, %v1203
    %v1268 = vpack.c.b16 %v1204, %v1204
    %v1269 = vpack.c.b16 %v1205, %v1205
    %v1270 = vpack.c.b16 %v1206, %v1206
    %v1271 = vpack.c.b16 %v1207, %v1207
    %v1272 = vpack.c.b16 %v1208, %v1208
    %v1273 = vpack.c.b16 %v1209, %v1209
    %v1274 = vpack.c.b16 %v1210, %v1210
    %v1275 = vpack.c.b16 %v1211, %v1211
    %v1276 = vpack.c.b16 %v1212, %v1212
    %v1277 = vpack.c.b16 %v1213, %v1213
    %v1278 = vpack.c.b16 %v1214, %v1214
    %v1279 = vpack.c.b16 %v1215, %v1215
    %v1280 = vpack.c.b16 %v1216, %v1216
    %v1281 = vpack.c.b16 %v1217, %v1217
    %v1282 = vpack.c.b16 %v1218, %v1218
    %v1283 = vpack.c.b16 %v1219, %v1219
    %v1284 = vpack.c.b16 %v1220, %v1220
    %v1285 = vpack.c.b16 %v1221, %v1221
    %v1286 = vpack.c.b16 %v1222, %v1222
    %v1287 = vpack.c.b16 %v1223, %v1223
    %v1288 = vpack.c.b16 %v1224, %v1224
    %v1289 = vpack.c.b16 %v1225, %v1225
    %v1290 = vpack.c.b16 %v1226, %v1226
    %v1291 = vpack.c.b16 %v1227, %v1227
    %v1292 = vpack.c.b16 %v1228, %v1228
    %v1293 = vpack.c.b16 %v1229, %v1229
    %v1294 = vpack.c.b16 %v1230, %v1230
    %v1295 = vpack.c.b16 %v1231, %v1231
    %v1296 = vpack.c.b16 %v1232, %v1232
    %v1297 = vpack.c.b16 %v1233, %v1233
    %v1298 = vpack.c.b16 %v1234, %v1234
    %v1299 = vpack.c.b16 %v1235, %v1235
    %v1300 = vpack.c.b16 %v1236, %v1236
    %v1301 = vpack.c.b16 %v1237, %v1237
    %v1302 = vpack.c.b16 %v1238, %v1238
    %v1303 = vpack.c.b16 %v1239, %v1239
    %v1304 = vpack.c.b16 %v1240, %v1240
    %v1305 = vpack.c.b16 %v1241, %v1241
    %v1306 = vpack.c.b16 %v1242, %v1242
    %v1307 = vpack.c.b16 %v1243, %v1243
    %v1308 = vpack.c.b16 %v1244, %v1244
    %v1309 = vpack.c.b16 %v1245, %v1245
    %v1310 = vpack.c.b16 %v1246, %v1246
    %v1311 = vpack.c.b16 %v1247, %v1247
    %v1312 = vpack.c.b16 %v1248, %v1248
    %vm1377 = vcmask 257024
    %1378 = vst.msk [vmem:[%s3] sm:$0xf] %vm1377, %v1249
    %1379 = vst.msk [vmem:[%s3 + $0x4] sm:$0xf] %vm1377, %v1250
    %1380 = vst.msk [vmem:[%s3 + $0x8] sm:$0xf] %vm1377, %v1251
    %1381 = vst.msk [vmem:[%s3 + $0xc] sm:$0xf] %vm1377, %v1252
    %1382 = vst.msk [vmem:[%s3 + $0x10] sm:$0xf] %vm1377, %v1253
    %1383 = vst.msk [vmem:[%s3 + $0x14] sm:$0xf] %vm1377, %v1254
    %1384 = vst.msk [vmem:[%s3 + $0x18] sm:$0xf] %vm1377, %v1255
    %1385 = vst.msk [vmem:[%s3 + $0x1c] sm:$0xf] %vm1377, %v1256
    %1386 = vst.msk [vmem:[%s3 + $0x20] sm:$0xf] %vm1377, %v1257
    %1387 = vst.msk [vmem:[%s3 + $0x24] sm:$0xf] %vm1377, %v1258
    %1388 = vst.msk [vmem:[%s3 + $0x28] sm:$0xf] %vm1377, %v1259
    %1389 = vst.msk [vmem:[%s3 + $0x2c] sm:$0xf] %vm1377, %v1260
    %1390 = vst.msk [vmem:[%s3 + $0x30] sm:$0xf] %vm1377, %v1261
    %1391 = vst.msk [vmem:[%s3 + $0x34] sm:$0xf] %vm1377, %v1262
    %1392 = vst.msk [vmem:[%s3 + $0x38] sm:$0xf] %vm1377, %v1263
    %1393 = vst.msk [vmem:[%s3 + $0x3c] sm:$0xf] %vm1377, %v1264
    %1394 = vst.msk [vmem:[%s3 + $0x40] sm:$0xf] %vm1377, %v1265
    %1395 = vst.msk [vmem:[%s3 + $0x44] sm:$0xf] %vm1377, %v1266
    %1396 = vst.msk [vmem:[%s3 + $0x48] sm:$0xf] %vm1377, %v1267
    %1397 = vst.msk [vmem:[%s3 + $0x4c] sm:$0xf] %vm1377, %v1268
    %1398 = vst.msk [vmem:[%s3 + $0x50] sm:$0xf] %vm1377, %v1269
    %1399 = vst.msk [vmem:[%s3 + $0x54] sm:$0xf] %vm1377, %v1270
    %1400 = vst.msk [vmem:[%s3 + $0x58] sm:$0xf] %vm1377, %v1271
    %1401 = vst.msk [vmem:[%s3 + $0x5c] sm:$0xf] %vm1377, %v1272
    %1402 = vst.msk [vmem:[%s3 + $0x60] sm:$0xf] %vm1377, %v1273
    %1403 = vst.msk [vmem:[%s3 + $0x64] sm:$0xf] %vm1377, %v1274
    %1404 = vst.msk [vmem:[%s3 + $0x68] sm:$0xf] %vm1377, %v1275
    %1405 = vst.msk [vmem:[%s3 + $0x6c] sm:$0xf] %vm1377, %v1276
    %1406 = vst.msk [vmem:[%s3 + $0x70] sm:$0xf] %vm1377, %v1277
    %1407 = vst.msk [vmem:[%s3 + $0x74] sm:$0xf] %vm1377, %v1278
    %1408 = vst.msk [vmem:[%s3 + $0x78] sm:$0xf] %vm1377, %v1279
    %1409 = vst.msk [vmem:[%s3 + $0x7c] sm:$0xf] %vm1377, %v1280
    %1410 = vst.msk [vmem:[%s3 + $0x80] sm:$0xf] %vm1377, %v1281
    %1411 = vst.msk [vmem:[%s3 + $0x84] sm:$0xf] %vm1377, %v1282
    %1412 = vst.msk [vmem:[%s3 + $0x88] sm:$0xf] %vm1377, %v1283
    %1413 = vst.msk [vmem:[%s3 + $0x8c] sm:$0xf] %vm1377, %v1284
    %1414 = vst.msk [vmem:[%s3 + $0x90] sm:$0xf] %vm1377, %v1285
    %1415 = vst.msk [vmem:[%s3 + $0x94] sm:$0xf] %vm1377, %v1286
    %1416 = vst.msk [vmem:[%s3 + $0x98] sm:$0xf] %vm1377, %v1287
    %1417 = vst.msk [vmem:[%s3 + $0x9c] sm:$0xf] %vm1377, %v1288
    %1418 = vst.msk [vmem:[%s3 + $0xa0] sm:$0xf] %vm1377, %v1289
    %1419 = vst.msk [vmem:[%s3 + $0xa4] sm:$0xf] %vm1377, %v1290
    %1420 = vst.msk [vmem:[%s3 + $0xa8] sm:$0xf] %vm1377, %v1291
    %1421 = vst.msk [vmem:[%s3 + $0xac] sm:$0xf] %vm1377, %v1292
    %1422 = vst.msk [vmem:[%s3 + $0xb0] sm:$0xf] %vm1377, %v1293
    %1423 = vst.msk [vmem:[%s3 + $0xb4] sm:$0xf] %vm1377, %v1294
    %1424 = vst.msk [vmem:[%s3 + $0xb8] sm:$0xf] %vm1377, %v1295
    %1425 = vst.msk [vmem:[%s3 + $0xbc] sm:$0xf] %vm1377, %v1296
    %1426 = vst.msk [vmem:[%s3 + $0xc0] sm:$0xf] %vm1377, %v1297
    %1427 = vst.msk [vmem:[%s3 + $0xc4] sm:$0xf] %vm1377, %v1298
    %1428 = vst.msk [vmem:[%s3 + $0xc8] sm:$0xf] %vm1377, %v1299
    %1429 = vst.msk [vmem:[%s3 + $0xcc] sm:$0xf] %vm1377, %v1300
    %1430 = vst.msk [vmem:[%s3 + $0xd0] sm:$0xf] %vm1377, %v1301
    %1431 = vst.msk [vmem:[%s3 + $0xd4] sm:$0xf] %vm1377, %v1302
    %1432 = vst.msk [vmem:[%s3 + $0xd8] sm:$0xf] %vm1377, %v1303
    %1433 = vst.msk [vmem:[%s3 + $0xdc] sm:$0xf] %vm1377, %v1304
    %1434 = vst.msk [vmem:[%s3 + $0xe0] sm:$0xf] %vm1377, %v1305
    %1435 = vst.msk [vmem:[%s3 + $0xe4] sm:$0xf] %vm1377, %v1306
    %1436 = vst.msk [vmem:[%s3 + $0xe8] sm:$0xf] %vm1377, %v1307
    %1437 = vst.msk [vmem:[%s3 + $0xec] sm:$0xf] %vm1377, %v1308
    %1438 = vst.msk [vmem:[%s3 + $0xf0] sm:$0xf] %vm1377, %v1309
    %1439 = vst.msk [vmem:[%s3 + $0xf4] sm:$0xf] %vm1377, %v1310
    %1440 = vst.msk [vmem:[%s3 + $0xf8] sm:$0xf] %vm1377, %v1311
    %1441 = vst.msk [vmem:[%s3 + $0xfc] sm:$0xf] %vm1377, %v1312
  $region21: #{bottleneck_forward.4} parent=0 // pred_fallthru
    _
  // Predicated region
  $region22: #{bottleneck_forward.4} parent=0 // pred_check
    _
  $region23: #{bottleneck_forward.4} parent=0 // pred_check_branch
    %1443 = sbr.rel (0) target = $region25
  $region24: #{bottleneck_forward.4} parent=0 // pred_region
    _
  $region25: #{bottleneck_forward.4} parent=0 // pred_fallthru
    _
  // Predicated region
  $region26: #{bottleneck_forward.4} parent=0 // pred_check
    _
  $region27: #{bottleneck_forward.4} parent=0 // pred_check_branch
    %1445 = sbr.rel (0) target = $region29
  $region28: #{bottleneck_forward.4} parent=0 // pred_region
    _
  $region29: #{bottleneck_forward.4} parent=0 // pred_fallthru
    _

// kernel: bottleneck_forward.6
$region0: #{bottleneck_forward.6}
  #allocation0 [shape = 'u32[]', space=smem, size = 0x4, offset = 0x4, fixed_abs, tag = 'smem constant byte address 0x4 - core index']
  #allocation1 [shape = 'u32[144,128]{1,0:T(1,128)}', space=vmem, size = 0x12000, scoped, tag = 'internal scratch']
  #allocation2 [shape = 'f32[128,128]{1,0:T(8,128)}', space=vmem, size = 0x10000, scoped, tag = 'scratch operand']
  %s0 = inlined_call_operand.vmem [shape: bf16[128,64], index: 0, kind: input, shape index: {}]
  %s1 = inlined_call_operand.vmem [shape: bf16[64,128], index: 1, kind: input, shape index: {}]
  %s2 = inlined_call_operand.vmem [shape: f32[1,128], index: 2, kind: input, shape index: {}]
  %s3 = inlined_call_operand.vmem [shape: f32[128,128], index: 3, kind: output, shape index: {}]
  %s4 = sld [smem:[#allocation0]]
  $region30: #{bottleneck_forward.6} parent=0
    _
  %s6 = ssub.s32 1, %s4
  %s7 = scalar_select 0, %s6, %s4
  // Predicated region
  $region2: #{bottleneck_forward.6} parent=0 // pred_check
    _
  $region3: #{bottleneck_forward.6} parent=0 // pred_check_branch
    %9 = sbr.rel (0) target = $region5
  $region4: #{bottleneck_forward.6} parent=0 // pred_region
    _
  $region5: #{bottleneck_forward.6} parent=0 // pred_fallthru
    _
  // Predicated region
  $region6: #{bottleneck_forward.6} parent=0 // pred_check
    _
  $region7: #{bottleneck_forward.6} parent=0 // pred_check_branch
    %11 = sbr.rel (0) target = $region9
  $region8: #{bottleneck_forward.6} parent=0 // pred_region
    _
  $region9: #{bottleneck_forward.6} parent=0 // pred_fallthru
    _
  // Predicated region
  $region10: #{bottleneck_forward.6} parent=0 // pred_check
    _
  $region11: #{bottleneck_forward.6} parent=0 // pred_check_branch
    %13 = sbr.rel (0) target = $region13
  $region12: #{bottleneck_forward.6} parent=0 // pred_region
    _
  $region13: #{bottleneck_forward.6} parent=0 // pred_fallthru
    _
  %p15 = scmp.eq.s32.totalorder 0, 0
  // Predicated region
  $region14: #{bottleneck_forward.6} parent=0 // pred_check
    %p16 = pneg %p15
  $region15: #{bottleneck_forward.6} parent=0 // pred_check_branch
    %18 = sbr.rel (%p16) target = $region17
  $region16: #{bottleneck_forward.6} parent=0 // pred_region
    %19 = vst [vmem:[#allocation2] sm:$0xff] 0.0
    %20 = vst [vmem:[#allocation2 + $0x8] sm:$0xff] 0.0
    %21 = vst [vmem:[#allocation2 + $0x10] sm:$0xff] 0.0
    %22 = vst [vmem:[#allocation2 + $0x18] sm:$0xff] 0.0
    %23 = vst [vmem:[#allocation2 + $0x20] sm:$0xff] 0.0
    %24 = vst [vmem:[#allocation2 + $0x28] sm:$0xff] 0.0
    %25 = vst [vmem:[#allocation2 + $0x30] sm:$0xff] 0.0
    %26 = vst [vmem:[#allocation2 + $0x38] sm:$0xff] 0.0
    %27 = vst [vmem:[#allocation2 + $0x40] sm:$0xff] 0.0
    %28 = vst [vmem:[#allocation2 + $0x48] sm:$0xff] 0.0
    %29 = vst [vmem:[#allocation2 + $0x50] sm:$0xff] 0.0
    %30 = vst [vmem:[#allocation2 + $0x58] sm:$0xff] 0.0
    %31 = vst [vmem:[#allocation2 + $0x60] sm:$0xff] 0.0
    %32 = vst [vmem:[#allocation2 + $0x68] sm:$0xff] 0.0
    %33 = vst [vmem:[#allocation2 + $0x70] sm:$0xff] 0.0
    %34 = vst [vmem:[#allocation2 + $0x78] sm:$0xff] 0.0
  $region17: #{bottleneck_forward.6} parent=0 // pred_fallthru
    _
  %v35 = vld [vmem:[#allocation2] sm:$0xff]
  %v36 = vld [vmem:[#allocation2 + $0x8] sm:$0xff]
  %v37 = vld [vmem:[#allocation2 + $0x10] sm:$0xff]
  %v38 = vld [vmem:[#allocation2 + $0x18] sm:$0xff]
  %v39 = vld [vmem:[#allocation2 + $0x20] sm:$0xff]
  %v40 = vld [vmem:[#allocation2 + $0x28] sm:$0xff]
  %v41 = vld [vmem:[#allocation2 + $0x30] sm:$0xff]
  %v42 = vld [vmem:[#allocation2 + $0x38] sm:$0xff]
  %v43 = vld [vmem:[#allocation2 + $0x40] sm:$0xff]
  %v44 = vld [vmem:[#allocation2 + $0x48] sm:$0xff]
  %v45 = vld [vmem:[#allocation2 + $0x50] sm:$0xff]
  %v46 = vld [vmem:[#allocation2 + $0x58] sm:$0xff]
  %v47 = vld [vmem:[#allocation2 + $0x60] sm:$0xff]
  %v48 = vld [vmem:[#allocation2 + $0x68] sm:$0xff]
  %v49 = vld [vmem:[#allocation2 + $0x70] sm:$0xff]
  %v50 = vld [vmem:[#allocation2 + $0x78] sm:$0xff]
  %v51 = vld [vmem:[%s0] sm:$0xf]
  %v52 = vld [vmem:[%s0 + $0x4] sm:$0xf]
  %v53 = vld [vmem:[%s0 + $0x8] sm:$0xf]
  %v54 = vld [vmem:[%s0 + $0xc] sm:$0xf]
  %v55 = vld [vmem:[%s0 + $0x10] sm:$0xf]
  %v56 = vld [vmem:[%s0 + $0x14] sm:$0xf]
  %v57 = vld [vmem:[%s0 + $0x18] sm:$0xf]
  %v58 = vld [vmem:[%s0 + $0x1c] sm:$0xf]
  %v59 = vld [vmem:[%s0 + $0x20] sm:$0xf]
  %v60 = vld [vmem:[%s0 + $0x24] sm:$0xf]
  %v61 = vld [vmem:[%s0 + $0x28] sm:$0xf]
  %v62 = vld [vmem:[%s0 + $0x2c] sm:$0xf]
  %v63 = vld [vmem:[%s0 + $0x30] sm:$0xf]
  %v64 = vld [vmem:[%s0 + $0x34] sm:$0xf]
  %v65 = vld [vmem:[%s0 + $0x38] sm:$0xf]
  %v66 = vld [vmem:[%s0 + $0x3c] sm:$0xf]
  %v67 = vld [vmem:[%s1] sm:$0xf]
  %v68 = vld [vmem:[%s1 + $0x4] sm:$0xf]
  %v69 = vld [vmem:[%s1 + $0x8] sm:$0xf]
  %v70 = vld [vmem:[%s1 + $0xc] sm:$0xf]
  %v71 = vld [vmem:[%s1 + $0x10] sm:$0xf]
  %v72 = vld [vmem:[%s1 + $0x14] sm:$0xf]
  %v73 = vld [vmem:[%s1 + $0x18] sm:$0xf]
  %v74 = vld [vmem:[%s1 + $0x1c] sm:$0xf]
  %v91 = vunpack.c.l.b16 %v51
  %v92 = vunpack.c.l.b16 %v52
  %v93 = vunpack.c.l.b16 %v53
  %v94 = vunpack.c.l.b16 %v54
  %v95 = vunpack.c.l.b16 %v55
  %v96 = vunpack.c.l.b16 %v56
  %v97 = vunpack.c.l.b16 %v57
  %v98 = vunpack.c.l.b16 %v58
  %v99 = vunpack.c.l.b16 %v59
  %v100 = vunpack.c.l.b16 %v60
  %v101 = vunpack.c.l.b16 %v61
  %v102 = vunpack.c.l.b16 %v62
  %v103 = vunpack.c.l.b16 %v63
  %v104 = vunpack.c.l.b16 %v64
  %v105 = vunpack.c.l.b16 %v65
  %v106 = vunpack.c.l.b16 %v66
  %v107 = vpack.c.b16 %v92, %v91
  %v108 = vpack.c.b16 %v94, %v93
  %v109 = vpack.c.b16 %v96, %v95
  %v110 = vpack.c.b16 %v98, %v97
  %v111 = vpack.c.b16 %v100, %v99
  %v112 = vpack.c.b16 %v102, %v101
  %v113 = vpack.c.b16 %v104, %v103
  %v114 = vpack.c.b16 %v106, %v105
  %v123 = vunpack.c.l.b16 %v67
  %v124 = vunpack.c.l.b16 %v68
  %v125 = vunpack.c.l.b16 %v69
  %v126 = vunpack.c.l.b16 %v70
  %v127 = vunpack.c.l.b16 %v71
  %v128 = vunpack.c.l.b16 %v72
  %v129 = vunpack.c.l.b16 %v73
  %v130 = vunpack.c.l.b16 %v74
  %v131 = vpack.c.b16 %v124, %v123
  %v132 = vpack.c.b16 %v126, %v125
  %v133 = vpack.c.b16 %v128, %v127
  %v134 = vpack.c.b16 %v130, %v129
  %vm139 = vcmask 523264
  %v141 = vsel %vm139, %v107, 0
  %v144 = vsel %vm139, %v108, 0
  %v147 = vsel %vm139, %v109, 0
  %v150 = vsel %vm139, %v110, 0
  %v153 = vsel %vm139, %v111, 0
  %v156 = vsel %vm139, %v112, 0
  %v159 = vsel %vm139, %v113, 0
  %v162 = vsel %vm139, %v114, 0
  %164 = vmatprep.subr.bf16.mxu0 0
  %165 = vmatpush1.bf16.msra.mxu0 0
  %166 = vmatprep.subr.bf16.mxu0 0
  %167 = vmatpush1.bf16.msra.mxu0 0
  %168 = vmatprep.subr.bf16.mxu0 0
  %169 = vmatpush1.bf16.msra.mxu0 0
  %170 = vmatprep.subr.bf16.mxu0 0
  %171 = vmatpush1.bf16.msra.mxu0 0
  %172 = vmatprep.subr.bf16.mxu0 0
  %173 = vmatpush1.bf16.msra.mxu0 %v134
  %174 = vmatprep.subr.bf16.mxu0 0
  %175 = vmatpush1.bf16.msra.mxu0 %v133
  %176 = vmatprep.subr.bf16.mxu0 0
  %177 = vmatpush1.bf16.msra.mxu0 %v132
  %178 = vmatprep.subr.bf16.mxu0 0
  %179 = vmatpush1.bf16.msra.mxu0 %v131
  %180 = vmatprep.subr.bf16.mxu0 0
  %181 = vmatpush2.bf16.msra.mxu0 0
  %182 = vmatprep.subr.bf16.mxu0 0
  %183 = vmatpush2.bf16.msra.mxu0 0
  %184 = vmatprep.subr.bf16.mxu0 0
  %185 = vmatpush2.bf16.msra.mxu0 0
  %186 = vmatprep.subr.bf16.mxu0 0
  %187 = vmatpush2.bf16.msra.mxu0 0
  %188 = vmatprep.subr.bf16.mxu0 0
  %189 = vmatpush2.bf16.msra.mxu0 0
  %190 = vmatprep.subr.bf16.mxu0 0
  %191 = vmatpush2.bf16.msra.mxu0 0
  %192 = vmatprep.subr.bf16.mxu0 0
  %193 = vmatpush2.bf16.msra.mxu0 0
  %194 = vmatprep.subr.bf16.mxu0 0
  %195 = vmatpush2.bf16.msra.mxu0 0
  %196 = vmatprep.mubr.bf16.mxu0 0
  %197 = vmatmul.mubr.bf16.gmra.mxu0 %v141
  %v198 = vpop.f32.mrf.mxu0
  %v199 = vadd.f32 0.0, %v198
  %v200 = vpop.f32.mrf.mxu0
  %v201 = vpop.f32.mrf.mxu0
  %v202 = vadd.f32 0.0, %v201
  %v203 = vpop.f32.mrf.mxu0
  %204 = vmatprep.mubr.bf16.mxu0 0
  %205 = vmatmul.mubr.bf16.gmra.mxu0 %v144
  %v206 = vpop.f32.mrf.mxu0
  %v207 = vadd.f32 0.0, %v206
  %v208 = vpop.f32.mrf.mxu0
  %v209 = vpop.f32.mrf.mxu0
  %v210 = vadd.f32 0.0, %v209
  %v211 = vpop.f32.mrf.mxu0
  %212 = vmatprep.mubr.bf16.mxu0 0
  %213 = vmatmul.mubr.bf16.gmra.mxu0 %v147
  %v214 = vpop.f32.mrf.mxu0
  %v215 = vadd.f32 0.0, %v214
  %v216 = vpop.f32.mrf.mxu0
  %v217 = vpop.f32.mrf.mxu0
  %v218 = vadd.f32 0.0, %v217
  %v219 = vpop.f32.mrf.mxu0
  %220 = vmatprep.mubr.bf16.mxu0 0
  %221 = vmatmul.mubr.bf16.gmra.mxu0 %v150
  %v222 = vpop.f32.mrf.mxu0
  %v223 = vadd.f32 0.0, %v222
  %v224 = vpop.f32.mrf.mxu0
  %v225 = vpop.f32.mrf.mxu0
  %v226 = vadd.f32 0.0, %v225
  %v227 = vpop.f32.mrf.mxu0
  %228 = vmatprep.mubr.bf16.mxu0 0
  %229 = vmatmul.mubr.bf16.gmra.mxu0 %v153
  %v230 = vpop.f32.mrf.mxu0
  %v231 = vadd.f32 0.0, %v230
  %v232 = vpop.f32.mrf.mxu0
  %v233 = vpop.f32.mrf.mxu0
  %v234 = vadd.f32 0.0, %v233
  %v235 = vpop.f32.mrf.mxu0
  %236 = vmatprep.mubr.bf16.mxu0 0
  %237 = vmatmul.mubr.bf16.gmra.mxu0 %v156
  %v238 = vpop.f32.mrf.mxu0
  %v239 = vadd.f32 0.0, %v238
  %v240 = vpop.f32.mrf.mxu0
  %v241 = vpop.f32.mrf.mxu0
  %v242 = vadd.f32 0.0, %v241
  %v243 = vpop.f32.mrf.mxu0
  %244 = vmatprep.mubr.bf16.mxu0 0
  %245 = vmatmul.mubr.bf16.gmra.mxu0 %v159
  %v246 = vpop.f32.mrf.mxu0
  %v247 = vadd.f32 0.0, %v246
  %v248 = vpop.f32.mrf.mxu0
  %v249 = vpop.f32.mrf.mxu0
  %v250 = vadd.f32 0.0, %v249
  %v251 = vpop.f32.mrf.mxu0
  %252 = vmatprep.mubr.bf16.mxu0 0
  %253 = vmatmul.mubr.bf16.gmra.mxu0 %v162
  %v254 = vpop.f32.mrf.mxu0
  %v255 = vadd.f32 0.0, %v254
  %v256 = vpop.f32.mrf.mxu0
  %v257 = vpop.f32.mrf.mxu0
  %v258 = vadd.f32 0.0, %v257
  %v259 = vpop.f32.mrf.mxu0
  %260 = vdwg.mxu0
  %v261 = vadd.f32 %v35, %v199
  %v262 = vadd.f32 %v36, %v202
  %v263 = vadd.f32 %v37, %v207
  %v264 = vadd.f32 %v38, %v210
  %v265 = vadd.f32 %v39, %v215
  %v266 = vadd.f32 %v40, %v218
  %v267 = vadd.f32 %v41, %v223
  %v268 = vadd.f32 %v42, %v226
  %v269 = vadd.f32 %v43, %v231
  %v270 = vadd.f32 %v44, %v234
  %v271 = vadd.f32 %v45, %v239
  %v272 = vadd.f32 %v46, %v242
  %v273 = vadd.f32 %v47, %v247
  %v274 = vadd.f32 %v48, %v250
  %v275 = vadd.f32 %v49, %v255
  %v276 = vadd.f32 %v50, %v258
  %277 = vst [vmem:[#allocation2] sm:$0xff] %v261
  %278 = vst [vmem:[#allocation2 + $0x8] sm:$0xff] %v262
  %279 = vst [vmem:[#allocation2 + $0x10] sm:$0xff] %v263
  %280 = vst [vmem:[#allocation2 + $0x18] sm:$0xff] %v264
  %281 = vst [vmem:[#allocation2 + $0x20] sm:$0xff] %v265
  %282 = vst [vmem:[#allocation2 + $0x28] sm:$0xff] %v266
  %283 = vst [vmem:[#allocation2 + $0x30] sm:$0xff] %v267
  %284 = vst [vmem:[#allocation2 + $0x38] sm:$0xff] %v268
  %285 = vst [vmem:[#allocation2 + $0x40] sm:$0xff] %v269
  %286 = vst [vmem:[#allocation2 + $0x48] sm:$0xff] %v270
  %287 = vst [vmem:[#allocation2 + $0x50] sm:$0xff] %v271
  %288 = vst [vmem:[#allocation2 + $0x58] sm:$0xff] %v272
  %289 = vst [vmem:[#allocation2 + $0x60] sm:$0xff] %v273
  %290 = vst [vmem:[#allocation2 + $0x68] sm:$0xff] %v274
  %291 = vst [vmem:[#allocation2 + $0x70] sm:$0xff] %v275
  %292 = vst [vmem:[#allocation2 + $0x78] sm:$0xff] %v276
  // Predicated region
  $region18: #{bottleneck_forward.6} parent=0 // pred_check
    %p293 = pneg %p15
  $region19: #{bottleneck_forward.6} parent=0 // pred_check_branch
    %295 = sbr.rel (%p293) target = $region21
  $region20: #{bottleneck_forward.6} parent=0 // pred_region
    %v296 = vld [vmem:[#allocation2] sm:$0xff]
    %v297 = vld [vmem:[#allocation2 + $0x8] sm:$0xff]
    %v298 = vld [vmem:[#allocation2 + $0x10] sm:$0xff]
    %v299 = vld [vmem:[#allocation2 + $0x18] sm:$0xff]
    %v300 = vld [vmem:[#allocation2 + $0x20] sm:$0xff]
    %v301 = vld [vmem:[#allocation2 + $0x28] sm:$0xff]
    %v302 = vld [vmem:[#allocation2 + $0x30] sm:$0xff]
    %v303 = vld [vmem:[#allocation2 + $0x38] sm:$0xff]
    %v304 = vld [vmem:[#allocation2 + $0x40] sm:$0xff]
    %v305 = vld [vmem:[#allocation2 + $0x48] sm:$0xff]
    %v306 = vld [vmem:[#allocation2 + $0x50] sm:$0xff]
    %v307 = vld [vmem:[#allocation2 + $0x58] sm:$0xff]
    %v308 = vld [vmem:[#allocation2 + $0x60] sm:$0xff]
    %v309 = vld [vmem:[#allocation2 + $0x68] sm:$0xff]
    %v310 = vld [vmem:[#allocation2 + $0x70] sm:$0xff]
    %v311 = vld [vmem:[#allocation2 + $0x78] sm:$0xff]
    %v312 = vld [vmem:[%s2] sm:$0x1]
    %v314 = vlaneseq
    %v315 = vshrl.u32 %v314, 7
    %v316 = vsub.s32 0, %v315
    %v317 = vrot.slane %v312, %v316
    %v319 = vadd.f32 %v296, %v317
    %v320 = vadd.f32 %v297, %v317
    %v321 = vadd.f32 %v298, %v317
    %v322 = vadd.f32 %v299, %v317
    %v323 = vadd.f32 %v300, %v317
    %v324 = vadd.f32 %v301, %v317
    %v325 = vadd.f32 %v302, %v317
    %v326 = vadd.f32 %v303, %v317
    %v327 = vadd.f32 %v304, %v317
    %v328 = vadd.f32 %v305, %v317
    %v329 = vadd.f32 %v306, %v317
    %v330 = vadd.f32 %v307, %v317
    %v331 = vadd.f32 %v308, %v317
    %v332 = vadd.f32 %v309, %v317
    %v333 = vadd.f32 %v310, %v317
    %v334 = vadd.f32 %v311, %v317
    %335 = vst [vmem:[%s3] sm:$0xff] %v319
    %336 = vst [vmem:[%s3 + $0x8] sm:$0xff] %v320
    %337 = vst [vmem:[%s3 + $0x10] sm:$0xff] %v321
    %338 = vst [vmem:[%s3 + $0x18] sm:$0xff] %v322
    %339 = vst [vmem:[%s3 + $0x20] sm:$0xff] %v323
    %340 = vst [vmem:[%s3 + $0x28] sm:$0xff] %v324
    %341 = vst [vmem:[%s3 + $0x30] sm:$0xff] %v325
    %342 = vst [vmem:[%s3 + $0x38] sm:$0xff] %v326
    %343 = vst [vmem:[%s3 + $0x40] sm:$0xff] %v327
    %344 = vst [vmem:[%s3 + $0x48] sm:$0xff] %v328
    %345 = vst [vmem:[%s3 + $0x50] sm:$0xff] %v329
    %346 = vst [vmem:[%s3 + $0x58] sm:$0xff] %v330
    %347 = vst [vmem:[%s3 + $0x60] sm:$0xff] %v331
    %348 = vst [vmem:[%s3 + $0x68] sm:$0xff] %v332
    %349 = vst [vmem:[%s3 + $0x70] sm:$0xff] %v333
    %350 = vst [vmem:[%s3 + $0x78] sm:$0xff] %v334
  $region21: #{bottleneck_forward.6} parent=0 // pred_fallthru
    _
  // Predicated region
  $region22: #{bottleneck_forward.6} parent=0 // pred_check
    _
  $region23: #{bottleneck_forward.6} parent=0 // pred_check_branch
    %352 = sbr.rel (0) target = $region25
  $region24: #{bottleneck_forward.6} parent=0 // pred_region
    _
  $region25: #{bottleneck_forward.6} parent=0 // pred_fallthru
    _
  // Predicated region
  $region26: #{bottleneck_forward.6} parent=0 // pred_check
    _
  $region27: #{bottleneck_forward.6} parent=0 // pred_check_branch
    %354 = sbr.rel (0) target = $region29
  $region28: #{bottleneck_forward.6} parent=0 // pred_region
    _
  $region29: #{bottleneck_forward.6} parent=0 // pred_fallthru
    _

// kernel: bottleneck_forward.5
$region0: #{bottleneck_forward.5}
  #allocation0 [shape = 'u32[]', space=smem, size = 0x4, offset = 0x4, fixed_abs, tag = 'smem constant byte address 0x4 - core index']
  #allocation1 [shape = 'u32[144,128]{1,0:T(1,128)}', space=vmem, size = 0x12000, scoped, tag = 'internal scratch']
  %s0 = inlined_call_operand.vmem [shape: bf16[2,4,90,32], index: 0, kind: input, shape index: {}]
  %s1 = inlined_call_operand.vmem [shape: bf16[3,3,32,32], index: 1, kind: input, shape index: {}]
  %s2 = inlined_call_operand.vmem [shape: f32[1,32], index: 2, kind: input, shape index: {}]
  %s3 = inlined_call_operand.vmem [shape: bf16[2,72,32], index: 3, kind: output, shape index: {}]
  %s4 = sld [smem:[#allocation0]]
  $region45: #{bottleneck_forward.5} parent=0
    _
  %s6 = ssub.s32 1, %s4
  %s7 = scalar_select 0, %s6, %s4
  loop: start=0, step=1, limit=4
  $region2: #{bottleneck_forward.5} parent=0 // loop_pre_header
    _
  $region3: #{bottleneck_forward.5} parent=0 // loop_header
    %s9 = sphi 0, %s13
    %p10 = scmp.ge.s32.totalorder %s9, 4
    %s19 = sphi 0, %s21
    %s22 = sphi 0, %s19
    %s23 = sphi 0, %s22
    %s39 = sphi 0, %s23
    %s43 = sphi 0, %s43
    %s45 = sphi 0, %s43
    %s46 = sphi 0, %s45
    %s60 = sphi 0, %s46
    %s64 = sphi 0, %s64
    %s66 = sphi 0, %s64
    %s67 = sphi 0, %s66
    %s81 = sphi 0, %s67
    %s87 = sphi 0, %s89
    %s90 = sphi 0, %s87
    %s91 = sphi 0, %s90
    %s107 = sphi 0, %s91
  $region4: #{bottleneck_forward.5} parent=0 // loop_header_branch
    %12 = sbr.rel (%p10) target = $region8
  $region5: #{bottleneck_forward.5} parent=0 // loop_body
    %s14 = ssub.s32 %s9, 1
    %s15 = ssub.s32 %s9, 2
    %s16 = sadd.s32 %s9, 1
    %s17 = ssub.s32 %s9, %s16
    %p18 = scmp.eq.s32.totalorder %s17, 0
    %s20 = sadd.s32 %s19, 1
    %s21 = scalar_select %p18, %s19, %s20
    %p24 = pneg %p18
    %p25 = scmp.eq.s32.totalorder %s9, 1
    %p26 = por %p24, %p25
    %p27 = scmp.ne.s32.totalorder %s19, %s22
    %p28 = scmp.eq.s32.totalorder %s9, 0
    %p29 = por %p27, %p28
    %p30 = scmp.ne.s32.totalorder %s19, %s22
    %p31 = scmp.eq.s32.totalorder %s14, 1
    %p32 = por %p30, %p31
    %p33 = scmp.ne.s32.totalorder %s22, %s23
    %p34 = scmp.eq.s32.totalorder %s14, 0
    %p35 = por %p33, %p34
    %p36 = scmp.ne.s32.totalorder %s22, %s23
    %p37 = scmp.eq.s32.totalorder %s15, 1
    %p38 = por %p36, %p37
    %p40 = scmp.ne.s32.totalorder %s23, %s39
    %p41 = scmp.eq.s32.totalorder %s15, 0
    %p42 = por %p40, %p41
    %s44 = sadd.s32 %s43, 1
    %p47 = scmp.eq.s32.totalorder %s9, 1
    %p48 = scmp.ne.s32.totalorder %s43, %s45
    %p49 = scmp.eq.s32.totalorder %s9, 0
    %p50 = por %p48, %p49
    %p51 = scmp.ne.s32.totalorder %s43, %s45
    %p52 = scmp.eq.s32.totalorder %s14, 1
    %p53 = por %p51, %p52
    %p54 = scmp.ne.s32.totalorder %s45, %s46
    %p55 = scmp.eq.s32.totalorder %s14, 0
    %p56 = por %p54, %p55
    %p57 = scmp.ne.s32.totalorder %s45, %s46
    %p58 = scmp.eq.s32.totalorder %s15, 1
    %p59 = por %p57, %p58
    %p61 = scmp.ne.s32.totalorder %s46, %s60
    %p62 = scmp.eq.s32.totalorder %s15, 0
    %p63 = por %p61, %p62
    %s65 = sadd.s32 %s64, 1
    %p68 = scmp.eq.s32.totalorder %s9, 1
    %p69 = scmp.ne.s32.totalorder %s64, %s66
    %p70 = scmp.eq.s32.totalorder %s9, 0
    %p71 = por %p69, %p70
    %p72 = scmp.ne.s32.totalorder %s64, %s66
    %p73 = scmp.eq.s32.totalorder %s14, 1
    %p74 = por %p72, %p73
    %p75 = scmp.ne.s32.totalorder %s66, %s67
    %p76 = scmp.eq.s32.totalorder %s14, 0
    %p77 = por %p75, %p76
    %p78 = scmp.ne.s32.totalorder %s66, %s67
    %p79 = scmp.eq.s32.totalorder %s15, 1
    %p80 = por %p78, %p79
    %p82 = scmp.ne.s32.totalorder %s67, %s81
    %p83 = scmp.eq.s32.totalorder %s15, 0
    %p84 = por %p82, %p83
    %s85 = ssub.s32 %s9, %s16
    %p86 = scmp.eq.s32.totalorder %s85, 0
    %s88 = sadd.s32 %s87, 1
    %s89 = scalar_select %p86, %s87, %s88
    %p92 = pneg %p86
    %p93 = scmp.eq.s32.totalorder %s9, 1
    %p94 = por %p92, %p93
    %p95 = scmp.ne.s32.totalorder %s87, %s90
    %p96 = scmp.eq.s32.totalorder %s9, 0
    %p97 = por %p95, %p96
    %p98 = scmp.ne.s32.totalorder %s87, %s90
    %p99 = scmp.eq.s32.totalorder %s14, 1
    %p100 = por %p98, %p99
    %p101 = scmp.ne.s32.totalorder %s90, %s91
    %p102 = scmp.eq.s32.totalorder %s14, 0
    %p103 = por %p101, %p102
    %p104 = scmp.ne.s32.totalorder %s90, %s91
    %p105 = scmp.eq.s32.totalorder %s15, 1
    %p106 = por %p104, %p105
    %p108 = scmp.ne.s32.totalorder %s91, %s107
    %p109 = scmp.eq.s32.totalorder %s15, 0
    %p110 = por %p108, %p109
    %p111 = scmp.le.s32.totalorder 1, %s9
    %p112 = scmp.lt.s32.totalorder %s9, 3
    %p113 = pnand %p111, %p112
    %p114 = pneg %p113
    // Predicated region
    $region9: #{bottleneck_forward.5} parent=5 // pred_check
      _
    $region10: #{bottleneck_forward.5} parent=5 // pred_check_branch
      %116 = sbr.rel (%p113) target = $region12
    $region11: #{bottleneck_forward.5} parent=5 // pred_region
      %s117 = ssub.s32 %s9, 1
      // Predicated region
      $region13: #{bottleneck_forward.5} parent=11 // pred_check
        %p118 = pneg %p56
      $region14: #{bottleneck_forward.5} parent=11 // pred_check_branch
        %120 = sbr.rel (%p118) target = $region16
      $region15: #{bottleneck_forward.5} parent=11 // pred_region
        _
      $region16: #{bottleneck_forward.5} parent=11 // pred_fallthru
        _
      // Predicated region
      $region17: #{bottleneck_forward.5} parent=11 // pred_check
        %p121 = pneg %p77
      $region18: #{bottleneck_forward.5} parent=11 // pred_check_branch
        %123 = sbr.rel (%p121) target = $region20
      $region19: #{bottleneck_forward.5} parent=11 // pred_region
        _
      $region20: #{bottleneck_forward.5} parent=11 // pred_fallthru
        _
    $region12: #{bottleneck_forward.5} parent=5 // pred_fallthru
      _
    %p124 = scmp.lt.s32.totalorder %s9, 2
    // Predicated region
    $region21: #{bottleneck_forward.5} parent=5 // pred_check
      %p125 = pneg %p124
    $region22: #{bottleneck_forward.5} parent=5 // pred_check_branch
      %127 = sbr.rel (%p125) target = $region24
    $region23: #{bottleneck_forward.5} parent=5 // pred_region
      // Predicated region
      $region25: #{bottleneck_forward.5} parent=23 // pred_check
        %p128 = pneg %p29
      $region26: #{bottleneck_forward.5} parent=23 // pred_check_branch
        %130 = sbr.rel (%p128) target = $region28
      $region27: #{bottleneck_forward.5} parent=23 // pred_region
        %p131 = scmp.lt.s32.totalorder %s9, 1
        %s132 = scalar_select %p131, %s9, 1
        %s133 = smul.addr %s132, 48
        %s134 = smul.addr %s133, 4
        %s135 = scalar_lea.vmem %s0, %s134
      $region28: #{bottleneck_forward.5} parent=23 // pred_fallthru
        _
    $region24: #{bottleneck_forward.5} parent=5 // pred_fallthru
      _
    %p136 = scmp.le.s32.totalorder 1, %s9
    %p137 = scmp.lt.s32.totalorder %s9, 3
    %p138 = pnand %p136, %p137
    %p139 = pneg %p138
    // Predicated region
    $region29: #{bottleneck_forward.5} parent=5 // pred_check
      _
    $region30: #{bottleneck_forward.5} parent=5 // pred_check_branch
      %141 = sbr.rel (%p138) target = $region32
    $region31: #{bottleneck_forward.5} parent=5 // pred_region
      %s142 = ssub.s32 %s9, 1
      %p143 = scmp.lt.s32.totalorder %s14, 1
      %s144 = scalar_select %p143, %s14, 1
      %s145 = smul.addr %s144, 48
      %s146 = smul.addr %s145, 4
      %s147 = scalar_lea.vmem %s0, %s146
      %p148 = pneg %p35
      %p149 = pneg %p32
      %p150 = pneg %p56
      %p151 = pneg %p53
      %p152 = pneg %p77
      %p153 = pneg %p74
      %p154 = pneg %p103
      %p155 = pneg %p100
      %p156 = scmp.lt.s32.totalorder %s14, 1
      %s157 = scalar_select %p156, %s14, 1
      %s158 = smul.addr %s157, 9
      %s159 = smul.addr %s158, 4
      %s160 = scalar_lea.vmem %s3, %s159
      %p161 = scmp.lt.s32.totalorder %s14, 1
      %s162 = scalar_select %p161, %s14, 1
      %s163 = smul.addr %s162, 48
      %s164 = smul.addr %s163, 4
      %s165 = scalar_lea.vmem %s0, %s164
      %p166 = scmp.lt.s32.totalorder %s14, 1
      %s167 = scalar_select %p166, %s14, 1
      %s168 = smul.addr %s167, 9
      %s169 = smul.addr %s168, 4
      %s170 = scalar_lea.vmem %s3, %s169
      %v172 = vld [vmem:[%s165] sm:$0xf]
      %v173 = vld [vmem:[%s165 + $0x4] sm:$0xf]
      %v174 = vld [vmem:[%s165 + $0x8] sm:$0xf]
      %v175 = vld [vmem:[%s165 + $0xc] sm:$0xf]
      %v176 = vld [vmem:[%s165 + $0x10] sm:$0xf]
      %v177 = vld [vmem:[%s165 + $0x14] sm:$0xf]
      %v178 = vld [vmem:[%s165 + $0x18] sm:$0xf]
      %v179 = vld [vmem:[%s165 + $0x1c] sm:$0xf]
      %v180 = vld [vmem:[%s165 + $0x20] sm:$0xf]
      %v181 = vld [vmem:[%s1] sm:$0xf]
      %v182 = vld [vmem:[%s1 + $0x4] sm:$0xf]
      %v183 = vld [vmem:[%s1 + $0x8] sm:$0xf]
      %v184 = vld [vmem:[%s1 + $0xc] sm:$0xf]
      %s185 = scalar_lea.vmem %s165, 48
      %v186 = vld [vmem:[%s185] sm:$0xf]
      %v187 = vld [vmem:[%s185 + $0x4] sm:$0xf]
      %v188 = vld [vmem:[%s185 + $0x8] sm:$0xf]
      %v189 = vld [vmem:[%s185 + $0xc] sm:$0xf]
      %v190 = vld [vmem:[%s185 + $0x10] sm:$0xf]
      %v191 = vld [vmem:[%s185 + $0x14] sm:$0xf]
      %v192 = vld [vmem:[%s185 + $0x18] sm:$0xf]
      %v193 = vld [vmem:[%s185 + $0x1c] sm:$0xf]
      %v194 = vld [vmem:[%s185 + $0x20] sm:$0xf]
      %s195 = scalar_lea.vmem %s1, 16
      %v196 = vld [vmem:[%s195] sm:$0xf]
      %v197 = vld [vmem:[%s195 + $0x4] sm:$0xf]
      %v198 = vld [vmem:[%s195 + $0x8] sm:$0xf]
      %v199 = vld [vmem:[%s195 + $0xc] sm:$0xf]
      %v209 = vunpack.c.l.b16 %v186
      %v210 = vunpack.c.l.b16 %v187
      %v211 = vunpack.c.l.b16 %v188
      %v212 = vunpack.c.l.b16 %v189
      %v213 = vunpack.c.l.b16 %v190
      %v214 = vunpack.c.l.b16 %v191
      %v215 = vunpack.c.l.b16 %v192
      %v216 = vunpack.c.l.b16 %v193
      %v217 = vunpack.c.l.b16 %v194
      %v218 = vpack.c.b16 %v210, %v209
      %v219 = vpack.c.b16 %v212, %v211
      %v220 = vpack.c.b16 %v214, %v213
      %v221 = vpack.c.b16 %v216, %v215
      %v222 = vpack.c.b16 %v217, %v217
      %v227 = vunpack.c.l.b16 %v196
      %v228 = vunpack.c.l.b16 %v197
      %v229 = vunpack.c.l.b16 %v198
      %v230 = vunpack.c.l.b16 %v199
      %v231 = vpack.c.b16 %v228, %v227
      %v232 = vpack.c.b16 %v230, %v229
      %vm235 = vcmask 261120
      %v237 = vsel %vm235, %v218, 0
      %v240 = vsel %vm235, %v219, 0
      %v243 = vsel %vm235, %v220, 0
      %v246 = vsel %vm235, %v221, 0
      %v249 = vsel %vm235, %v222, 0
      %251 = vmatprep.subr.bf16.mxu0 0
      %252 = vmatpush1.bf16.msra.mxu0 0
      %253 = vmatprep.subr.bf16.mxu0 0
      %254 = vmatpush1.bf16.msra.mxu0 0
      %255 = vmatprep.subr.bf16.mxu0 0
      %256 = vmatpush1.bf16.msra.mxu0 0
      %257 = vmatprep.subr.bf16.mxu0 0
      %258 = vmatpush1.bf16.msra.mxu0 0
      %259 = vmatprep.subr.bf16.mxu0 0
      %260 = vmatpush1.bf16.msra.mxu0 0
      %261 = vmatprep.subr.bf16.mxu0 0
      %262 = vmatpush1.bf16.msra.mxu0 0
      %263 = vmatprep.subr.bf16.mxu0 0
      %264 = vmatpush1.bf16.msra.mxu0 %v232
      %265 = vmatprep.subr.bf16.mxu0 0
      %266 = vmatpush1.bf16.msra.mxu0 %v231
      %267 = vmatprep.subr.bf16.mxu0 0
      %268 = vmatpush2.bf16.msra.mxu0 0
      %269 = vmatprep.subr.bf16.mxu0 0
      %270 = vmatpush2.bf16.msra.mxu0 0
      %271 = vmatprep.subr.bf16.mxu0 0
      %272 = vmatpush2.bf16.msra.mxu0 0
      %273 = vmatprep.subr.bf16.mxu0 0
      %274 = vmatpush2.bf16.msra.mxu0 0
      %275 = vmatprep.subr.bf16.mxu0 0
      %276 = vmatpush2.bf16.msra.mxu0 0
      %277 = vmatprep.subr.bf16.mxu0 0
      %278 = vmatpush2.bf16.msra.mxu0 0
      %279 = vmatprep.subr.bf16.mxu0 0
      %280 = vmatpush2.bf16.msra.mxu0 0
      %281 = vmatprep.subr.bf16.mxu0 0
      %282 = vmatpush2.bf16.msra.mxu0 0
      %283 = vmatprep.mubr.bf16.mxu0 0
      %284 = vmatmul.mubr.bf16.gmra.mxu0 %v237
      %v285 = vpop.f32.mrf.mxu0
      %v286 = vadd.f32 0.0, %v285
      %v287 = vpop.f32.mrf.mxu0
      %v288 = vpop.f32.mrf.mxu0
      %v289 = vadd.f32 0.0, %v288
      %v290 = vpop.f32.mrf.mxu0
      %291 = vmatprep.mubr.bf16.mxu0 0
      %292 = vmatmul.mubr.bf16.gmra.mxu0 %v240
      %v293 = vpop.f32.mrf.mxu0
      %v294 = vadd.f32 0.0, %v293
      %v295 = vpop.f32.mrf.mxu0
      %v296 = vpop.f32.mrf.mxu0
      %v297 = vadd.f32 0.0, %v296
      %v298 = vpop.f32.mrf.mxu0
      %299 = vmatprep.mubr.bf16.mxu0 0
      %300 = vmatmul.mubr.bf16.gmra.mxu0 %v243
      %v301 = vpop.f32.mrf.mxu0
      %v302 = vadd.f32 0.0, %v301
      %v303 = vpop.f32.mrf.mxu0
      %v304 = vpop.f32.mrf.mxu0
      %v305 = vadd.f32 0.0, %v304
      %v306 = vpop.f32.mrf.mxu0
      %307 = vmatprep.mubr.bf16.mxu0 0
      %308 = vmatmul.mubr.bf16.gmra.mxu0 %v246
      %v309 = vpop.f32.mrf.mxu0
      %v310 = vadd.f32 0.0, %v309
      %v311 = vpop.f32.mrf.mxu0
      %v312 = vpop.f32.mrf.mxu0
      %v313 = vadd.f32 0.0, %v312
      %v314 = vpop.f32.mrf.mxu0
      %315 = vmatprep.mubr.bf16.mxu0 0
      %316 = vmatmul.mubr.bf16.gmra.mxu0 %v249
      %v317 = vpop.f32.mrf.mxu0
      %v318 = vadd.f32 0.0, %v317
      %v319 = vpop.f32.mrf.mxu0
      %v320 = vpop.f32.mrf.mxu0
      %v321 = vpop.f32.mrf.mxu0
      %322 = vdwg.mxu0
      %v332 = vunpack.c.l.b16 %v172
      %v333 = vunpack.c.l.b16 %v173
      %v334 = vunpack.c.l.b16 %v174
      %v335 = vunpack.c.l.b16 %v175
      %v336 = vunpack.c.l.b16 %v176
      %v337 = vunpack.c.l.b16 %v177
      %v338 = vunpack.c.l.b16 %v178
      %v339 = vunpack.c.l.b16 %v179
      %v340 = vunpack.c.l.b16 %v180
      %v341 = vpack.c.b16 %v333, %v332
      %v342 = vpack.c.b16 %v335, %v334
      %v343 = vpack.c.b16 %v337, %v336
      %v344 = vpack.c.b16 %v339, %v338
      %v345 = vpack.c.b16 %v340, %v340
      %v350 = vunpack.c.l.b16 %v181
      %v351 = vunpack.c.l.b16 %v182
      %v352 = vunpack.c.l.b16 %v183
      %v353 = vunpack.c.l.b16 %v184
      %v354 = vpack.c.b16 %v351, %v350
      %v355 = vpack.c.b16 %v353, %v352
      %v359 = vsel %vm235, %v341, 0
      %v362 = vsel %vm235, %v342, 0
      %v365 = vsel %vm235, %v343, 0
      %v368 = vsel %vm235, %v344, 0
      %v371 = vsel %vm235, %v345, 0
      %373 = vmatprep.subr.bf16.mxu0 0
      %374 = vmatpush1.bf16.msra.mxu0 0
      %375 = vmatprep.subr.bf16.mxu0 0
      %376 = vmatpush1.bf16.msra.mxu0 0
      %377 = vmatprep.subr.bf16.mxu0 0
      %378 = vmatpush1.bf16.msra.mxu0 0
      %379 = vmatprep.subr.bf16.mxu0 0
      %380 = vmatpush1.bf16.msra.mxu0 0
      %381 = vmatprep.subr.bf16.mxu0 0
      %382 = vmatpush1.bf16.msra.mxu0 0
      %383 = vmatprep.subr.bf16.mxu0 0
      %384 = vmatpush1.bf16.msra.mxu0 0
      %385 = vmatprep.subr.bf16.mxu0 0
      %386 = vmatpush1.bf16.msra.mxu0 %v355
      %387 = vmatprep.subr.bf16.mxu0 0
      %388 = vmatpush1.bf16.msra.mxu0 %v354
      %389 = vmatprep.subr.bf16.mxu0 0
      %390 = vmatpush2.bf16.msra.mxu0 0
      %391 = vmatprep.subr.bf16.mxu0 0
      %392 = vmatpush2.bf16.msra.mxu0 0
      %393 = vmatprep.subr.bf16.mxu0 0
      %394 = vmatpush2.bf16.msra.mxu0 0
      %395 = vmatprep.subr.bf16.mxu0 0
      %396 = vmatpush2.bf16.msra.mxu0 0
      %397 = vmatprep.subr.bf16.mxu0 0
      %398 = vmatpush2.bf16.msra.mxu0 0
      %399 = vmatprep.subr.bf16.mxu0 0
      %400 = vmatpush2.bf16.msra.mxu0 0
      %401 = vmatprep.subr.bf16.mxu0 0
      %402 = vmatpush2.bf16.msra.mxu0 0
      %403 = vmatprep.subr.bf16.mxu0 0
      %404 = vmatpush2.bf16.msra.mxu0 0
      %405 = vmatprep.mubr.bf16.mxu0 0
      %406 = vmatmul.mubr.bf16.gmra.mxu0 %v359
      %v407 = vpop.f32.mrf.mxu0
      %v408 = vadd.f32 %v286, %v407
      %v409 = vpop.f32.mrf.mxu0
      %v410 = vpop.f32.mrf.mxu0
      %v411 = vadd.f32 %v289, %v410
      %v412 = vpop.f32.mrf.mxu0
      %413 = vmatprep.mubr.bf16.mxu0 0
      %414 = vmatmul.mubr.bf16.gmra.mxu0 %v362
      %v415 = vpop.f32.mrf.mxu0
      %v416 = vadd.f32 %v294, %v415
      %v417 = vpop.f32.mrf.mxu0
      %v418 = vpop.f32.mrf.mxu0
      %v419 = vadd.f32 %v297, %v418
      %v420 = vpop.f32.mrf.mxu0
      %421 = vmatprep.mubr.bf16.mxu0 0
      %422 = vmatmul.mubr.bf16.gmra.mxu0 %v365
      %v423 = vpop.f32.mrf.mxu0
      %v424 = vadd.f32 %v302, %v423
      %v425 = vpop.f32.mrf.mxu0
      %v426 = vpop.f32.mrf.mxu0
      %v427 = vadd.f32 %v305, %v426
      %v428 = vpop.f32.mrf.mxu0
      %429 = vmatprep.mubr.bf16.mxu0 0
      %430 = vmatmul.mubr.bf16.gmra.mxu0 %v368
      %v431 = vpop.f32.mrf.mxu0
      %v432 = vadd.f32 %v310, %v431
      %v433 = vpop.f32.mrf.mxu0
      %v434 = vpop.f32.mrf.mxu0
      %v435 = vadd.f32 %v313, %v434
      %v436 = vpop.f32.mrf.mxu0
      %437 = vmatprep.mubr.bf16.mxu0 0
      %438 = vmatmul.mubr.bf16.gmra.mxu0 %v371
      %v439 = vpop.f32.mrf.mxu0
      %v440 = vadd.f32 %v318, %v439
      %v441 = vpop.f32.mrf.mxu0
      %v442 = vpop.f32.mrf.mxu0
      %v443 = vpop.f32.mrf.mxu0
      %444 = vdwg.mxu0
      %v445 = vld [vmem:[%s165] sm:$0xf]
      %v446 = vld [vmem:[%s165 + $0x4] sm:$0xf]
      %v447 = vld [vmem:[%s165 + $0x8] sm:$0xf]
      %v448 = vld [vmem:[%s165 + $0xc] sm:$0xf]
      %v449 = vld [vmem:[%s165 + $0x10] sm:$0xf]
      %v450 = vld [vmem:[%s165 + $0x14] sm:$0xf]
      %v451 = vld [vmem:[%s165 + $0x18] sm:$0xf]
      %v452 = vld [vmem:[%s165 + $0x1c] sm:$0xf]
      %v453 = vld [vmem:[%s165 + $0x20] sm:$0xf]
      %v454 = vld [vmem:[%s165 + $0x24] sm:$0x1]
      %s455 = scalar_lea.vmem %s1, 32
      %v456 = vld [vmem:[%s455] sm:$0xf]
      %v457 = vld [vmem:[%s455 + $0x4] sm:$0xf]
      %v458 = vld [vmem:[%s455 + $0x8] sm:$0xf]
      %v459 = vld [vmem:[%s455 + $0xc] sm:$0xf]
      %v470 = vunpack.c.l.b16 %v445
      %v471 = vunpack.c.l.b16 %v446
      %v472 = vunpack.c.l.b16 %v447
      %v473 = vunpack.c.l.b16 %v448
      %v474 = vunpack.c.l.b16 %v449
      %v475 = vunpack.c.l.b16 %v450
      %v476 = vunpack.c.l.b16 %v451
      %v477 = vunpack.c.l.b16 %v452
      %v478 = vunpack.c.l.b16 %v453
      %v479 = vunpack.c.l.b16 %v454
      %v480 = vpack.c.b16 %v471, %v470
      %v481 = vpack.c.b16 %v473, %v472
      %v482 = vpack.c.b16 %v475, %v474
      %v483 = vpack.c.b16 %v477, %v476
      %v484 = vpack.c.b16 %v479, %v478
      %vm485 = vsmask.f32 7424
      %v487 = vshrl.u32 %v480, 16
      %v489 = vshll.u32 %v480, 16
      %v491 = vrot.slane %v489, 1
      %v492 = vor.u32 %v487, %v491
      %v494 = vshll.u32 %v481, 16
      %v496 = vrot.slane %v494, 1
      %v497 = vsel %vm485, %v492, %v496
      %v498 = vshrl.u32 %v481, 16
      %v500 = vor.u32 %v498, %v496
      %v502 = vshll.u32 %v482, 16
      %v504 = vrot.slane %v502, 1
      %v505 = vsel %vm485, %v500, %v504
      %v506 = vshrl.u32 %v482, 16
      %v508 = vor.u32 %v506, %v504
      %v510 = vshll.u32 %v483, 16
      %v512 = vrot.slane %v510, 1
      %v513 = vsel %vm485, %v508, %v512
      %v514 = vshrl.u32 %v483, 16
      %v516 = vor.u32 %v514, %v512
      %v518 = vshll.u32 %v484, 16
      %v520 = vrot.slane %v518, 1
      %v521 = vsel %vm485, %v516, %v520
      %v522 = vshrl.u32 %v484, 16
      %v524 = vor.u32 %v522, %v520
      %v529 = vunpack.c.l.b16 %v456
      %v530 = vunpack.c.l.b16 %v457
      %v531 = vunpack.c.l.b16 %v458
      %v532 = vunpack.c.l.b16 %v459
      %v533 = vpack.c.b16 %v530, %v529
      %v534 = vpack.c.b16 %v532, %v531
      %v538 = vsel %vm235, %v497, 0
      %v541 = vsel %vm235, %v505, 0
      %v544 = vsel %vm235, %v513, 0
      %v547 = vsel %vm235, %v521, 0
      %v550 = vsel %vm235, %v524, 0
      %552 = vmatprep.subr.bf16.mxu0 0
      %553 = vmatpush1.bf16.msra.mxu0 0
      %554 = vmatprep.subr.bf16.mxu0 0
      %555 = vmatpush1.bf16.msra.mxu0 0
      %556 = vmatprep.subr.bf16.mxu0 0
      %557 = vmatpush1.bf16.msra.mxu0 0
      %558 = vmatprep.subr.bf16.mxu0 0
      %559 = vmatpush1.bf16.msra.mxu0 0
      %560 = vmatprep.subr.bf16.mxu0 0
      %561 = vmatpush1.bf16.msra.mxu0 0
      %562 = vmatprep.subr.bf16.mxu0 0
      %563 = vmatpush1.bf16.msra.mxu0 0
      %564 = vmatprep.subr.bf16.mxu0 0
      %565 = vmatpush1.bf16.msra.mxu0 %v534
      %566 = vmatprep.subr.bf16.mxu0 0
      %567 = vmatpush1.bf16.msra.mxu0 %v533
      %568 = vmatprep.subr.bf16.mxu0 0
      %569 = vmatpush2.bf16.msra.mxu0 0
      %570 = vmatprep.subr.bf16.mxu0 0
      %571 = vmatpush2.bf16.msra.mxu0 0
      %572 = vmatprep.subr.bf16.mxu0 0
      %573 = vmatpush2.bf16.msra.mxu0 0
      %574 = vmatprep.subr.bf16.mxu0 0
      %575 = vmatpush2.bf16.msra.mxu0 0
      %576 = vmatprep.subr.bf16.mxu0 0
      %577 = vmatpush2.bf16.msra.mxu0 0
      %578 = vmatprep.subr.bf16.mxu0 0
      %579 = vmatpush2.bf16.msra.mxu0 0
      %580 = vmatprep.subr.bf16.mxu0 0
      %581 = vmatpush2.bf16.msra.mxu0 0
      %582 = vmatprep.subr.bf16.mxu0 0
      %583 = vmatpush2.bf16.msra.mxu0 0
      %584 = vmatprep.mubr.bf16.mxu0 0
      %585 = vmatmul.mubr.bf16.gmra.mxu0 %v538
      %v586 = vpop.f32.mrf.mxu0
      %v587 = vadd.f32 0.0, %v586
      %v588 = vpop.f32.mrf.mxu0
      %v589 = vpop.f32.mrf.mxu0
      %v590 = vadd.f32 0.0, %v589
      %v591 = vpop.f32.mrf.mxu0
      %592 = vmatprep.mubr.bf16.mxu0 0
      %593 = vmatmul.mubr.bf16.gmra.mxu0 %v541
      %v594 = vpop.f32.mrf.mxu0
      %v595 = vadd.f32 0.0, %v594
      %v596 = vpop.f32.mrf.mxu0
      %v597 = vpop.f32.mrf.mxu0
      %v598 = vadd.f32 0.0, %v597
      %v599 = vpop.f32.mrf.mxu0
      %600 = vmatprep.mubr.bf16.mxu0 0
      %601 = vmatmul.mubr.bf16.gmra.mxu0 %v544
      %v602 = vpop.f32.mrf.mxu0
      %v603 = vadd.f32 0.0, %v602
      %v604 = vpop.f32.mrf.mxu0
      %v605 = vpop.f32.mrf.mxu0
      %v606 = vadd.f32 0.0, %v605
      %v607 = vpop.f32.mrf.mxu0
      %608 = vmatprep.mubr.bf16.mxu0 0
      %609 = vmatmul.mubr.bf16.gmra.mxu0 %v547
      %v610 = vpop.f32.mrf.mxu0
      %v611 = vadd.f32 0.0, %v610
      %v612 = vpop.f32.mrf.mxu0
      %v613 = vpop.f32.mrf.mxu0
      %v614 = vadd.f32 0.0, %v613
      %v615 = vpop.f32.mrf.mxu0
      %616 = vmatprep.mubr.bf16.mxu0 0
      %617 = vmatmul.mubr.bf16.gmra.mxu0 %v550
      %v618 = vpop.f32.mrf.mxu0
      %v619 = vadd.f32 0.0, %v618
      %v620 = vpop.f32.mrf.mxu0
      %v621 = vpop.f32.mrf.mxu0
      %v622 = vpop.f32.mrf.mxu0
      %623 = vdwg.mxu0
      %v624 = vadd.f32 %v408, %v587
      %v625 = vadd.f32 %v411, %v590
      %v626 = vadd.f32 %v416, %v595
      %v627 = vadd.f32 %v419, %v598
      %v628 = vadd.f32 %v424, %v603
      %v629 = vadd.f32 %v427, %v606
      %v630 = vadd.f32 %v432, %v611
      %v631 = vadd.f32 %v435, %v614
      %v632 = vadd.f32 %v440, %v619
      %s633 = scalar_lea.vmem %s165, 96
      %v634 = vld [vmem:[%s633] sm:$0xf]
      %v635 = vld [vmem:[%s633 + $0x4] sm:$0xf]
      %v636 = vld [vmem:[%s633 + $0x8] sm:$0xf]
      %v637 = vld [vmem:[%s633 + $0xc] sm:$0xf]
      %v638 = vld [vmem:[%s633 + $0x10] sm:$0xf]
      %v639 = vld [vmem:[%s633 + $0x14] sm:$0xf]
      %v640 = vld [vmem:[%s633 + $0x18] sm:$0xf]
      %v641 = vld [vmem:[%s633 + $0x1c] sm:$0xf]
      %v642 = vld [vmem:[%s633 + $0x20] sm:$0xf]
      %s643 = scalar_lea.vmem %s1, 48
      %v644 = vld [vmem:[%s643] sm:$0xf]
      %v645 = vld [vmem:[%s643 + $0x4] sm:$0xf]
      %v646 = vld [vmem:[%s643 + $0x8] sm:$0xf]
      %v647 = vld [vmem:[%s643 + $0xc] sm:$0xf]
      %v657 = vunpack.c.l.b16 %v634
      %v658 = vunpack.c.l.b16 %v635
      %v659 = vunpack.c.l.b16 %v636
      %v660 = vunpack.c.l.b16 %v637
      %v661 = vunpack.c.l.b16 %v638
      %v662 = vunpack.c.l.b16 %v639
      %v663 = vunpack.c.l.b16 %v640
      %v664 = vunpack.c.l.b16 %v641
      %v665 = vunpack.c.l.b16 %v642
      %v666 = vpack.c.b16 %v658, %v657
      %v667 = vpack.c.b16 %v660, %v659
      %v668 = vpack.c.b16 %v662, %v661
      %v669 = vpack.c.b16 %v664, %v663
      %v670 = vpack.c.b16 %v665, %v665
      %v675 = vunpack.c.l.b16 %v644
      %v676 = vunpack.c.l.b16 %v645
      %v677 = vunpack.c.l.b16 %v646
      %v678 = vunpack.c.l.b16 %v647
      %v679 = vpack.c.b16 %v676, %v675
      %v680 = vpack.c.b16 %v678, %v677
      %v684 = vsel %vm235, %v666, 0
      %v687 = vsel %vm235, %v667, 0
      %v690 = vsel %vm235, %v668, 0
      %v693 = vsel %vm235, %v669, 0
      %v696 = vsel %vm235, %v670, 0
      %698 = vmatprep.subr.bf16.mxu0 0
      %699 = vmatpush1.bf16.msra.mxu0 0
      %700 = vmatprep.subr.bf16.mxu0 0
      %701 = vmatpush1.bf16.msra.mxu0 0
      %702 = vmatprep.subr.bf16.mxu0 0
      %703 = vmatpush1.bf16.msra.mxu0 0
      %704 = vmatprep.subr.bf16.mxu0 0
      %705 = vmatpush1.bf16.msra.mxu0 0
      %706 = vmatprep.subr.bf16.mxu0 0
      %707 = vmatpush1.bf16.msra.mxu0 0
      %708 = vmatprep.subr.bf16.mxu0 0
      %709 = vmatpush1.bf16.msra.mxu0 0
      %710 = vmatprep.subr.bf16.mxu0 0
      %711 = vmatpush1.bf16.msra.mxu0 %v680
      %712 = vmatprep.subr.bf16.mxu0 0
      %713 = vmatpush1.bf16.msra.mxu0 %v679
      %714 = vmatprep.subr.bf16.mxu0 0
      %715 = vmatpush2.bf16.msra.mxu0 0
      %716 = vmatprep.subr.bf16.mxu0 0
      %717 = vmatpush2.bf16.msra.mxu0 0
      %718 = vmatprep.subr.bf16.mxu0 0
      %719 = vmatpush2.bf16.msra.mxu0 0
      %720 = vmatprep.subr.bf16.mxu0 0
      %721 = vmatpush2.bf16.msra.mxu0 0
      %722 = vmatprep.subr.bf16.mxu0 0
      %723 = vmatpush2.bf16.msra.mxu0 0
      %724 = vmatprep.subr.bf16.mxu0 0
      %725 = vmatpush2.bf16.msra.mxu0 0
      %726 = vmatprep.subr.bf16.mxu0 0
      %727 = vmatpush2.bf16.msra.mxu0 0
      %728 = vmatprep.subr.bf16.mxu0 0
      %729 = vmatpush2.bf16.msra.mxu0 0
      %730 = vmatprep.mubr.bf16.mxu0 0
      %731 = vmatmul.mubr.bf16.gmra.mxu0 %v684
      %v732 = vpop.f32.mrf.mxu0
      %v733 = vadd.f32 0.0, %v732
      %v734 = vpop.f32.mrf.mxu0
      %v735 = vpop.f32.mrf.mxu0
      %v736 = vadd.f32 0.0, %v735
      %v737 = vpop.f32.mrf.mxu0
      %738 = vmatprep.mubr.bf16.mxu0 0
      %739 = vmatmul.mubr.bf16.gmra.mxu0 %v687
      %v740 = vpop.f32.mrf.mxu0
      %v741 = vadd.f32 0.0, %v740
      %v742 = vpop.f32.mrf.mxu0
      %v743 = vpop.f32.mrf.mxu0
      %v744 = vadd.f32 0.0, %v743
      %v745 = vpop.f32.mrf.mxu0
      %746 = vmatprep.mubr.bf16.mxu0 0
      %747 = vmatmul.mubr.bf16.gmra.mxu0 %v690
      %v748 = vpop.f32.mrf.mxu0
      %v749 = vadd.f32 0.0, %v748
      %v750 = vpop.f32.mrf.mxu0
      %v751 = vpop.f32.mrf.mxu0
      %v752 = vadd.f32 0.0, %v751
      %v753 = vpop.f32.mrf.mxu0
      %754 = vmatprep.mubr.bf16.mxu0 0
      %755 = vmatmul.mubr.bf16.gmra.mxu0 %v693
      %v756 = vpop.f32.mrf.mxu0
      %v757 = vadd.f32 0.0, %v756
      %v758 = vpop.f32.mrf.mxu0
      %v759 = vpop.f32.mrf.mxu0
      %v760 = vadd.f32 0.0, %v759
      %v761 = vpop.f32.mrf.mxu0
      %762 = vmatprep.mubr.bf16.mxu0 0
      %763 = vmatmul.mubr.bf16.gmra.mxu0 %v696
      %v764 = vpop.f32.mrf.mxu0
      %v765 = vadd.f32 0.0, %v764
      %v766 = vpop.f32.mrf.mxu0
      %v767 = vpop.f32.mrf.mxu0
      %v768 = vpop.f32.mrf.mxu0
      %769 = vdwg.mxu0
      %v770 = vadd.f32 %v624, %v733
      %v771 = vadd.f32 %v625, %v736
      %v772 = vadd.f32 %v626, %v741
      %v773 = vadd.f32 %v627, %v744
      %v774 = vadd.f32 %v628, %v749
      %v775 = vadd.f32 %v629, %v752
      %v776 = vadd.f32 %v630, %v757
      %v777 = vadd.f32 %v631, %v760
      %v778 = vadd.f32 %v632, %v765
      %s779 = scalar_lea.vmem %s165, 144
      %v780 = vld [vmem:[%s779] sm:$0xf]
      %v781 = vld [vmem:[%s779 + $0x4] sm:$0xf]
      %v782 = vld [vmem:[%s779 + $0x8] sm:$0xf]
      %v783 = vld [vmem:[%s779 + $0xc] sm:$0xf]
      %v784 = vld [vmem:[%s779 + $0x10] sm:$0xf]
      %v785 = vld [vmem:[%s779 + $0x14] sm:$0xf]
      %v786 = vld [vmem:[%s779 + $0x18] sm:$0xf]
      %v787 = vld [vmem:[%s779 + $0x1c] sm:$0xf]
      %v788 = vld [vmem:[%s779 + $0x20] sm:$0xf]
      %s789 = scalar_lea.vmem %s1, 64
      %v790 = vld [vmem:[%s789] sm:$0xf]
      %v791 = vld [vmem:[%s789 + $0x4] sm:$0xf]
      %v792 = vld [vmem:[%s789 + $0x8] sm:$0xf]
      %v793 = vld [vmem:[%s789 + $0xc] sm:$0xf]
      %v803 = vunpack.c.l.b16 %v780
      %v804 = vunpack.c.l.b16 %v781
      %v805 = vunpack.c.l.b16 %v782
      %v806 = vunpack.c.l.b16 %v783
      %v807 = vunpack.c.l.b16 %v784
      %v808 = vunpack.c.l.b16 %v785
      %v809 = vunpack.c.l.b16 %v786
      %v810 = vunpack.c.l.b16 %v787
      %v811 = vunpack.c.l.b16 %v788
      %v812 = vpack.c.b16 %v804, %v803
      %v813 = vpack.c.b16 %v806, %v805
      %v814 = vpack.c.b16 %v808, %v807
      %v815 = vpack.c.b16 %v810, %v809
      %v816 = vpack.c.b16 %v811, %v811
      %v821 = vunpack.c.l.b16 %v790
      %v822 = vunpack.c.l.b16 %v791
      %v823 = vunpack.c.l.b16 %v792
      %v824 = vunpack.c.l.b16 %v793
      %v825 = vpack.c.b16 %v822, %v821
      %v826 = vpack.c.b16 %v824, %v823
      %v830 = vsel %vm235, %v812, 0
      %v833 = vsel %vm235, %v813, 0
      %v836 = vsel %vm235, %v814, 0
      %v839 = vsel %vm235, %v815, 0
      %v842 = vsel %vm235, %v816, 0
      %844 = vmatprep.subr.bf16.mxu0 0
      %845 = vmatpush1.bf16.msra.mxu0 0
      %846 = vmatprep.subr.bf16.mxu0 0
      %847 = vmatpush1.bf16.msra.mxu0 0
      %848 = vmatprep.subr.bf16.mxu0 0
      %849 = vmatpush1.bf16.msra.mxu0 0
      %850 = vmatprep.subr.bf16.mxu0 0
      %851 = vmatpush1.bf16.msra.mxu0 0
      %852 = vmatprep.subr.bf16.mxu0 0
      %853 = vmatpush1.bf16.msra.mxu0 0
      %854 = vmatprep.subr.bf16.mxu0 0
      %855 = vmatpush1.bf16.msra.mxu0 0
      %856 = vmatprep.subr.bf16.mxu0 0
      %857 = vmatpush1.bf16.msra.mxu0 %v826
      %858 = vmatprep.subr.bf16.mxu0 0
      %859 = vmatpush1.bf16.msra.mxu0 %v825
      %860 = vmatprep.subr.bf16.mxu0 0
      %861 = vmatpush2.bf16.msra.mxu0 0
      %862 = vmatprep.subr.bf16.mxu0 0
      %863 = vmatpush2.bf16.msra.mxu0 0
      %864 = vmatprep.subr.bf16.mxu0 0
      %865 = vmatpush2.bf16.msra.mxu0 0
      %866 = vmatprep.subr.bf16.mxu0 0
      %867 = vmatpush2.bf16.msra.mxu0 0
      %868 = vmatprep.subr.bf16.mxu0 0
      %869 = vmatpush2.bf16.msra.mxu0 0
      %870 = vmatprep.subr.bf16.mxu0 0
      %871 = vmatpush2.bf16.msra.mxu0 0
      %872 = vmatprep.subr.bf16.mxu0 0
      %873 = vmatpush2.bf16.msra.mxu0 0
      %874 = vmatprep.subr.bf16.mxu0 0
      %875 = vmatpush2.bf16.msra.mxu0 0
      %876 = vmatprep.mubr.bf16.mxu0 0
      %877 = vmatmul.mubr.bf16.gmra.mxu0 %v830
      %v878 = vpop.f32.mrf.mxu0
      %v879 = vadd.f32 0.0, %v878
      %v880 = vpop.f32.mrf.mxu0
      %v881 = vpop.f32.mrf.mxu0
      %v882 = vadd.f32 0.0, %v881
      %v883 = vpop.f32.mrf.mxu0
      %884 = vmatprep.mubr.bf16.mxu0 0
      %885 = vmatmul.mubr.bf16.gmra.mxu0 %v833
      %v886 = vpop.f32.mrf.mxu0
      %v887 = vadd.f32 0.0, %v886
      %v888 = vpop.f32.mrf.mxu0
      %v889 = vpop.f32.mrf.mxu0
      %v890 = vadd.f32 0.0, %v889
      %v891 = vpop.f32.mrf.mxu0
      %892 = vmatprep.mubr.bf16.mxu0 0
      %893 = vmatmul.mubr.bf16.gmra.mxu0 %v836
      %v894 = vpop.f32.mrf.mxu0
      %v895 = vadd.f32 0.0, %v894
      %v896 = vpop.f32.mrf.mxu0
      %v897 = vpop.f32.mrf.mxu0
      %v898 = vadd.f32 0.0, %v897
      %v899 = vpop.f32.mrf.mxu0
      %900 = vmatprep.mubr.bf16.mxu0 0
      %901 = vmatmul.mubr.bf16.gmra.mxu0 %v839
      %v902 = vpop.f32.mrf.mxu0
      %v903 = vadd.f32 0.0, %v902
      %v904 = vpop.f32.mrf.mxu0
      %v905 = vpop.f32.mrf.mxu0
      %v906 = vadd.f32 0.0, %v905
      %v907 = vpop.f32.mrf.mxu0
      %908 = vmatprep.mubr.bf16.mxu0 0
      %909 = vmatmul.mubr.bf16.gmra.mxu0 %v842
      %v910 = vpop.f32.mrf.mxu0
      %v911 = vadd.f32 0.0, %v910
      %v912 = vpop.f32.mrf.mxu0
      %v913 = vpop.f32.mrf.mxu0
      %v914 = vpop.f32.mrf.mxu0
      %915 = vdwg.mxu0
      %v916 = vadd.f32 %v770, %v879
      %v917 = vadd.f32 %v771, %v882
      %v918 = vadd.f32 %v772, %v887
      %v919 = vadd.f32 %v773, %v890
      %v920 = vadd.f32 %v774, %v895
      %v921 = vadd.f32 %v775, %v898
      %v922 = vadd.f32 %v776, %v903
      %v923 = vadd.f32 %v777, %v906
      %v924 = vadd.f32 %v778, %v911
      %v925 = vld [vmem:[%s633] sm:$0xf]
      %v926 = vld [vmem:[%s633 + $0x4] sm:$0xf]
      %v927 = vld [vmem:[%s633 + $0x8] sm:$0xf]
      %v928 = vld [vmem:[%s633 + $0xc] sm:$0xf]
      %v929 = vld [vmem:[%s633 + $0x10] sm:$0xf]
      %v930 = vld [vmem:[%s633 + $0x14] sm:$0xf]
      %v931 = vld [vmem:[%s633 + $0x18] sm:$0xf]
      %v932 = vld [vmem:[%s633 + $0x1c] sm:$0xf]
      %v933 = vld [vmem:[%s633 + $0x20] sm:$0xf]
      %v934 = vld [vmem:[%s633 + $0x24] sm:$0x1]
      %s935 = scalar_lea.vmem %s1, 80
      %v936 = vld [vmem:[%s935] sm:$0xf]
      %v937 = vld [vmem:[%s935 + $0x4] sm:$0xf]
      %v938 = vld [vmem:[%s935 + $0x8] sm:$0xf]
      %v939 = vld [vmem:[%s935 + $0xc] sm:$0xf]
      %v950 = vunpack.c.l.b16 %v925
      %v951 = vunpack.c.l.b16 %v926
      %v952 = vunpack.c.l.b16 %v927
      %v953 = vunpack.c.l.b16 %v928
      %v954 = vunpack.c.l.b16 %v929
      %v955 = vunpack.c.l.b16 %v930
      %v956 = vunpack.c.l.b16 %v931
      %v957 = vunpack.c.l.b16 %v932
      %v958 = vunpack.c.l.b16 %v933
      %v959 = vunpack.c.l.b16 %v934
      %v960 = vpack.c.b16 %v951, %v950
      %v961 = vpack.c.b16 %v953, %v952
      %v962 = vpack.c.b16 %v955, %v954
      %v963 = vpack.c.b16 %v957, %v956
      %v964 = vpack.c.b16 %v959, %v958
      %v966 = vshrl.u32 %v960, 16
      %v968 = vshll.u32 %v960, 16
      %v970 = vrot.slane %v968, 1
      %v971 = vor.u32 %v966, %v970
      %v973 = vshll.u32 %v961, 16
      %v975 = vrot.slane %v973, 1
      %v976 = vsel %vm485, %v971, %v975
      %v977 = vshrl.u32 %v961, 16
      %v979 = vor.u32 %v977, %v975
      %v981 = vshll.u32 %v962, 16
      %v983 = vrot.slane %v981, 1
      %v984 = vsel %vm485, %v979, %v983
      %v985 = vshrl.u32 %v962, 16
      %v987 = vor.u32 %v985, %v983
      %v989 = vshll.u32 %v963, 16
      %v991 = vrot.slane %v989, 1
      %v992 = vsel %vm485, %v987, %v991
      %v993 = vshrl.u32 %v963, 16
      %v995 = vor.u32 %v993, %v991
      %v997 = vshll.u32 %v964, 16
      %v999 = vrot.slane %v997, 1
      %v1000 = vsel %vm485, %v995, %v999
      %v1001 = vshrl.u32 %v964, 16
      %v1003 = vor.u32 %v1001, %v999
      %v1008 = vunpack.c.l.b16 %v936
      %v1009 = vunpack.c.l.b16 %v937
      %v1010 = vunpack.c.l.b16 %v938
      %v1011 = vunpack.c.l.b16 %v939
      %v1012 = vpack.c.b16 %v1009, %v1008
      %v1013 = vpack.c.b16 %v1011, %v1010
      %v1017 = vsel %vm235, %v976, 0
      %v1020 = vsel %vm235, %v984, 0
      %v1023 = vsel %vm235, %v992, 0
      %v1026 = vsel %vm235, %v1000, 0
      %v1029 = vsel %vm235, %v1003, 0
      %1031 = vmatprep.subr.bf16.mxu0 0
      %1032 = vmatpush1.bf16.msra.mxu0 0
      %1033 = vmatprep.subr.bf16.mxu0 0
      %1034 = vmatpush1.bf16.msra.mxu0 0
      %1035 = vmatprep.subr.bf16.mxu0 0
      %1036 = vmatpush1.bf16.msra.mxu0 0
      %1037 = vmatprep.subr.bf16.mxu0 0
      %1038 = vmatpush1.bf16.msra.mxu0 0
      %1039 = vmatprep.subr.bf16.mxu0 0
      %1040 = vmatpush1.bf16.msra.mxu0 0
      %1041 = vmatprep.subr.bf16.mxu0 0
      %1042 = vmatpush1.bf16.msra.mxu0 0
      %1043 = vmatprep.subr.bf16.mxu0 0
      %1044 = vmatpush1.bf16.msra.mxu0 %v1013
      %1045 = vmatprep.subr.bf16.mxu0 0
      %1046 = vmatpush1.bf16.msra.mxu0 %v1012
      %1047 = vmatprep.subr.bf16.mxu0 0
      %1048 = vmatpush2.bf16.msra.mxu0 0
      %1049 = vmatprep.subr.bf16.mxu0 0
      %1050 = vmatpush2.bf16.msra.mxu0 0
      %1051 = vmatprep.subr.bf16.mxu0 0
      %1052 = vmatpush2.bf16.msra.mxu0 0
      %1053 = vmatprep.subr.bf16.mxu0 0
      %1054 = vmatpush2.bf16.msra.mxu0 0
      %1055 = vmatprep.subr.bf16.mxu0 0
      %1056 = vmatpush2.bf16.msra.mxu0 0
      %1057 = vmatprep.subr.bf16.mxu0 0
      %1058 = vmatpush2.bf16.msra.mxu0 0
      %1059 = vmatprep.subr.bf16.mxu0 0
      %1060 = vmatpush2.bf16.msra.mxu0 0
      %1061 = vmatprep.subr.bf16.mxu0 0
      %1062 = vmatpush2.bf16.msra.mxu0 0
      %1063 = vmatprep.mubr.bf16.mxu0 0
      %1064 = vmatmul.mubr.bf16.gmra.mxu0 %v1017
      %v1065 = vpop.f32.mrf.mxu0
      %v1066 = vadd.f32 0.0, %v1065
      %v1067 = vpop.f32.mrf.mxu0
      %v1068 = vpop.f32.mrf.mxu0
      %v1069 = vadd.f32 0.0, %v1068
      %v1070 = vpop.f32.mrf.mxu0
      %1071 = vmatprep.mubr.bf16.mxu0 0
      %1072 = vmatmul.mubr.bf16.gmra.mxu0 %v1020
      %v1073 = vpop.f32.mrf.mxu0
      %v1074 = vadd.f32 0.0, %v1073
      %v1075 = vpop.f32.mrf.mxu0
      %v1076 = vpop.f32.mrf.mxu0
      %v1077 = vadd.f32 0.0, %v1076
      %v1078 = vpop.f32.mrf.mxu0
      %1079 = vmatprep.mubr.bf16.mxu0 0
      %1080 = vmatmul.mubr.bf16.gmra.mxu0 %v1023
      %v1081 = vpop.f32.mrf.mxu0
      %v1082 = vadd.f32 0.0, %v1081
      %v1083 = vpop.f32.mrf.mxu0
      %v1084 = vpop.f32.mrf.mxu0
      %v1085 = vadd.f32 0.0, %v1084
      %v1086 = vpop.f32.mrf.mxu0
      %1087 = vmatprep.mubr.bf16.mxu0 0
      %1088 = vmatmul.mubr.bf16.gmra.mxu0 %v1026
      %v1089 = vpop.f32.mrf.mxu0
      %v1090 = vadd.f32 0.0, %v1089
      %v1091 = vpop.f32.mrf.mxu0
      %v1092 = vpop.f32.mrf.mxu0
      %v1093 = vadd.f32 0.0, %v1092
      %v1094 = vpop.f32.mrf.mxu0
      %1095 = vmatprep.mubr.bf16.mxu0 0
      %1096 = vmatmul.mubr.bf16.gmra.mxu0 %v1029
      %v1097 = vpop.f32.mrf.mxu0
      %v1098 = vadd.f32 0.0, %v1097
      %v1099 = vpop.f32.mrf.mxu0
      %v1100 = vpop.f32.mrf.mxu0
      %v1101 = vpop.f32.mrf.mxu0
      %1102 = vdwg.mxu0
      %v1103 = vadd.f32 %v916, %v1066
      %v1104 = vadd.f32 %v917, %v1069
      %v1105 = vadd.f32 %v918, %v1074
      %v1106 = vadd.f32 %v919, %v1077
      %v1107 = vadd.f32 %v920, %v1082
      %v1108 = vadd.f32 %v921, %v1085
      %v1109 = vadd.f32 %v922, %v1090
      %v1110 = vadd.f32 %v923, %v1093
      %v1111 = vadd.f32 %v924, %v1098
      %v1112 = vld [vmem:[%s165 + $0x4] sm:$0xf]
      %v1113 = vld [vmem:[%s165 + $0x8] sm:$0xf]
      %v1114 = vld [vmem:[%s165 + $0xc] sm:$0xf]
      %v1115 = vld [vmem:[%s165 + $0x10] sm:$0xf]
      %v1116 = vld [vmem:[%s165 + $0x14] sm:$0xf]
      %v1117 = vld [vmem:[%s165 + $0x18] sm:$0xf]
      %v1118 = vld [vmem:[%s165 + $0x1c] sm:$0xf]
      %v1119 = vld [vmem:[%s165 + $0x20] sm:$0xf]
      %v1120 = vld [vmem:[%s165 + $0x24] sm:$0xf]
      %v1121 = vld [vmem:[%s165 + $0x28] sm:$0x1]
      %s1122 = scalar_lea.vmem %s1, 96
      %v1123 = vld [vmem:[%s1122] sm:$0xf]
      %v1124 = vld [vmem:[%s1122 + $0x4] sm:$0xf]
      %v1125 = vld [vmem:[%s1122 + $0x8] sm:$0xf]
      %v1126 = vld [vmem:[%s1122 + $0xc] sm:$0xf]
      %v1137 = vunpack.c.l.b16 %v1112
      %v1138 = vunpack.c.l.b16 %v1113
      %v1139 = vunpack.c.l.b16 %v1114
      %v1140 = vunpack.c.l.b16 %v1115
      %v1141 = vunpack.c.l.b16 %v1116
      %v1142 = vunpack.c.l.b16 %v1117
      %v1143 = vunpack.c.l.b16 %v1118
      %v1144 = vunpack.c.l.b16 %v1119
      %v1145 = vunpack.c.l.b16 %v1120
      %v1146 = vunpack.c.l.b16 %v1121
      %v1147 = vpack.c.b16 %v1138, %v1137
      %v1148 = vpack.c.b16 %v1140, %v1139
      %v1149 = vpack.c.b16 %v1142, %v1141
      %v1150 = vpack.c.b16 %v1144, %v1143
      %v1151 = vpack.c.b16 %v1146, %v1145
      %v1153 = vshrl.u32 %v1147, 16
      %v1155 = vshll.u32 %v1147, 16
      %v1157 = vrot.slane %v1155, 1
      %v1158 = vor.u32 %v1153, %v1157
      %v1160 = vshll.u32 %v1148, 16
      %v1162 = vrot.slane %v1160, 1
      %v1163 = vsel %vm485, %v1158, %v1162
      %v1164 = vshrl.u32 %v1148, 16
      %v1166 = vor.u32 %v1164, %v1162
      %v1168 = vshll.u32 %v1149, 16
      %v1170 = vrot.slane %v1168, 1
      %v1171 = vsel %vm485, %v1166, %v1170
      %v1172 = vshrl.u32 %v1149, 16
      %v1174 = vor.u32 %v1172, %v1170
      %v1176 = vshll.u32 %v1150, 16
      %v1178 = vrot.slane %v1176, 1
      %v1179 = vsel %vm485, %v1174, %v1178
      %v1180 = vshrl.u32 %v1150, 16
      %v1182 = vor.u32 %v1180, %v1178
      %v1184 = vshll.u32 %v1151, 16
      %v1186 = vrot.slane %v1184, 1
      %v1187 = vsel %vm485, %v1182, %v1186
      %v1188 = vshrl.u32 %v1151, 16
      %v1190 = vor.u32 %v1188, %v1186
      %v1195 = vunpack.c.l.b16 %v1123
      %v1196 = vunpack.c.l.b16 %v1124
      %v1197 = vunpack.c.l.b16 %v1125
      %v1198 = vunpack.c.l.b16 %v1126
      %v1199 = vpack.c.b16 %v1196, %v1195
      %v1200 = vpack.c.b16 %v1198, %v1197
      %v1204 = vsel %vm235, %v1163, 0
      %v1207 = vsel %vm235, %v1171, 0
      %v1210 = vsel %vm235, %v1179, 0
      %v1213 = vsel %vm235, %v1187, 0
      %v1216 = vsel %vm235, %v1190, 0
      %1218 = vmatprep.subr.bf16.mxu0 0
      %1219 = vmatpush1.bf16.msra.mxu0 0
      %1220 = vmatprep.subr.bf16.mxu0 0
      %1221 = vmatpush1.bf16.msra.mxu0 0
      %1222 = vmatprep.subr.bf16.mxu0 0
      %1223 = vmatpush1.bf16.msra.mxu0 0
      %1224 = vmatprep.subr.bf16.mxu0 0
      %1225 = vmatpush1.bf16.msra.mxu0 0
      %1226 = vmatprep.subr.bf16.mxu0 0
      %1227 = vmatpush1.bf16.msra.mxu0 0
      %1228 = vmatprep.subr.bf16.mxu0 0
      %1229 = vmatpush1.bf16.msra.mxu0 0
      %1230 = vmatprep.subr.bf16.mxu0 0
      %1231 = vmatpush1.bf16.msra.mxu0 %v1200
      %1232 = vmatprep.subr.bf16.mxu0 0
      %1233 = vmatpush1.bf16.msra.mxu0 %v1199
      %1234 = vmatprep.subr.bf16.mxu0 0
      %1235 = vmatpush2.bf16.msra.mxu0 0
      %1236 = vmatprep.subr.bf16.mxu0 0
      %1237 = vmatpush2.bf16.msra.mxu0 0
      %1238 = vmatprep.subr.bf16.mxu0 0
      %1239 = vmatpush2.bf16.msra.mxu0 0
      %1240 = vmatprep.subr.bf16.mxu0 0
      %1241 = vmatpush2.bf16.msra.mxu0 0
      %1242 = vmatprep.subr.bf16.mxu0 0
      %1243 = vmatpush2.bf16.msra.mxu0 0
      %1244 = vmatprep.subr.bf16.mxu0 0
      %1245 = vmatpush2.bf16.msra.mxu0 0
      %1246 = vmatprep.subr.bf16.mxu0 0
      %1247 = vmatpush2.bf16.msra.mxu0 0
      %1248 = vmatprep.subr.bf16.mxu0 0
      %1249 = vmatpush2.bf16.msra.mxu0 0
      %1250 = vmatprep.mubr.bf16.mxu0 0
      %1251 = vmatmul.mubr.bf16.gmra.mxu0 %v1204
      %v1252 = vpop.f32.mrf.mxu0
      %v1253 = vadd.f32 0.0, %v1252
      %v1254 = vpop.f32.mrf.mxu0
      %v1255 = vpop.f32.mrf.mxu0
      %v1256 = vadd.f32 0.0, %v1255
      %v1257 = vpop.f32.mrf.mxu0
      %1258 = vmatprep.mubr.bf16.mxu0 0
      %1259 = vmatmul.mubr.bf16.gmra.mxu0 %v1207
      %v1260 = vpop.f32.mrf.mxu0
      %v1261 = vadd.f32 0.0, %v1260
      %v1262 = vpop.f32.mrf.mxu0
      %v1263 = vpop.f32.mrf.mxu0
      %v1264 = vadd.f32 0.0, %v1263
      %v1265 = vpop.f32.mrf.mxu0
      %1266 = vmatprep.mubr.bf16.mxu0 0
      %1267 = vmatmul.mubr.bf16.gmra.mxu0 %v1210
      %v1268 = vpop.f32.mrf.mxu0
      %v1269 = vadd.f32 0.0, %v1268
      %v1270 = vpop.f32.mrf.mxu0
      %v1271 = vpop.f32.mrf.mxu0
      %v1272 = vadd.f32 0.0, %v1271
      %v1273 = vpop.f32.mrf.mxu0
      %1274 = vmatprep.mubr.bf16.mxu0 0
      %1275 = vmatmul.mubr.bf16.gmra.mxu0 %v1213
      %v1276 = vpop.f32.mrf.mxu0
      %v1277 = vadd.f32 0.0, %v1276
      %v1278 = vpop.f32.mrf.mxu0
      %v1279 = vpop.f32.mrf.mxu0
      %v1280 = vadd.f32 0.0, %v1279
      %v1281 = vpop.f32.mrf.mxu0
      %1282 = vmatprep.mubr.bf16.mxu0 0
      %1283 = vmatmul.mubr.bf16.gmra.mxu0 %v1216
      %v1284 = vpop.f32.mrf.mxu0
      %v1285 = vadd.f32 0.0, %v1284
      %v1286 = vpop.f32.mrf.mxu0
      %v1287 = vpop.f32.mrf.mxu0
      %v1288 = vpop.f32.mrf.mxu0
      %1289 = vdwg.mxu0
      %v1290 = vadd.f32 %v1103, %v1253
      %v1291 = vadd.f32 %v1104, %v1256
      %v1292 = vadd.f32 %v1105, %v1261
      %v1293 = vadd.f32 %v1106, %v1264
      %v1294 = vadd.f32 %v1107, %v1269
      %v1295 = vadd.f32 %v1108, %v1272
      %v1296 = vadd.f32 %v1109, %v1277
      %v1297 = vadd.f32 %v1110, %v1280
      %v1298 = vadd.f32 %v1111, %v1285
      %v1299 = vld [vmem:[%s185 + $0x4] sm:$0xf]
      %v1300 = vld [vmem:[%s185 + $0x8] sm:$0xf]
      %v1301 = vld [vmem:[%s185 + $0xc] sm:$0xf]
      %v1302 = vld [vmem:[%s185 + $0x10] sm:$0xf]
      %v1303 = vld [vmem:[%s185 + $0x14] sm:$0xf]
      %v1304 = vld [vmem:[%s185 + $0x18] sm:$0xf]
      %v1305 = vld [vmem:[%s185 + $0x1c] sm:$0xf]
      %v1306 = vld [vmem:[%s185 + $0x20] sm:$0xf]
      %v1307 = vld [vmem:[%s185 + $0x24] sm:$0xf]
      %v1308 = vld [vmem:[%s185 + $0x28] sm:$0x1]
      %s1309 = scalar_lea.vmem %s1, 112
      %v1310 = vld [vmem:[%s1309] sm:$0xf]
      %v1311 = vld [vmem:[%s1309 + $0x4] sm:$0xf]
      %v1312 = vld [vmem:[%s1309 + $0x8] sm:$0xf]
      %v1313 = vld [vmem:[%s1309 + $0xc] sm:$0xf]
      %v1324 = vunpack.c.l.b16 %v1299
      %v1325 = vunpack.c.l.b16 %v1300
      %v1326 = vunpack.c.l.b16 %v1301
      %v1327 = vunpack.c.l.b16 %v1302
      %v1328 = vunpack.c.l.b16 %v1303
      %v1329 = vunpack.c.l.b16 %v1304
      %v1330 = vunpack.c.l.b16 %v1305
      %v1331 = vunpack.c.l.b16 %v1306
      %v1332 = vunpack.c.l.b16 %v1307
      %v1333 = vunpack.c.l.b16 %v1308
      %v1334 = vpack.c.b16 %v1325, %v1324
      %v1335 = vpack.c.b16 %v1327, %v1326
      %v1336 = vpack.c.b16 %v1329, %v1328
      %v1337 = vpack.c.b16 %v1331, %v1330
      %v1338 = vpack.c.b16 %v1333, %v1332
      %v1340 = vshrl.u32 %v1334, 16
      %v1342 = vshll.u32 %v1334, 16
      %v1344 = vrot.slane %v1342, 1
      %v1345 = vor.u32 %v1340, %v1344
      %v1347 = vshll.u32 %v1335, 16
      %v1349 = vrot.slane %v1347, 1
      %v1350 = vsel %vm485, %v1345, %v1349
      %v1351 = vshrl.u32 %v1335, 16
      %v1353 = vor.u32 %v1351, %v1349
      %v1355 = vshll.u32 %v1336, 16
      %v1357 = vrot.slane %v1355, 1
      %v1358 = vsel %vm485, %v1353, %v1357
      %v1359 = vshrl.u32 %v1336, 16
      %v1361 = vor.u32 %v1359, %v1357
      %v1363 = vshll.u32 %v1337, 16
      %v1365 = vrot.slane %v1363, 1
      %v1366 = vsel %vm485, %v1361, %v1365
      %v1367 = vshrl.u32 %v1337, 16
      %v1369 = vor.u32 %v1367, %v1365
      %v1371 = vshll.u32 %v1338, 16
      %v1373 = vrot.slane %v1371, 1
      %v1374 = vsel %vm485, %v1369, %v1373
      %v1375 = vshrl.u32 %v1338, 16
      %v1377 = vor.u32 %v1375, %v1373
      %v1382 = vunpack.c.l.b16 %v1310
      %v1383 = vunpack.c.l.b16 %v1311
      %v1384 = vunpack.c.l.b16 %v1312
      %v1385 = vunpack.c.l.b16 %v1313
      %v1386 = vpack.c.b16 %v1383, %v1382
      %v1387 = vpack.c.b16 %v1385, %v1384
      %v1391 = vsel %vm235, %v1350, 0
      %v1394 = vsel %vm235, %v1358, 0
      %v1397 = vsel %vm235, %v1366, 0
      %v1400 = vsel %vm235, %v1374, 0
      %v1403 = vsel %vm235, %v1377, 0
      %1405 = vmatprep.subr.bf16.mxu0 0
      %1406 = vmatpush1.bf16.msra.mxu0 0
      %1407 = vmatprep.subr.bf16.mxu0 0
      %1408 = vmatpush1.bf16.msra.mxu0 0
      %1409 = vmatprep.subr.bf16.mxu0 0
      %1410 = vmatpush1.bf16.msra.mxu0 0
      %1411 = vmatprep.subr.bf16.mxu0 0
      %1412 = vmatpush1.bf16.msra.mxu0 0
      %1413 = vmatprep.subr.bf16.mxu0 0
      %1414 = vmatpush1.bf16.msra.mxu0 0
      %1415 = vmatprep.subr.bf16.mxu0 0
      %1416 = vmatpush1.bf16.msra.mxu0 0
      %1417 = vmatprep.subr.bf16.mxu0 0
      %1418 = vmatpush1.bf16.msra.mxu0 %v1387
      %1419 = vmatprep.subr.bf16.mxu0 0
      %1420 = vmatpush1.bf16.msra.mxu0 %v1386
      %1421 = vmatprep.subr.bf16.mxu0 0
      %1422 = vmatpush2.bf16.msra.mxu0 0
      %1423 = vmatprep.subr.bf16.mxu0 0
      %1424 = vmatpush2.bf16.msra.mxu0 0
      %1425 = vmatprep.subr.bf16.mxu0 0
      %1426 = vmatpush2.bf16.msra.mxu0 0
      %1427 = vmatprep.subr.bf16.mxu0 0
      %1428 = vmatpush2.bf16.msra.mxu0 0
      %1429 = vmatprep.subr.bf16.mxu0 0
      %1430 = vmatpush2.bf16.msra.mxu0 0
      %1431 = vmatprep.subr.bf16.mxu0 0
      %1432 = vmatpush2.bf16.msra.mxu0 0
      %1433 = vmatprep.subr.bf16.mxu0 0
      %1434 = vmatpush2.bf16.msra.mxu0 0
      %1435 = vmatprep.subr.bf16.mxu0 0
      %1436 = vmatpush2.bf16.msra.mxu0 0
      %1437 = vmatprep.mubr.bf16.mxu0 0
      %1438 = vmatmul.mubr.bf16.gmra.mxu0 %v1391
      %v1439 = vpop.f32.mrf.mxu0
      %v1440 = vadd.f32 0.0, %v1439
      %v1441 = vpop.f32.mrf.mxu0
      %v1442 = vpop.f32.mrf.mxu0
      %v1443 = vadd.f32 0.0, %v1442
      %v1444 = vpop.f32.mrf.mxu0
      %1445 = vmatprep.mubr.bf16.mxu0 0
      %1446 = vmatmul.mubr.bf16.gmra.mxu0 %v1394
      %v1447 = vpop.f32.mrf.mxu0
      %v1448 = vadd.f32 0.0, %v1447
      %v1449 = vpop.f32.mrf.mxu0
      %v1450 = vpop.f32.mrf.mxu0
      %v1451 = vadd.f32 0.0, %v1450
      %v1452 = vpop.f32.mrf.mxu0
      %1453 = vmatprep.mubr.bf16.mxu0 0
      %1454 = vmatmul.mubr.bf16.gmra.mxu0 %v1397
      %v1455 = vpop.f32.mrf.mxu0
      %v1456 = vadd.f32 0.0, %v1455
      %v1457 = vpop.f32.mrf.mxu0
      %v1458 = vpop.f32.mrf.mxu0
      %v1459 = vadd.f32 0.0, %v1458
      %v1460 = vpop.f32.mrf.mxu0
      %1461 = vmatprep.mubr.bf16.mxu0 0
      %1462 = vmatmul.mubr.bf16.gmra.mxu0 %v1400
      %v1463 = vpop.f32.mrf.mxu0
      %v1464 = vadd.f32 0.0, %v1463
      %v1465 = vpop.f32.mrf.mxu0
      %v1466 = vpop.f32.mrf.mxu0
      %v1467 = vadd.f32 0.0, %v1466
      %v1468 = vpop.f32.mrf.mxu0
      %1469 = vmatprep.mubr.bf16.mxu0 0
      %1470 = vmatmul.mubr.bf16.gmra.mxu0 %v1403
      %v1471 = vpop.f32.mrf.mxu0
      %v1472 = vadd.f32 0.0, %v1471
      %v1473 = vpop.f32.mrf.mxu0
      %v1474 = vpop.f32.mrf.mxu0
      %v1475 = vpop.f32.mrf.mxu0
      %1476 = vdwg.mxu0
      %v1477 = vadd.f32 %v1290, %v1440
      %v1478 = vadd.f32 %v1291, %v1443
      %v1479 = vadd.f32 %v1292, %v1448
      %v1480 = vadd.f32 %v1293, %v1451
      %v1481 = vadd.f32 %v1294, %v1456
      %v1482 = vadd.f32 %v1295, %v1459
      %v1483 = vadd.f32 %v1296, %v1464
      %v1484 = vadd.f32 %v1297, %v1467
      %v1485 = vadd.f32 %v1298, %v1472
      %v1486 = vld [vmem:[%s165 + $0x4] sm:$0xe]
      %s1487 = scalar_lea.vmem %s1, 128
      %v1488 = vld [vmem:[%s1487] sm:$0xf]
      %v1489 = vld [vmem:[%s1487 + $0x4] sm:$0xf]
      %v1490 = vld [vmem:[%s1487 + $0x8] sm:$0xf]
      %v1491 = vld [vmem:[%s1487 + $0xc] sm:$0xf]
      %v1493 = vunpack.c.l.b16 %v1486
      %v1494 = vpack.c.b16 %v1138, %v1493
      %vm1495 = vcmask 1046528
      %v1496 = vrot.slane %v1494, 1
      %v1497 = vrot.slane %v1148, 1
      %v1498 = vsel %vm1495, %v1496, %v1497
      %v1499 = vrot.slane %v1149, 1
      %v1500 = vsel %vm1495, %v1497, %v1499
      %v1501 = vrot.slane %v1150, 1
      %v1502 = vsel %vm1495, %v1499, %v1501
      %v1503 = vrot.slane %v1151, 1
      %v1504 = vsel %vm1495, %v1501, %v1503
      %v1509 = vunpack.c.l.b16 %v1488
      %v1510 = vunpack.c.l.b16 %v1489
      %v1511 = vunpack.c.l.b16 %v1490
      %v1512 = vunpack.c.l.b16 %v1491
      %v1513 = vpack.c.b16 %v1510, %v1509
      %v1514 = vpack.c.b16 %v1512, %v1511
      %v1518 = vsel %vm235, %v1498, 0
      %v1521 = vsel %vm235, %v1500, 0
      %v1524 = vsel %vm235, %v1502, 0
      %v1527 = vsel %vm235, %v1504, 0
      %v1530 = vsel %vm235, %v1503, 0
      %1532 = vmatprep.subr.bf16.mxu0 0
      %1533 = vmatpush1.bf16.msra.mxu0 0
      %1534 = vmatprep.subr.bf16.mxu0 0
      %1535 = vmatpush1.bf16.msra.mxu0 0
      %1536 = vmatprep.subr.bf16.mxu0 0
      %1537 = vmatpush1.bf16.msra.mxu0 0
      %1538 = vmatprep.subr.bf16.mxu0 0
      %1539 = vmatpush1.bf16.msra.mxu0 0
      %1540 = vmatprep.subr.bf16.mxu0 0
      %1541 = vmatpush1.bf16.msra.mxu0 0
      %1542 = vmatprep.subr.bf16.mxu0 0
      %1543 = vmatpush1.bf16.msra.mxu0 0
      %1544 = vmatprep.subr.bf16.mxu0 0
      %1545 = vmatpush1.bf16.msra.mxu0 %v1514
      %1546 = vmatprep.subr.bf16.mxu0 0
      %1547 = vmatpush1.bf16.msra.mxu0 %v1513
      %1548 = vmatprep.subr.bf16.mxu0 0
      %1549 = vmatpush2.bf16.msra.mxu0 0
      %1550 = vmatprep.subr.bf16.mxu0 0
      %1551 = vmatpush2.bf16.msra.mxu0 0
      %1552 = vmatprep.subr.bf16.mxu0 0
      %1553 = vmatpush2.bf16.msra.mxu0 0
      %1554 = vmatprep.subr.bf16.mxu0 0
      %1555 = vmatpush2.bf16.msra.mxu0 0
      %1556 = vmatprep.subr.bf16.mxu0 0
      %1557 = vmatpush2.bf16.msra.mxu0 0
      %1558 = vmatprep.subr.bf16.mxu0 0
      %1559 = vmatpush2.bf16.msra.mxu0 0
      %1560 = vmatprep.subr.bf16.mxu0 0
      %1561 = vmatpush2.bf16.msra.mxu0 0
      %1562 = vmatprep.subr.bf16.mxu0 0
      %1563 = vmatpush2.bf16.msra.mxu0 0
      %1564 = vmatprep.mubr.bf16.mxu0 0
      %1565 = vmatmul.mubr.bf16.gmra.mxu0 %v1518
      %v1566 = vpop.f32.mrf.mxu0
      %v1567 = vadd.f32 0.0, %v1566
      %v1568 = vpop.f32.mrf.mxu0
      %v1569 = vpop.f32.mrf.mxu0
      %v1570 = vadd.f32 0.0, %v1569
      %v1571 = vpop.f32.mrf.mxu0
      %1572 = vmatprep.mubr.bf16.mxu0 0
      %1573 = vmatmul.mubr.bf16.gmra.mxu0 %v1521
      %v1574 = vpop.f32.mrf.mxu0
      %v1575 = vadd.f32 0.0, %v1574
      %v1576 = vpop.f32.mrf.mxu0
      %v1577 = vpop.f32.mrf.mxu0
      %v1578 = vadd.f32 0.0, %v1577
      %v1579 = vpop.f32.mrf.mxu0
      %1580 = vmatprep.mubr.bf16.mxu0 0
      %1581 = vmatmul.mubr.bf16.gmra.mxu0 %v1524
      %v1582 = vpop.f32.mrf.mxu0
      %v1583 = vadd.f32 0.0, %v1582
      %v1584 = vpop.f32.mrf.mxu0
      %v1585 = vpop.f32.mrf.mxu0
      %v1586 = vadd.f32 0.0, %v1585
      %v1587 = vpop.f32.mrf.mxu0
      %1588 = vmatprep.mubr.bf16.mxu0 0
      %1589 = vmatmul.mubr.bf16.gmra.mxu0 %v1527
      %v1590 = vpop.f32.mrf.mxu0
      %v1591 = vadd.f32 0.0, %v1590
      %v1592 = vpop.f32.mrf.mxu0
      %v1593 = vpop.f32.mrf.mxu0
      %v1594 = vadd.f32 0.0, %v1593
      %v1595 = vpop.f32.mrf.mxu0
      %1596 = vmatprep.mubr.bf16.mxu0 0
      %1597 = vmatmul.mubr.bf16.gmra.mxu0 %v1530
      %v1598 = vpop.f32.mrf.mxu0
      %v1599 = vadd.f32 0.0, %v1598
      %v1600 = vpop.f32.mrf.mxu0
      %v1601 = vpop.f32.mrf.mxu0
      %v1602 = vpop.f32.mrf.mxu0
      %1603 = vdwg.mxu0
      %v1604 = vadd.f32 %v1477, %v1567
      %v1605 = vadd.f32 %v1478, %v1570
      %v1606 = vadd.f32 %v1479, %v1575
      %v1607 = vadd.f32 %v1480, %v1578
      %v1608 = vadd.f32 %v1481, %v1583
      %v1609 = vadd.f32 %v1482, %v1586
      %v1610 = vadd.f32 %v1483, %v1591
      %v1611 = vadd.f32 %v1484, %v1594
      %v1612 = vadd.f32 %v1485, %v1599
      %v1613 = vld [vmem:[%s2] sm:$0x1]
      %v1615 = vlaneseq
      %v1616 = vshrl.u32 %v1615, 7
      %v1617 = vsub.s32 0, %v1616
      %v1618 = vrot.slane %v1613, %v1617
      %v1620 = vadd.f32 %v1604, %v1618
      %v1621 = vadd.f32 %v1605, %v1618
      %v1622 = vadd.f32 %v1606, %v1618
      %v1623 = vadd.f32 %v1607, %v1618
      %v1624 = vadd.f32 %v1608, %v1618
      %v1625 = vadd.f32 %v1609, %v1618
      %v1626 = vadd.f32 %v1610, %v1618
      %v1627 = vadd.f32 %v1611, %v1618
      %v1628 = vadd.f32 %v1612, %v1618
      %v1629 = vmax.f32 %v1620, 0.0
      %v1630 = vmax.f32 %v1621, 0.0
      %v1631 = vmax.f32 %v1622, 0.0
      %v1632 = vmax.f32 %v1623, 0.0
      %v1633 = vmax.f32 %v1624, 0.0
      %v1634 = vmax.f32 %v1625, 0.0
      %v1635 = vmax.f32 %v1626, 0.0
      %v1636 = vmax.f32 %v1627, 0.0
      %v1637 = vmax.f32 %v1628, 0.0
      %v1638 = vpack.c.bf16 %v1630, %v1629
      %v1639 = vpack.c.bf16 %v1632, %v1631
      %v1640 = vpack.c.bf16 %v1634, %v1633
      %v1641 = vpack.c.bf16 %v1636, %v1635
      %v1642 = vpack.c.bf16 %v1637, %v1637
      %v1648 = vunpack.c.l.b16 %v1638
      %v1649 = vunpack.c.h.b16 %v1638
      %v1650 = vunpack.c.l.b16 %v1639
      %v1651 = vunpack.c.h.b16 %v1639
      %v1652 = vunpack.c.l.b16 %v1640
      %v1653 = vunpack.c.h.b16 %v1640
      %v1654 = vunpack.c.l.b16 %v1641
      %v1655 = vunpack.c.h.b16 %v1641
      %v1656 = vunpack.c.l.b16 %v1642
      %v1657 = vpack.c.b16 %v1648, %v1648
      %v1658 = vpack.c.b16 %v1649, %v1649
      %v1659 = vpack.c.b16 %v1650, %v1650
      %v1660 = vpack.c.b16 %v1651, %v1651
      %v1661 = vpack.c.b16 %v1652, %v1652
      %v1662 = vpack.c.b16 %v1653, %v1653
      %v1663 = vpack.c.b16 %v1654, %v1654
      %v1664 = vpack.c.b16 %v1655, %v1655
      %v1665 = vpack.c.b16 %v1656, %v1656
      %vm1675 = vcmask 257024
      %1676 = vst.msk [vmem:[%s170] sm:$0xf] %vm1675, %v1657
      %1677 = vst.msk [vmem:[%s170 + $0x4] sm:$0xf] %vm1675, %v1658
      %1678 = vst.msk [vmem:[%s170 + $0x8] sm:$0xf] %vm1675, %v1659
      %1679 = vst.msk [vmem:[%s170 + $0xc] sm:$0xf] %vm1675, %v1660
      %1680 = vst.msk [vmem:[%s170 + $0x10] sm:$0xf] %vm1675, %v1661
      %1681 = vst.msk [vmem:[%s170 + $0x14] sm:$0xf] %vm1675, %v1662
      %1682 = vst.msk [vmem:[%s170 + $0x18] sm:$0xf] %vm1675, %v1663
      %1683 = vst.msk [vmem:[%s170 + $0x1c] sm:$0xf] %vm1675, %v1664
      %1684 = vst.msk [vmem:[%s170 + $0x20] sm:$0xf] %vm1675, %v1665
      %p1685 = scmp.lt.s32.totalorder %s14, 1
      %s1686 = scalar_select %p1685, %s14, 1
      %s1687 = smul.addr %s1686, 9
      %s1688 = smul.addr %s1687, 4
      %s1689 = scalar_lea.vmem %s3, %s1688
      // Predicated region
      $region33: #{bottleneck_forward.5} parent=31 // pred_check
        %p1690 = pneg %p100
      $region34: #{bottleneck_forward.5} parent=31 // pred_check_branch
        %1692 = sbr.rel (%p1690) target = $region36
      $region35: #{bottleneck_forward.5} parent=31 // pred_region
        _
      $region36: #{bottleneck_forward.5} parent=31 // pred_fallthru
        _
    $region32: #{bottleneck_forward.5} parent=5 // pred_fallthru
      _
    %p1693 = scmp.le.s32.totalorder 2, %s9
    // Predicated region
    $region37: #{bottleneck_forward.5} parent=5 // pred_check
      %p1694 = pneg %p1693
    $region38: #{bottleneck_forward.5} parent=5 // pred_check_branch
      %1696 = sbr.rel (%p1694) target = $region40
    $region39: #{bottleneck_forward.5} parent=5 // pred_region
      %s1697 = ssub.s32 %s9, 2
      // Predicated region
      $region41: #{bottleneck_forward.5} parent=39 // pred_check
        %p1698 = pneg %p106
      $region42: #{bottleneck_forward.5} parent=39 // pred_check_branch
        %1700 = sbr.rel (%p1698) target = $region44
      $region43: #{bottleneck_forward.5} parent=39 // pred_region
        %p1701 = scmp.lt.s32.totalorder %s15, 1
        %s1702 = scalar_select %p1701, %s15, 1
        %s1703 = smul.addr %s1702, 9
        %s1704 = smul.addr %s1703, 4
        %s1705 = scalar_lea.vmem %s3, %s1704
      $region44: #{bottleneck_forward.5} parent=39 // pred_fallthru
        _
    $region40: #{bottleneck_forward.5} parent=5 // pred_fallthru
      _
  $region6: #{bottleneck_forward.5} parent=0 // loop_footer
    %s13 = sadd.s32 1, %s9
  $region7: #{bottleneck_forward.5} parent=0 // loop_footer_branch
    %8 = sbr.rel target = $region3
  $region8: #{bottleneck_forward.5} parent=0 // loop_exit
    _

// kernel: bottleneck_forward.7
$region0: #{bottleneck_forward.7}
  #allocation0 [shape = 'u32[]', space=smem, size = 0x4, offset = 0x4, fixed_abs, tag = 'smem constant byte address 0x4 - core index']
  #allocation1 [shape = 'u32[144,128]{1,0:T(1,128)}', space=vmem, size = 0x12000, scoped, tag = 'internal scratch']
  #allocation2 [shape = 'f32[128,128]{1,0:T(8,128)}', space=vmem, size = 0x10000, scoped, tag = 'scratch operand']
  %s0 = inlined_call_operand.vmem [shape: bf16[128,32], index: 0, kind: input, shape index: {}]
  %s1 = inlined_call_operand.vmem [shape: bf16[32,128], index: 1, kind: input, shape index: {}]
  %s2 = inlined_call_operand.vmem [shape: f32[1,128], index: 2, kind: input, shape index: {}]
  %s3 = inlined_call_operand.vmem [shape: f32[128,128], index: 3, kind: input, shape index: {}]
  %s4 = inlined_call_operand.hbm [shape: f32[128,128], index: 4, kind: output, shape index: {}]
  %s5 = sld [smem:[#allocation0]]
  $region34: #{bottleneck_forward.7} parent=0
    _
  %s7 = ssub.s32 1, %s5
  %s8 = scalar_select 0, %s7, %s5
  $region1: #{bottleneck_forward.7} parent=0
    #allocation3 [shape = 'u8[65536]{0}', space=vmem, size = 0x10000, scoped, tag = 'output window, operand 0, single buffered']
    #allocation4 [shape = 's32[1]{0}', space=sflag, size = 0x4, scoped, tag = 'scoped memory for bottleneck_forward.7']
    %9 = vsyncpa [#allocation4], 0
    // Predicated region
    $region2: #{bottleneck_forward.7} parent=1 // pred_check
      _
    $region3: #{bottleneck_forward.7} parent=1 // pred_check_branch
      %11 = sbr.rel (0) target = $region5
    $region4: #{bottleneck_forward.7} parent=1 // pred_region
      _
    $region5: #{bottleneck_forward.7} parent=1 // pred_fallthru
      _
    // Predicated region
    $region6: #{bottleneck_forward.7} parent=1 // pred_check
      _
    $region7: #{bottleneck_forward.7} parent=1 // pred_check_branch
      %13 = sbr.rel (0) target = $region9
    $region8: #{bottleneck_forward.7} parent=1 // pred_region
      _
    $region9: #{bottleneck_forward.7} parent=1 // pred_fallthru
      _
    // Predicated region
    $region10: #{bottleneck_forward.7} parent=1 // pred_check
      _
    $region11: #{bottleneck_forward.7} parent=1 // pred_check_branch
      %15 = sbr.rel (0) target = $region13
    $region12: #{bottleneck_forward.7} parent=1 // pred_region
      _
    $region13: #{bottleneck_forward.7} parent=1 // pred_fallthru
      _
    // Predicated region
    $region14: #{bottleneck_forward.7} parent=1 // pred_check
      _
    $region15: #{bottleneck_forward.7} parent=1 // pred_check_branch
      %17 = sbr.rel (0) target = $region17
    $region16: #{bottleneck_forward.7} parent=1 // pred_region
      _
    $region17: #{bottleneck_forward.7} parent=1 // pred_fallthru
      _
    %p19 = scmp.eq.s32.totalorder 0, 0
    // Predicated region
    $region18: #{bottleneck_forward.7} parent=1 // pred_check
      %p20 = pneg %p19
    $region19: #{bottleneck_forward.7} parent=1 // pred_check_branch
      %22 = sbr.rel (%p20) target = $region21
    $region20: #{bottleneck_forward.7} parent=1 // pred_region
      %23 = vst [vmem:[#allocation2] sm:$0xff] 0.0
      %24 = vst [vmem:[#allocation2 + $0x8] sm:$0xff] 0.0
      %25 = vst [vmem:[#allocation2 + $0x10] sm:$0xff] 0.0
      %26 = vst [vmem:[#allocation2 + $0x18] sm:$0xff] 0.0
      %27 = vst [vmem:[#allocation2 + $0x20] sm:$0xff] 0.0
      %28 = vst [vmem:[#allocation2 + $0x28] sm:$0xff] 0.0
      %29 = vst [vmem:[#allocation2 + $0x30] sm:$0xff] 0.0
      %30 = vst [vmem:[#allocation2 + $0x38] sm:$0xff] 0.0
      %31 = vst [vmem:[#allocation2 + $0x40] sm:$0xff] 0.0
      %32 = vst [vmem:[#allocation2 + $0x48] sm:$0xff] 0.0
      %33 = vst [vmem:[#allocation2 + $0x50] sm:$0xff] 0.0
      %34 = vst [vmem:[#allocation2 + $0x58] sm:$0xff] 0.0
      %35 = vst [vmem:[#allocation2 + $0x60] sm:$0xff] 0.0
      %36 = vst [vmem:[#allocation2 + $0x68] sm:$0xff] 0.0
      %37 = vst [vmem:[#allocation2 + $0x70] sm:$0xff] 0.0
      %38 = vst [vmem:[#allocation2 + $0x78] sm:$0xff] 0.0
    $region21: #{bottleneck_forward.7} parent=1 // pred_fallthru
      _
    %v39 = vld [vmem:[#allocation2] sm:$0xff]
    %v40 = vld [vmem:[#allocation2 + $0x8] sm:$0xff]
    %v41 = vld [vmem:[#allocation2 + $0x10] sm:$0xff]
    %v42 = vld [vmem:[#allocation2 + $0x18] sm:$0xff]
    %v43 = vld [vmem:[#allocation2 + $0x20] sm:$0xff]
    %v44 = vld [vmem:[#allocation2 + $0x28] sm:$0xff]
    %v45 = vld [vmem:[#allocation2 + $0x30] sm:$0xff]
    %v46 = vld [vmem:[#allocation2 + $0x38] sm:$0xff]
    %v47 = vld [vmem:[#allocation2 + $0x40] sm:$0xff]
    %v48 = vld [vmem:[#allocation2 + $0x48] sm:$0xff]
    %v49 = vld [vmem:[#allocation2 + $0x50] sm:$0xff]
    %v50 = vld [vmem:[#allocation2 + $0x58] sm:$0xff]
    %v51 = vld [vmem:[#allocation2 + $0x60] sm:$0xff]
    %v52 = vld [vmem:[#allocation2 + $0x68] sm:$0xff]
    %v53 = vld [vmem:[#allocation2 + $0x70] sm:$0xff]
    %v54 = vld [vmem:[#allocation2 + $0x78] sm:$0xff]
    %v55 = vld [vmem:[%s0] sm:$0xf]
    %v56 = vld [vmem:[%s0 + $0x4] sm:$0xf]
    %v57 = vld [vmem:[%s0 + $0x8] sm:$0xf]
    %v58 = vld [vmem:[%s0 + $0xc] sm:$0xf]
    %v59 = vld [vmem:[%s0 + $0x10] sm:$0xf]
    %v60 = vld [vmem:[%s0 + $0x14] sm:$0xf]
    %v61 = vld [vmem:[%s0 + $0x18] sm:$0xf]
    %v62 = vld [vmem:[%s0 + $0x1c] sm:$0xf]
    %v63 = vld [vmem:[%s0 + $0x20] sm:$0xf]
    %v64 = vld [vmem:[%s0 + $0x24] sm:$0xf]
    %v65 = vld [vmem:[%s0 + $0x28] sm:$0xf]
    %v66 = vld [vmem:[%s0 + $0x2c] sm:$0xf]
    %v67 = vld [vmem:[%s0 + $0x30] sm:$0xf]
    %v68 = vld [vmem:[%s0 + $0x34] sm:$0xf]
    %v69 = vld [vmem:[%s0 + $0x38] sm:$0xf]
    %v70 = vld [vmem:[%s0 + $0x3c] sm:$0xf]
    %v71 = vld [vmem:[%s1] sm:$0xf]
    %v72 = vld [vmem:[%s1 + $0x4] sm:$0xf]
    %v73 = vld [vmem:[%s1 + $0x8] sm:$0xf]
    %v74 = vld [vmem:[%s1 + $0xc] sm:$0xf]
    %v91 = vunpack.c.l.b16 %v55
    %v92 = vunpack.c.l.b16 %v56
    %v93 = vunpack.c.l.b16 %v57
    %v94 = vunpack.c.l.b16 %v58
    %v95 = vunpack.c.l.b16 %v59
    %v96 = vunpack.c.l.b16 %v60
    %v97 = vunpack.c.l.b16 %v61
    %v98 = vunpack.c.l.b16 %v62
    %v99 = vunpack.c.l.b16 %v63
    %v100 = vunpack.c.l.b16 %v64
    %v101 = vunpack.c.l.b16 %v65
    %v102 = vunpack.c.l.b16 %v66
    %v103 = vunpack.c.l.b16 %v67
    %v104 = vunpack.c.l.b16 %v68
    %v105 = vunpack.c.l.b16 %v69
    %v106 = vunpack.c.l.b16 %v70
    %v107 = vpack.c.b16 %v92, %v91
    %v108 = vpack.c.b16 %v94, %v93
    %v109 = vpack.c.b16 %v96, %v95
    %v110 = vpack.c.b16 %v98, %v97
    %v111 = vpack.c.b16 %v100, %v99
    %v112 = vpack.c.b16 %v102, %v101
    %v113 = vpack.c.b16 %v104, %v103
    %v114 = vpack.c.b16 %v106, %v105
    %v119 = vunpack.c.l.b16 %v71
    %v120 = vunpack.c.l.b16 %v72
    %v121 = vunpack.c.l.b16 %v73
    %v122 = vunpack.c.l.b16 %v74
    %v123 = vpack.c.b16 %v120, %v119
    %v124 = vpack.c.b16 %v122, %v121
    %vm127 = vcmask 261120
    %v129 = vsel %vm127, %v107, 0
    %v132 = vsel %vm127, %v108, 0
    %v135 = vsel %vm127, %v109, 0
    %v138 = vsel %vm127, %v110, 0
    %v141 = vsel %vm127, %v111, 0
    %v144 = vsel %vm127, %v112, 0
    %v147 = vsel %vm127, %v113, 0
    %v150 = vsel %vm127, %v114, 0
    %152 = vmatprep.subr.bf16.mxu0 0
    %153 = vmatpush1.bf16.msra.mxu0 0
    %154 = vmatprep.subr.bf16.mxu0 0
    %155 = vmatpush1.bf16.msra.mxu0 0
    %156 = vmatprep.subr.bf16.mxu0 0
    %157 = vmatpush1.bf16.msra.mxu0 0
    %158 = vmatprep.subr.bf16.mxu0 0
    %159 = vmatpush1.bf16.msra.mxu0 0
    %160 = vmatprep.subr.bf16.mxu0 0
    %161 = vmatpush1.bf16.msra.mxu0 0
    %162 = vmatprep.subr.bf16.mxu0 0
    %163 = vmatpush1.bf16.msra.mxu0 0
    %164 = vmatprep.subr.bf16.mxu0 0
    %165 = vmatpush1.bf16.msra.mxu0 %v124
    %166 = vmatprep.subr.bf16.mxu0 0
    %167 = vmatpush1.bf16.msra.mxu0 %v123
    %168 = vmatprep.subr.bf16.mxu0 0
    %169 = vmatpush2.bf16.msra.mxu0 0
    %170 = vmatprep.subr.bf16.mxu0 0
    %171 = vmatpush2.bf16.msra.mxu0 0
    %172 = vmatprep.subr.bf16.mxu0 0
    %173 = vmatpush2.bf16.msra.mxu0 0
    %174 = vmatprep.subr.bf16.mxu0 0
    %175 = vmatpush2.bf16.msra.mxu0 0
    %176 = vmatprep.subr.bf16.mxu0 0
    %177 = vmatpush2.bf16.msra.mxu0 0
    %178 = vmatprep.subr.bf16.mxu0 0
    %179 = vmatpush2.bf16.msra.mxu0 0
    %180 = vmatprep.subr.bf16.mxu0 0
    %181 = vmatpush2.bf16.msra.mxu0 0
    %182 = vmatprep.subr.bf16.mxu0 0
    %183 = vmatpush2.bf16.msra.mxu0 0
    %184 = vmatprep.mubr.bf16.mxu0 0
    %185 = vmatmul.mubr.bf16.gmra.mxu0 %v129
    %v186 = vpop.f32.mrf.mxu0
    %v187 = vadd.f32 0.0, %v186
    %v188 = vpop.f32.mrf.mxu0
    %v189 = vpop.f32.mrf.mxu0
    %v190 = vadd.f32 0.0, %v189
    %v191 = vpop.f32.mrf.mxu0
    %192 = vmatprep.mubr.bf16.mxu0 0
    %193 = vmatmul.mubr.bf16.gmra.mxu0 %v132
    %v194 = vpop.f32.mrf.mxu0
    %v195 = vadd.f32 0.0, %v194
    %v196 = vpop.f32.mrf.mxu0
    %v197 = vpop.f32.mrf.mxu0
    %v198 = vadd.f32 0.0, %v197
    %v199 = vpop.f32.mrf.mxu0
    %200 = vmatprep.mubr.bf16.mxu0 0
    %201 = vmatmul.mubr.bf16.gmra.mxu0 %v135
    %v202 = vpop.f32.mrf.mxu0
    %v203 = vadd.f32 0.0, %v202
    %v204 = vpop.f32.mrf.mxu0
    %v205 = vpop.f32.mrf.mxu0
    %v206 = vadd.f32 0.0, %v205
    %v207 = vpop.f32.mrf.mxu0
    %208 = vmatprep.mubr.bf16.mxu0 0
    %209 = vmatmul.mubr.bf16.gmra.mxu0 %v138
    %v210 = vpop.f32.mrf.mxu0
    %v211 = vadd.f32 0.0, %v210
    %v212 = vpop.f32.mrf.mxu0
    %v213 = vpop.f32.mrf.mxu0
    %v214 = vadd.f32 0.0, %v213
    %v215 = vpop.f32.mrf.mxu0
    %216 = vmatprep.mubr.bf16.mxu0 0
    %217 = vmatmul.mubr.bf16.gmra.mxu0 %v141
    %v218 = vpop.f32.mrf.mxu0
    %v219 = vadd.f32 0.0, %v218
    %v220 = vpop.f32.mrf.mxu0
    %v221 = vpop.f32.mrf.mxu0
    %v222 = vadd.f32 0.0, %v221
    %v223 = vpop.f32.mrf.mxu0
    %224 = vmatprep.mubr.bf16.mxu0 0
    %225 = vmatmul.mubr.bf16.gmra.mxu0 %v144
    %v226 = vpop.f32.mrf.mxu0
    %v227 = vadd.f32 0.0, %v226
    %v228 = vpop.f32.mrf.mxu0
    %v229 = vpop.f32.mrf.mxu0
    %v230 = vadd.f32 0.0, %v229
    %v231 = vpop.f32.mrf.mxu0
    %232 = vmatprep.mubr.bf16.mxu0 0
    %233 = vmatmul.mubr.bf16.gmra.mxu0 %v147
    %v234 = vpop.f32.mrf.mxu0
    %v235 = vadd.f32 0.0, %v234
    %v236 = vpop.f32.mrf.mxu0
    %v237 = vpop.f32.mrf.mxu0
    %v238 = vadd.f32 0.0, %v237
    %v239 = vpop.f32.mrf.mxu0
    %240 = vmatprep.mubr.bf16.mxu0 0
    %241 = vmatmul.mubr.bf16.gmra.mxu0 %v150
    %v242 = vpop.f32.mrf.mxu0
    %v243 = vadd.f32 0.0, %v242
    %v244 = vpop.f32.mrf.mxu0
    %v245 = vpop.f32.mrf.mxu0
    %v246 = vadd.f32 0.0, %v245
    %v247 = vpop.f32.mrf.mxu0
    %248 = vdwg.mxu0
    %v249 = vadd.f32 %v39, %v187
    %v250 = vadd.f32 %v40, %v190
    %v251 = vadd.f32 %v41, %v195
    %v252 = vadd.f32 %v42, %v198
    %v253 = vadd.f32 %v43, %v203
    %v254 = vadd.f32 %v44, %v206
    %v255 = vadd.f32 %v45, %v211
    %v256 = vadd.f32 %v46, %v214
    %v257 = vadd.f32 %v47, %v219
    %v258 = vadd.f32 %v48, %v222
    %v259 = vadd.f32 %v49, %v227
    %v260 = vadd.f32 %v50, %v230
    %v261 = vadd.f32 %v51, %v235
    %v262 = vadd.f32 %v52, %v238
    %v263 = vadd.f32 %v53, %v243
    %v264 = vadd.f32 %v54, %v246
    %265 = vst [vmem:[#allocation2] sm:$0xff] %v249
    %266 = vst [vmem:[#allocation2 + $0x8] sm:$0xff] %v250
    %267 = vst [vmem:[#allocation2 + $0x10] sm:$0xff] %v251
    %268 = vst [vmem:[#allocation2 + $0x18] sm:$0xff] %v252
    %269 = vst [vmem:[#allocation2 + $0x20] sm:$0xff] %v253
    %270 = vst [vmem:[#allocation2 + $0x28] sm:$0xff] %v254
    %271 = vst [vmem:[#allocation2 + $0x30] sm:$0xff] %v255
    %272 = vst [vmem:[#allocation2 + $0x38] sm:$0xff] %v256
    %273 = vst [vmem:[#allocation2 + $0x40] sm:$0xff] %v257
    %274 = vst [vmem:[#allocation2 + $0x48] sm:$0xff] %v258
    %275 = vst [vmem:[#allocation2 + $0x50] sm:$0xff] %v259
    %276 = vst [vmem:[#allocation2 + $0x58] sm:$0xff] %v260
    %277 = vst [vmem:[#allocation2 + $0x60] sm:$0xff] %v261
    %278 = vst [vmem:[#allocation2 + $0x68] sm:$0xff] %v262
    %279 = vst [vmem:[#allocation2 + $0x70] sm:$0xff] %v263
    %280 = vst [vmem:[#allocation2 + $0x78] sm:$0xff] %v264
    // Predicated region
    $region22: #{bottleneck_forward.7} parent=1 // pred_check
      %p281 = pneg %p19
    $region23: #{bottleneck_forward.7} parent=1 // pred_check_branch
      %283 = sbr.rel (%p281) target = $region25
    $region24: #{bottleneck_forward.7} parent=1 // pred_region
      %v284 = vld [vmem:[#allocation2] sm:$0xff]
      %v285 = vld [vmem:[#allocation2 + $0x8] sm:$0xff]
      %v286 = vld [vmem:[#allocation2 + $0x10] sm:$0xff]
      %v287 = vld [vmem:[#allocation2 + $0x18] sm:$0xff]
      %v288 = vld [vmem:[#allocation2 + $0x20] sm:$0xff]
      %v289 = vld [vmem:[#allocation2 + $0x28] sm:$0xff]
      %v290 = vld [vmem:[#allocation2 + $0x30] sm:$0xff]
      %v291 = vld [vmem:[#allocation2 + $0x38] sm:$0xff]
      %v292 = vld [vmem:[#allocation2 + $0x40] sm:$0xff]
      %v293 = vld [vmem:[#allocation2 + $0x48] sm:$0xff]
      %v294 = vld [vmem:[#allocation2 + $0x50] sm:$0xff]
      %v295 = vld [vmem:[#allocation2 + $0x58] sm:$0xff]
      %v296 = vld [vmem:[#allocation2 + $0x60] sm:$0xff]
      %v297 = vld [vmem:[#allocation2 + $0x68] sm:$0xff]
      %v298 = vld [vmem:[#allocation2 + $0x70] sm:$0xff]
      %v299 = vld [vmem:[#allocation2 + $0x78] sm:$0xff]
      %v300 = vld [vmem:[%s2] sm:$0x1]
      %v302 = vlaneseq
      %v303 = vshrl.u32 %v302, 7
      %v304 = vsub.s32 0, %v303
      %v305 = vrot.slane %v300, %v304
      %v307 = vadd.f32 %v284, %v305
      %v308 = vadd.f32 %v285, %v305
      %v309 = vadd.f32 %v286, %v305
      %v310 = vadd.f32 %v287, %v305
      %v311 = vadd.f32 %v288, %v305
      %v312 = vadd.f32 %v289, %v305
      %v313 = vadd.f32 %v290, %v305
      %v314 = vadd.f32 %v291, %v305
      %v315 = vadd.f32 %v292, %v305
      %v316 = vadd.f32 %v293, %v305
      %v317 = vadd.f32 %v294, %v305
      %v318 = vadd.f32 %v295, %v305
      %v319 = vadd.f32 %v296, %v305
      %v320 = vadd.f32 %v297, %v305
      %v321 = vadd.f32 %v298, %v305
      %v322 = vadd.f32 %v299, %v305
      %v323 = vld [vmem:[%s3] sm:$0xff]
      %v324 = vld [vmem:[%s3 + $0x8] sm:$0xff]
      %v325 = vld [vmem:[%s3 + $0x10] sm:$0xff]
      %v326 = vld [vmem:[%s3 + $0x18] sm:$0xff]
      %v327 = vld [vmem:[%s3 + $0x20] sm:$0xff]
      %v328 = vld [vmem:[%s3 + $0x28] sm:$0xff]
      %v329 = vld [vmem:[%s3 + $0x30] sm:$0xff]
      %v330 = vld [vmem:[%s3 + $0x38] sm:$0xff]
      %v331 = vld [vmem:[%s3 + $0x40] sm:$0xff]
      %v332 = vld [vmem:[%s3 + $0x48] sm:$0xff]
      %v333 = vld [vmem:[%s3 + $0x50] sm:$0xff]
      %v334 = vld [vmem:[%s3 + $0x58] sm:$0xff]
      %v335 = vld [vmem:[%s3 + $0x60] sm:$0xff]
      %v336 = vld [vmem:[%s3 + $0x68] sm:$0xff]
      %v337 = vld [vmem:[%s3 + $0x70] sm:$0xff]
      %v338 = vld [vmem:[%s3 + $0x78] sm:$0xff]
      %v339 = vadd.f32 %v307, %v323
      %v340 = vadd.f32 %v308, %v324
      %v341 = vadd.f32 %v309, %v325
      %v342 = vadd.f32 %v310, %v326
      %v343 = vadd.f32 %v311, %v327
      %v344 = vadd.f32 %v312, %v328
      %v345 = vadd.f32 %v313, %v329
      %v346 = vadd.f32 %v314, %v330
      %v347 = vadd.f32 %v315, %v331
      %v348 = vadd.f32 %v316, %v332
      %v349 = vadd.f32 %v317, %v333
      %v350 = vadd.f32 %v318, %v334
      %v351 = vadd.f32 %v319, %v335
      %v352 = vadd.f32 %v320, %v336
      %v353 = vadd.f32 %v321, %v337
      %v354 = vadd.f32 %v322, %v338
      %v355 = vmax.f32 %v339, 0.0
      %v356 = vmax.f32 %v340, 0.0
      %v357 = vmax.f32 %v341, 0.0
      %v358 = vmax.f32 %v342, 0.0
      %v359 = vmax.f32 %v343, 0.0
      %v360 = vmax.f32 %v344, 0.0
      %v361 = vmax.f32 %v345, 0.0
      %v362 = vmax.f32 %v346, 0.0
      %v363 = vmax.f32 %v347, 0.0
      %v364 = vmax.f32 %v348, 0.0
      %v365 = vmax.f32 %v349, 0.0
      %v366 = vmax.f32 %v350, 0.0
      %v367 = vmax.f32 %v351, 0.0
      %v368 = vmax.f32 %v352, 0.0
      %v369 = vmax.f32 %v353, 0.0
      %v370 = vmax.f32 %v354, 0.0
      %371 = vst [vmem:[#allocation3] sm:$0xff] %v355
      %372 = vst [vmem:[#allocation3 + $0x8] sm:$0xff] %v356
      %373 = vst [vmem:[#allocation3 + $0x10] sm:$0xff] %v357
      %374 = vst [vmem:[#allocation3 + $0x18] sm:$0xff] %v358
      %375 = vst [vmem:[#allocation3 + $0x20] sm:$0xff] %v359
      %376 = vst [vmem:[#allocation3 + $0x28] sm:$0xff] %v360
      %377 = vst [vmem:[#allocation3 + $0x30] sm:$0xff] %v361
      %378 = vst [vmem:[#allocation3 + $0x38] sm:$0xff] %v362
      %379 = vst [vmem:[#allocation3 + $0x40] sm:$0xff] %v363
      %380 = vst [vmem:[#allocation3 + $0x48] sm:$0xff] %v364
      %381 = vst [vmem:[#allocation3 + $0x50] sm:$0xff] %v365
      %382 = vst [vmem:[#allocation3 + $0x58] sm:$0xff] %v366
      %383 = vst [vmem:[#allocation3 + $0x60] sm:$0xff] %v367
      %384 = vst [vmem:[#allocation3 + $0x68] sm:$0xff] %v368
      %385 = vst [vmem:[#allocation3 + $0x70] sm:$0xff] %v369
      %386 = vst [vmem:[#allocation3 + $0x78] sm:$0xff] %v370
    $region25: #{bottleneck_forward.7} parent=1 // pred_fallthru
      _
    // Predicated region
    $region26: #{bottleneck_forward.7} parent=1 // pred_check
      _
    $region27: #{bottleneck_forward.7} parent=1 // pred_check_branch
      %388 = sbr.rel (0) target = $region29
    $region28: #{bottleneck_forward.7} parent=1 // pred_region
      %s390 = ssub.s32 2048, 2048
      %391 = vsyncadd [#allocation4], %s390
      %s392 = sshll.u32 [#allocation3], 4
      %s393 = int_to_ptr.vmem [resolvable:$true] %s392
      %398 = dma.vmem_to_hbm [thread:$0]  %s393, 2048, %s4, [#allocation4], 128, 128, 8
    $region29: #{bottleneck_forward.7} parent=1 // pred_fallthru
      _
    // Predicated region
    $region30: #{bottleneck_forward.7} parent=1 // pred_check
      _
    $region31: #{bottleneck_forward.7} parent=1 // pred_check_branch
      %400 = sbr.rel (0) target = $region33
    $region32: #{bottleneck_forward.7} parent=1 // pred_region
      %401 = dma.done [#allocation4], 2048
    $region33: #{bottleneck_forward.7} parent=1 // pred_fallthru
      _
    %402 = vsyncpa [#allocation4], 1

</llo_original>
